<compile_context>
chip_gen: v7x
topology: tpu7x:2x2x1
jax: 0.10.0
libtpu: 0.0.40
codegen_flags: <defaults>
</compile_context>

<pallas_src>
import functools

import jax
import jax.numpy as jnp
from jax import lax
from jax.experimental import pallas as pl
from jax.experimental.pallas import tpu as pltpu


def _round_up(x, m):
    return ((x + m - 1) // m) * m


# PyTorch LSTM gate row order inside w_ih / w_hh / biases:
_PT_I, _PT_F, _PT_G, _PT_O = 0, 1, 2, 3
# Per-direction gx column order used by the kernel ([i | f | o | g]):
_GX_ORDER = (_PT_I, _PT_F, _PT_O, _PT_G)
# "G8i" chunk index per PyTorch gate (interleaved fwd/bwd, sigmoid gates first):
#   [ i_f | i_b | f_f | f_b | o_f | o_b | g_f | g_b ]
_CHUNK_F = {_PT_I: 0, _PT_F: 2, _PT_O: 4, _PT_G: 6}
_CHUNK_B = {_PT_I: 1, _PT_F: 3, _PT_O: 5, _PT_G: 7}


# ----------------------------------------------------------------------------
# Pallas kernel
# ----------------------------------------------------------------------------
def joint_kernel(emb_ref,                  # (T, Bt, E)              f32
                 wih_ref, bih_ref,         # (E, 8Hl), (1, 8Hl)      fused input proj
                 whh_ref,                  # (2Hl, 8Hl)              block-diag recurrent
                 wh_ref, bh_ref,           # (2Hl, Np), (1, Np)      fused 3-head weights
                 out_ref,                  # (T, Bt, Np)             fused head logits
                 gx_scr,                   # (2, T, Bt, 4Hl)         per-dir input proj
                 h_scr,                    # (T, Bt, 2Hl)            combined hidden
                 *, mm_dtype):
    T, Bt, E = emb_ref.shape
    Hl = whh_ref.shape[0] // 2             # padded per-direction hidden size

    cast = lambda a: a.astype(mm_dtype)

    # ---- 1) Input projection hoisted out of the recurrence:
    #         ONE large MXU matmul covering all timesteps and BOTH directions.
    emb2d = emb_ref[...].reshape(T * Bt, E)
    gx = (jnp.dot(cast(emb2d), cast(wih_ref[...]),
                  preferred_element_type=jnp.float32) + bih_ref[...])
    gx = gx.reshape(T, Bt, 8 * Hl).astype(gx_scr.dtype)
    gx_scr[0] = gx[:, :, :4 * Hl]          # fwd half: [i_f | f_f | o_f | g_f]
    gx_scr[1] = gx[:, :, 4 * Hl:]          # bwd half: [i_b | f_b | o_b | g_b]

    whh = whh_ref[...]                     # hoisted weight load (f32, block-diagonal)

    zero2 = jnp.zeros((Bt, 2 * Hl), jnp.float32)

    # ---- 2) Forward + backward recurrences share ONE dependency chain per step:
    #         a single (Bt,2Hl)x(2Hl,8Hl) MXU matmul and 3 EUP pushes.
    def body(s, carry):
        h, c = carry                       # (Bt, 2Hl) each: [fwd | bwd]
        t_f = s
        t_b = T - 1 - s
        gxf = gx_scr[0, t_f].astype(jnp.float32)    # (Bt, 4Hl)
        gxb = gx_scr[1, t_b].astype(jnp.float32)
        mm = jnp.dot(h, whh, preferred_element_type=jnp.float32)   # (Bt, 8Hl) G8i
        gx_t = jnp.concatenate(
            [gxf[:, 0 * Hl:1 * Hl], gxb[:, 0 * Hl:1 * Hl],          # i_f, i_b
             gxf[:, 1 * Hl:2 * Hl], gxb[:, 1 * Hl:2 * Hl],          # f_f, f_b
             gxf[:, 2 * Hl:3 * Hl], gxb[:, 2 * Hl:3 * Hl],          # o_f, o_b
             gxf[:, 3 * Hl:4 * Hl], gxb[:, 3 * Hl:4 * Hl]],         # g_f, g_b
            axis=-1)
        g = mm + gx_t
        s_act = jax.nn.sigmoid(g[:, :6 * Hl])       # one wide sigmoid
        g_act = jnp.tanh(g[:, 6 * Hl:])             # one wide tanh
        i_g = s_act[:, 0 * Hl:2 * Hl]
        f_g = s_act[:, 2 * Hl:4 * Hl]
        o_g = s_act[:, 4 * Hl:6 * Hl]
        c_new = f_g * c + i_g * g_act
        h_new = o_g * jnp.tanh(c_new)               # [h_f | h_b]
        h_scr[t_f, :, 0:Hl] = h_new[:, 0:Hl]        # fwd hidden at time t_f
        h_scr[t_b, :, Hl:2 * Hl] = h_new[:, Hl:2 * Hl]  # bwd hidden at time t_b
        return (h_new, c_new)

    unroll = True if T <= 16 else 4
    lax.fori_loop(0, T, body, (zero2, zero2), unroll=unroll)

    # ---- 3) ONE fused head matmul over the combined hidden scratch into a
    #         lane-dense 128-padded output slab.
    h2d = h_scr[...].reshape(T * Bt, 2 * Hl)
    logits = (jnp.dot(cast(h2d), cast(wh_ref[...]),
                      preferred_element_type=jnp.float32) + bh_ref[...])
    out_ref[...] = logits.reshape(out_ref.shape)


# ----------------------------------------------------------------------------
# Parameter packing (PyTorch conventions -> padded / fused kernel layout)
# ----------------------------------------------------------------------------
def pack_params(params, Hl, Hl_pad, N_pad):
    f32 = jnp.float32
    E = params["embedding"].shape[1]

    def dir_inproj(w_ih, b_ih, b_hh):
        wg = w_ih.reshape(4, Hl, E)
        bg = (b_ih + b_hh).reshape(4, Hl)
        w_p = jnp.zeros((4, Hl_pad, E), f32)
        b_p = jnp.zeros((4, Hl_pad), f32)
        for j, g in enumerate(_GX_ORDER):           # per-direction order [i, f, o, g]
            w_p = w_p.at[j, :Hl, :].set(wg[g])
            b_p = b_p.at[j, :Hl].set(bg[g])
        return w_p.reshape(4 * Hl_pad, E).T, b_p.reshape(1, 4 * Hl_pad)

    wih_f, bih_f = dir_inproj(params["w_ih_f"], params["b_ih_f"], params["b_hh_f"])
    wih_b, bih_b = dir_inproj(params["w_ih_b"], params["b_ih_b"], params["b_hh_b"])
    wih = jnp.concatenate([wih_f, wih_b], axis=1)    # (E, 8*Hl_pad)
    bih = jnp.concatenate([bih_f, bih_b], axis=1)    # (1, 8*Hl_pad)

    # Block-diagonal recurrent weight in the G8i column layout; rows are the
    # combined [h_f | h_b] lanes.  Padded rows AND columns stay zero.
    whh = jnp.zeros((2 * Hl_pad, 8 * Hl_pad), f32)
    whh_f_g = params["w_hh_f"].reshape(4, Hl, Hl)
    whh_b_g = params["w_hh_b"].reshape(4, Hl, Hl)
    for g in range(4):
        cf, cb = _CHUNK_F[g], _CHUNK_B[g]
        whh = whh.at[:Hl, cf * Hl_pad:cf * Hl_pad + Hl].set(whh_f_g[g].T)
        whh = whh.at[Hl_pad:Hl_pad + Hl, cb * Hl_pad:cb * Hl_pad + Hl].set(whh_b_g[g].T)

    # Fused heads [init | final | cap] padded to N_pad lanes; the hidden_dim input
    # is split into fwd/bwd halves so the kernel's [h_f | h_b] scratch feeds ONE matmul.
    w_all = jnp.concatenate(
        [params["w_init"], params["w_final"], params["w_cap"]], axis=0)   # (Ntot, 2Hl)
    b_all = jnp.concatenate(
        [params["b_init"], params["b_final"], params["b_cap"]], axis=0)   # (Ntot,)
    N_total = w_all.shape[0]
    wh = jnp.zeros((2 * Hl_pad, N_pad), f32)
    wh = wh.at[:Hl, :N_total].set(w_all[:, :Hl].T)
    wh = wh.at[Hl_pad:Hl_pad + Hl, :N_total].set(w_all[:, Hl:].T)
    bh = jnp.zeros((1, N_pad), f32).at[0, :N_total].set(b_all)

    return dict(wih=wih, bih=bih, whh=whh, wh=wh, bh=bh)


# ----------------------------------------------------------------------------
# Generation-aware tile / VMEM planning
# ----------------------------------------------------------------------------
def _plan_tiles(B, T, E, Hl_pad, N_pad, gx_itemsize):
    B_pad = _round_up(B, 8)
    try:
        vmem_cap = int(pltpu.get_tpu_info().vmem_capacity_bytes)
    except Exception:
        vmem_cap = 128 * 2 ** 20
    vmem_target = (3 * vmem_cap) // 4      # ~48 MiB on v7x, ~96 MiB on v5e/v6e

    # Weights counted twice (safe upper bound in case single-buffering is
    # unavailable) + per-batch-row working set of one tile (emb/out double-buffered).
    fixed = 4 * (E * 8 * Hl_pad + 8 * Hl_pad + 2 * Hl_pad * 8 * Hl_pad
                 + 2 * Hl_pad * N_pad + N_pad)
    per_row = (4 * (2 * T * E + 2 * T * N_pad + T * 2 * Hl_pad)
               + gx_itemsize * T * 8 * Hl_pad)
    avail = vmem_target - 2 * fixed - (4 << 20)
    b_tile = max(8, min(avail // per_row, 512))
    b_tile = min((b_tile // 8) * 8, B_pad)
    if B_pad >= 16:
        # >= 2 grid steps so both v7x TensorCores (and megacore) get work.
        b_tile = min(b_tile, B_pad // 2)
    b_tile = max(8, (b_tile // 8) * 8)
    # TODO(synk): for tiny batches (B_pad < 16) on v7x, add a size-2 "direction"
    # grid axis (one TC per recurrence direction) instead of a size-1 grid.
    B_pad = _round_up(B_pad, b_tile)

    est = 2 * fixed + per_row * b_tile
    vmem_limit = int(min(max(est + (8 << 20), 32 * 2 ** 20), (9 * vmem_cap) // 10))
    return B_pad, int(b_tile), vmem_limit


def _call_kernel(emb_tm, kp, *, T, B_pad, B_tile, E, Hl_pad, N_pad,
                 gx_dtype, mm_dtype, vmem_limit, single_buffer_weights):
    grid = (B_pad // B_tile,)

    def wspec(shape):
        kwargs = {}
        if single_buffer_weights:
            # Constant-index weights never change across the grid -> 1 buffer.
            kwargs["pipeline_mode"] = pl.Buffered(1)
        return pl.BlockSpec(shape, lambda b: (0,) * len(shape), **kwargs)

    return pl.pallas_call(
        functools.partial(joint_kernel, mm_dtype=mm_dtype),
        out_shape=jax.ShapeDtypeStruct((T, B_pad, N_pad), jnp.float32),
        grid_spec=pltpu.PrefetchScalarGridSpec(
            num_scalar_prefetch=0,
            grid=grid,
            in_specs=[
                pl.BlockSpec((T, B_tile, E), lambda b: (0, b, 0)),
                wspec((E, 8 * Hl_pad)),
                wspec((1, 8 * Hl_pad)),
                wspec((2 * Hl_pad, 8 * Hl_pad)),
                wspec((2 * Hl_pad, N_pad)),
                wspec((1, N_pad)),
            ],
            out_specs=pl.BlockSpec((T, B_tile, N_pad), lambda b: (0, b, 0)),
            scratch_shapes=[
                pltpu.VMEM((2, T, B_tile, 4 * Hl_pad), gx_dtype),
                pltpu.VMEM((T, B_tile, 2 * Hl_pad), jnp.float32),
            ],
        ),
        compiler_params=pltpu.CompilerParams(
            dimension_semantics=("parallel",),
            vmem_limit_bytes=vmem_limit,
        ),
    )(emb_tm, kp["wih"], kp["bih"], kp["whh"], kp["wh"], kp["bh"])


# ----------------------------------------------------------------------------
# Wrapper
# ----------------------------------------------------------------------------
def joint_punct_capital_forward(x_tokens, params, use_bf16_matmul=False):
    """x_tokens: (B, T) int32. Returns (init, final, cap) logits, each (B, T, N*)."""
    B, T = x_tokens.shape
    emb_table = params["embedding"]                  # (V, E)
    E = emb_table.shape[1]
    Hl = params["w_hh_f"].shape[1]
    Ni = params["w_init"].shape[0]
    Nf = params["w_final"].shape[0]
    Nc = params["w_cap"].shape[0]

    Hl_pad = _round_up(Hl, 32)            # 4*Hl_pad / 8*Hl_pad are multiples of 128
    N_total = Ni + Nf + Nc
    N_pad = _round_up(N_total, 128)       # lane-dense fused head output

    # bf16 MXU inputs (f32 accumulation) for the two big matmuls + bf16 gx scratch;
    # the recurrent h-chain stays f32 to avoid drift on long sequences.
    gx_dtype = jnp.bfloat16 if use_bf16_matmul else jnp.float32
    mm_dtype = jnp.bfloat16 if use_bf16_matmul else jnp.float32

    B_pad, B_tile, vmem_limit = _plan_tiles(
        B, T, E, Hl_pad, N_pad, jnp.dtype(gx_dtype).itemsize)

    kp = pack_params(params, Hl, Hl_pad, N_pad)

    # Embedding gather in time-major (plain-JAX glue); dropout == identity (eval).
    # TODO(synk): on v5e, fold the gather into the kernel (scalar-prefetched token
    # ids + pl.Element row gather) to avoid the emb_tm HBM round-trip.
    emb_tm = jnp.take(emb_table, x_tokens.T, axis=0).astype(jnp.float32)  # (T, B, E)
    if B_pad != B:
        emb_tm = jnp.pad(emb_tm, ((0, 0), (0, B_pad - B), (0, 0)))

    kwargs = dict(T=T, B_pad=B_pad, B_tile=B_tile, E=E, Hl_pad=Hl_pad, N_pad=N_pad,
                  gx_dtype=gx_dtype, mm_dtype=mm_dtype, vmem_limit=vmem_limit)
    try:
        out_tm = _call_kernel(emb_tm, kp, single_buffer_weights=True, **kwargs)
    except Exception:
        # pl.Buffered(1) not supported on this JAX version -> default buffering.
        out_tm = _call_kernel(emb_tm, kp, single_buffer_weights=False, **kwargs)

    # Slice away batch/lane padding BEFORE the (T,B)->(B,T) transpose.
    out_bt = jnp.transpose(out_tm[:, :B, :N_total], (1, 0, 2))   # (B, T, N_total)
    init_l = out_bt[..., :Ni]
    final_l = out_bt[..., Ni:Ni + Nf]
    cap_l = out_bt[..., Ni + Nf:]
    return init_l, final_l, cap_l


# ----------------------------------------------------------------------------
# Deterministic raw parameters (PyTorch conventions, matches module shapes)
# ----------------------------------------------------------------------------
def make_params(key, vocab_size, embed_dim, hidden_dim, num_init, num_final, num_cap):
    Hl = hidden_dim // 2                                   # bidirectional
    ks = jax.random.split(key, 17)
    s = 0.1

    emb = s * jax.random.normal(ks[0], (vocab_size, embed_dim), jnp.float32)
    emb = emb.at[0].set(0.0)                               # padding_idx=0

    def lstm_dir(i):
        return (
            s * jax.random.normal(ks[i + 0], (4 * Hl, embed_dim), jnp.float32),
            s * jax.random.normal(ks[i + 1], (4 * Hl, Hl), jnp.float32),
            s * jax.random.normal(ks[i + 2], (4 * Hl,), jnp.float32),
            s * jax.random.normal(ks[i + 3], (4 * Hl,), jnp.float32),
        )

    w_ih_f, w_hh_f, b_ih_f, b_hh_f = lstm_dir(1)
    w_ih_b, w_hh_b, b_ih_b, b_hh_b = lstm_dir(5)

    def head(kw, kb, n_out):
        return (s * jax.random.normal(kw, (n_out, hidden_dim), jnp.float32),
                s * jax.random.normal(kb, (n_out,), jnp.float32))

    w_init, b_init = head(ks[9], ks[10], num_init)
    w_final, b_final = head(ks[11], ks[12], num_final)
    w_cap, b_cap = head(ks[13], ks[14], num_cap)

    return dict(
        embedding=emb,
        w_ih_f=w_ih_f, w_hh_f=w_hh_f, b_ih_f=b_ih_f, b_hh_f=b_hh_f,
        w_ih_b=w_ih_b, w_hh_b=w_hh_b, b_ih_b=b_ih_b, b_hh_b=b_hh_b,
        w_init=w_init, b_init=b_init,
        w_final=w_final, b_final=b_final,
        w_cap=w_cap, b_cap=b_cap,
    )


# ----------------------------------------------------------------------------
# Pure-JAX reference (same math) for a sanity check
# ----------------------------------------------------------------------------
def reference_forward(x_tokens, params):
    hp = jax.lax.Precision.HIGHEST
    emb = jnp.take(params["embedding"], x_tokens, axis=0)  # (B, T, E)
    B, T, _ = emb.shape
    Hl = params["w_hh_f"].shape[1]

    def step(x, h, c, w_ih, w_hh, b_ih, b_hh):
        g = (jnp.dot(x, w_ih.T, precision=hp) + jnp.dot(h, w_hh.T, precision=hp)
             + b_ih + b_hh)
        i = jax.nn.sigmoid(g[:, :Hl]); f = jax.nn.sigmoid(g[:, Hl:2 * Hl])
        gg = jnp.tanh(g[:, 2 * Hl:3 * Hl]); o = jax.nn.sigmoid(g[:, 3 * Hl:])
        c = f * c + i * gg
        return o * jnp.tanh(c), c

    h = jnp.zeros((B, Hl)); c = jnp.zeros((B, Hl)); outs_f = []
    for t in range(T):
        h, c = step(emb[:, t], h, c, params["w_ih_f"], params["w_hh_f"],
                    params["b_ih_f"], params["b_hh_f"])
        outs_f.append(h)
    h = jnp.zeros((B, Hl)); c = jnp.zeros((B, Hl)); outs_b = [None] * T
    for t in range(T - 1, -1, -1):
        h, c = step(emb[:, t], h, c, params["w_ih_b"], params["w_hh_b"],
                    params["b_ih_b"], params["b_hh_b"])
        outs_b[t] = h
    out = jnp.concatenate(
        [jnp.stack(outs_f, axis=1), jnp.stack(outs_b, axis=1)], axis=-1)  # (B,T,2Hl)
    lin = lambda w, b: jnp.dot(out, w.T, precision=hp) + b
    return (lin(params["w_init"], params["b_init"]),
            lin(params["w_final"], params["b_final"]),
            lin(params["w_cap"], params["b_cap"]))


if __name__ == "__main__":
    vocab_size, embed_dim, hidden_dim = 50, 32, 32
    num_init, num_final, num_cap = 5, 6, 3

    key = jax.random.PRNGKey(0)
    kp_key, kx1, kx2 = jax.random.split(key, 3)
    params = make_params(kp_key, vocab_size, embed_dim, hidden_dim,
                         num_init, num_final, num_cap)

    # ---- config 1: tiny batch, fully unrolled recurrence, single grid step ----
    B1, T1 = 2, 8
    x1 = jax.random.randint(kx1, (B1, T1), 0, vocab_size, dtype=jnp.int32)
    i1, f1, c1 = jax.block_until_ready(joint_punct_capital_forward(x1, params))
    assert i1.shape == (B1, T1, num_init)
    assert f1.shape == (B1, T1, num_final)
    assert c1.shape == (B1, T1, num_cap)
    ri, rf, rc = reference_forward(x1, params)
    assert jnp.allclose(i1, ri, atol=2e-3, rtol=2e-3)
    assert jnp.allclose(f1, rf, atol=2e-3, rtol=2e-3)
    assert jnp.allclose(c1, rc, atol=2e-3, rtol=2e-3)

    # ---- config 2: multi-step batch grid (2 tiles) + unroll-4 recurrence ----
    B2, T2 = 16, 20
    x2 = jax.random.randint(kx2, (B2, T2), 0, vocab_size, dtype=jnp.int32)
    i2, f2, c2 = jax.block_until_ready(joint_punct_capital_forward(x2, params))
    ri2, rf2, rc2 = reference_forward(x2, params)
    assert i2.shape == (B2, T2, num_init)
    assert jnp.allclose(i2, ri2, atol=5e-3, rtol=5e-3)
    assert jnp.allclose(f2, rf2, atol=5e-3, rtol=5e-3)
    assert jnp.allclose(c2, rc2, atol=5e-3, rtol=5e-3)

    # ---- config 3: bf16 MXU inputs for the big matmuls (looser tolerance) ----
    i3, f3, c3 = jax.block_until_ready(
        joint_punct_capital_forward(x1, params, use_bf16_matmul=True))
    assert jnp.allclose(i3, ri, atol=3e-2, rtol=3e-2)
    assert jnp.allclose(f3, rf, atol=3e-2, rtol=3e-2)
    assert jnp.allclose(c3, rc, atol=3e-2, rtol=3e-2)

    print("KERNEL_OK")
</pallas_src>

<mosaic_0001>
module attributes {stable_mosaic.version = 11 : i64} {
  func.func @joint_kernel(%arg0: i32, %arg1: memref<8x8x32xf32, #tpu.memory_space<vmem>>, %arg2: memref<32x256xf32, #tpu.memory_space<vmem>>, %arg3: memref<1x256xf32, #tpu.memory_space<vmem>>, %arg4: memref<64x256xf32, #tpu.memory_space<vmem>>, %arg5: memref<64x128xf32, #tpu.memory_space<vmem>>, %arg6: memref<1x128xf32, #tpu.memory_space<vmem>>, %arg7: memref<8x8x128xf32, #tpu.memory_space<vmem>>, %arg8: memref<2x8x8x128xf32, #tpu.memory_space<vmem>>, %arg9: memref<8x8x64xf32, #tpu.memory_space<vmem>>) attributes {dimension_semantics = [#tpu.dimension_semantics<parallel>], iteration_bounds = array<i64: 1>, scalar_prefetch = 0 : i64, scratch_operands = 2 : i64, tpu.core_type = #tpu.core_type<tc>, window_params = [{transform_indices = @transform_0, window_bounds = array<i64: 8, 8, 32>}, {pipeline_mode = #tpu.pipeline_mode<synchronous>, transform_indices = @transform_1, window_bounds = array<i64: 32, 256>}, {pipeline_mode = #tpu.pipeline_mode<synchronous>, transform_indices = @transform_2, window_bounds = array<i64: 1, 256>}, {pipeline_mode = #tpu.pipeline_mode<synchronous>, transform_indices = @transform_3, window_bounds = array<i64: 64, 256>}, {pipeline_mode = #tpu.pipeline_mode<synchronous>, transform_indices = @transform_4, window_bounds = array<i64: 64, 128>}, {pipeline_mode = #tpu.pipeline_mode<synchronous>, transform_indices = @transform_5, window_bounds = array<i64: 1, 128>}, {transform_indices = @transform_6, window_bounds = array<i64: 8, 8, 128>}]} {
    %c0 = arith.constant 0 : index
    %c0_0 = arith.constant 0 : index
    %c0_1 = arith.constant 0 : index
    %0 = vector.load %arg1[%c0, %c0_0, %c0_1] : memref<8x8x32xf32, #tpu.memory_space<vmem>>, vector<8x8x32xf32>
    %1 = vector.shape_cast %0 : vector<8x8x32xf32> to vector<64x32xf32>
    %c0_2 = arith.constant 0 : index
    %c0_3 = arith.constant 0 : index
    %2 = vector.load %arg2[%c0_2, %c0_3] : memref<32x256xf32, #tpu.memory_space<vmem>>, vector<32x256xf32>
    %cst = arith.constant dense<0.000000e+00> : vector<64x256xf32>
    %3 = tpu.matmul %1, %2, %cst {dimension_numbers = #tpu.dot_dimension_numbers<[1], [0], [0], [1], [0, 0, 1, 1], [], []>} : vector<64x32xf32>, vector<32x256xf32>, vector<64x256xf32> -> vector<64x256xf32>
    %c0_4 = arith.constant 0 : index
    %c0_5 = arith.constant 0 : index
    %4 = vector.load %arg3[%c0_4, %c0_5] : memref<1x256xf32, #tpu.memory_space<vmem>>, vector<1x256xf32>
    %5 = vector.broadcast %4 : vector<1x256xf32> to vector<64x256xf32>
    %6 = arith.addf %3, %5 : vector<64x256xf32>
    %7 = vector.shape_cast %6 : vector<64x256xf32> to vector<8x8x256xf32>
    %8 = vector.extract_strided_slice %7 {offsets = [0, 0, 0], sizes = [8, 8, 128], strides = [1, 1, 1]} : vector<8x8x256xf32> to vector<8x8x128xf32>
    %c0_6 = arith.constant 0 : index
    %c0_7 = arith.constant 0 : index
    %c0_8 = arith.constant 0 : index
    %c0_9 = arith.constant 0 : index
    %9 = vector.load %arg8[%c0_6, %c0_7, %c0_8, %c0_9] : memref<2x8x8x128xf32, #tpu.memory_space<vmem>>, vector<1x8x8x128xf32>
    %10 = vector.shape_cast %9 : vector<1x8x8x128xf32> to vector<8x8x128xf32>
    %11 = vector.shape_cast %8 : vector<8x8x128xf32> to vector<1x8x8x128xf32>
    tpu.vector_store %arg8[%c0_6, %c0_7, %c0_8, %c0_9], %11 {strides = array<i32>} : memref<2x8x8x128xf32, #tpu.memory_space<vmem>>, vector<1x8x8x128xf32>,
    %12 = vector.extract_strided_slice %7 {offsets = [0, 0, 128], sizes = [8, 8, 128], strides = [1, 1, 1]} : vector<8x8x256xf32> to vector<8x8x128xf32>
    %c1 = arith.constant 1 : index
    %c0_10 = arith.constant 0 : index
    %c0_11 = arith.constant 0 : index
    %c0_12 = arith.constant 0 : index
    %13 = vector.load %arg8[%c1, %c0_10, %c0_11, %c0_12] : memref<2x8x8x128xf32, #tpu.memory_space<vmem>>, vector<1x8x8x128xf32>
    %14 = vector.shape_cast %13 : vector<1x8x8x128xf32> to vector<8x8x128xf32>
    %15 = vector.shape_cast %12 : vector<8x8x128xf32> to vector<1x8x8x128xf32>
    tpu.vector_store %arg8[%c1, %c0_10, %c0_11, %c0_12], %15 {strides = array<i32>} : memref<2x8x8x128xf32, #tpu.memory_space<vmem>>, vector<1x8x8x128xf32>,
    %c0_13 = arith.constant 0 : index
    %c0_14 = arith.constant 0 : index
    %16 = vector.load %arg4[%c0_13, %c0_14] : memref<64x256xf32, #tpu.memory_space<vmem>>, vector<64x256xf32>
    %cst_15 = arith.constant 0.000000e+00 : f32
    %17 = vector.broadcast %cst_15 : f32 to vector<8x64xf32>
    %c0_i32 = arith.constant 0 : i32
    %c7_i32 = arith.constant 7 : i32
    %18 = arith.subi %c7_i32, %c0_i32 : i32
    %c0_16 = arith.constant 0 : index
    %19 = arith.index_cast %c0_i32 : i32 to index
    %c0_17 = arith.constant 0 : index
    %c0_18 = arith.constant 0 : index
    %20 = vector.load %arg8[%c0_16, %19, %c0_17, %c0_18] : memref<2x8x8x128xf32, #tpu.memory_space<vmem>>, vector<1x1x8x128xf32>
    %21 = vector.shape_cast %20 : vector<1x1x8x128xf32> to vector<8x128xf32>
    %c1_19 = arith.constant 1 : index
    %22 = arith.index_cast %18 : i32 to index
    %c0_20 = arith.constant 0 : index
    %c0_21 = arith.constant 0 : index
    %23 = vector.load %arg8[%c1_19, %22, %c0_20, %c0_21] : memref<2x8x8x128xf32, #tpu.memory_space<vmem>>, vector<1x1x8x128xf32>
    %24 = vector.shape_cast %23 : vector<1x1x8x128xf32> to vector<8x128xf32>
    %cst_22 = arith.constant dense<0.000000e+00> : vector<8x256xf32>
    %25 = tpu.matmul %17, %16, %cst_22 {dimension_numbers = #tpu.dot_dimension_numbers<[1], [0], [0], [1], [0, 0, 1, 1], [], []>} : vector<8x64xf32>, vector<64x256xf32>, vector<8x256xf32> -> vector<8x256xf32>
    %26 = vector.extract_strided_slice %21 {offsets = [0, 0], sizes = [8, 32], strides = [1, 1]} : vector<8x128xf32> to vector<8x32xf32>
    %27 = vector.extract_strided_slice %24 {offsets = [0, 0], sizes = [8, 32], strides = [1, 1]} : vector<8x128xf32> to vector<8x32xf32>
    %28 = vector.extract_strided_slice %21 {offsets = [0, 32], sizes = [8, 32], strides = [1, 1]} : vector<8x128xf32> to vector<8x32xf32>
    %29 = vector.extract_strided_slice %24 {offsets = [0, 32], sizes = [8, 32], strides = [1, 1]} : vector<8x128xf32> to vector<8x32xf32>
    %30 = vector.extract_strided_slice %21 {offsets = [0, 64], sizes = [8, 32], strides = [1, 1]} : vector<8x128xf32> to vector<8x32xf32>
    %31 = vector.extract_strided_slice %24 {offsets = [0, 64], sizes = [8, 32], strides = [1, 1]} : vector<8x128xf32> to vector<8x32xf32>
    %32 = vector.extract_strided_slice %21 {offsets = [0, 96], sizes = [8, 32], strides = [1, 1]} : vector<8x128xf32> to vector<8x32xf32>
    %33 = vector.extract_strided_slice %24 {offsets = [0, 96], sizes = [8, 32], strides = [1, 1]} : vector<8x128xf32> to vector<8x32xf32>
    %34 = tpu.concatenate %26, %27, %28, %29, %30, %31, %32, %33 in 1 : vector<8x32xf32>, vector<8x32xf32>, vector<8x32xf32>, vector<8x32xf32>, vector<8x32xf32>, vector<8x32xf32>, vector<8x32xf32>, vector<8x32xf32> -> vector<8x256xf32>
    %35 = arith.addf %25, %34 : vector<8x256xf32>
    %36 = vector.extract_strided_slice %35 {offsets = [0, 0], sizes = [8, 192], strides = [1, 1]} : vector<8x256xf32> to vector<8x192xf32>
    %37 = arith.negf %36 : vector<8x192xf32>
    %38 = math.exp %37 : vector<8x192xf32>
    %cst_23 = arith.constant 1.000000e+00 : f32
    %39 = vector.broadcast %cst_23 : f32 to vector<8x192xf32>
    %40 = arith.addf %39, %38 : vector<8x192xf32>
    %41 = arith.divf %39, %40 : vector<8x192xf32>
    %42 = vector.extract_strided_slice %35 {offsets = [0, 192], sizes = [8, 64], strides = [1, 1]} : vector<8x256xf32> to vector<8x64xf32>
    %43 = math.tanh %42 : vector<8x64xf32>
    %44 = vector.extract_strided_slice %41 {offsets = [0, 0], sizes = [8, 64], strides = [1, 1]} : vector<8x192xf32> to vector<8x64xf32>
    %45 = vector.extract_strided_slice %41 {offsets = [0, 64], sizes = [8, 64], strides = [1, 1]} : vector<8x192xf32> to vector<8x64xf32>
    %46 = vector.extract_strided_slice %41 {offsets = [0, 128], sizes = [8, 64], strides = [1, 1]} : vector<8x192xf32> to vector<8x64xf32>
    %47 = arith.mulf %45, %17 : vector<8x64xf32>
    %48 = arith.mulf %44, %43 : vector<8x64xf32>
    %49 = arith.addf %47, %48 : vector<8x64xf32>
    %50 = math.tanh %49 : vector<8x64xf32>
    %51 = arith.mulf %46, %50 : vector<8x64xf32>
    %52 = vector.extract_strided_slice %51 {offsets = [0, 0], sizes = [8, 32], strides = [1, 1]} : vector<8x64xf32> to vector<8x32xf32>
    %53 = arith.index_cast %c0_i32 : i32 to index
    %c0_24 = arith.constant 0 : index
    %c0_25 = arith.constant 0 : index
    %54 = vector.load %arg9[%53, %c0_24, %c0_25] : memref<8x8x64xf32, #tpu.memory_space<vmem>>, vector<1x8x32xf32>
    %55 = vector.shape_cast %54 : vector<1x8x32xf32> to vector<8x32xf32>
    %56 = vector.shape_cast %52 : vector<8x32xf32> to vector<1x8x32xf32>
    tpu.vector_store %arg9[%53, %c0_24, %c0_25], %56 {strides = array<i32>} : memref<8x8x64xf32, #tpu.memory_space<vmem>>, vector<1x8x32xf32>,
    %57 = vector.extract_strided_slice %51 {offsets = [0, 32], sizes = [8, 32], strides = [1, 1]} : vector<8x64xf32> to vector<8x32xf32>
    %58 = arith.index_cast %18 : i32 to index
    %c0_26 = arith.constant 0 : index
    %c32 = arith.constant 32 : index
    %59 = vector.load %arg9[%58, %c0_26, %c32] : memref<8x8x64xf32, #tpu.memory_space<vmem>>, vector<1x8x32xf32>
    %60 = vector.shape_cast %59 : vector<1x8x32xf32> to vector<8x32xf32>
    %61 = vector.shape_cast %57 : vector<8x32xf32> to vector<1x8x32xf32>
    tpu.vector_store %arg9[%58, %c0_26, %c32], %61 {strides = array<i32>} : memref<8x8x64xf32, #tpu.memory_space<vmem>>, vector<1x8x32xf32>,
    %c1_i32 = arith.constant 1 : i32
    %c7_i32_27 = arith.constant 7 : i32
    %62 = arith.subi %c7_i32_27, %c1_i32 : i32
    %c0_28 = arith.constant 0 : index
    %63 = arith.index_cast %c1_i32 : i32 to index
    %c0_29 = arith.constant 0 : index
    %c0_30 = arith.constant 0 : index
    %64 = vector.load %arg8[%c0_28, %63, %c0_29, %c0_30] : memref<2x8x8x128xf32, #tpu.memory_space<vmem>>, vector<1x1x8x128xf32>
    %65 = vector.shape_cast %64 : vector<1x1x8x128xf32> to vector<8x128xf32>
    %c1_31 = arith.constant 1 : index
    %66 = arith.index_cast %62 : i32 to index
    %c0_32 = arith.constant 0 : index
    %c0_33 = arith.constant 0 : index
    %67 = vector.load %arg8[%c1_31, %66, %c0_32, %c0_33] : memref<2x8x8x128xf32, #tpu.memory_space<vmem>>, vector<1x1x8x128xf32>
    %68 = vector.shape_cast %67 : vector<1x1x8x128xf32> to vector<8x128xf32>
    %cst_34 = arith.constant dense<0.000000e+00> : vector<8x256xf32>
    %69 = tpu.matmul %51, %16, %cst_34 {dimension_numbers = #tpu.dot_dimension_numbers<[1], [0], [0], [1], [0, 0, 1, 1], [], []>} : vector<8x64xf32>, vector<64x256xf32>, vector<8x256xf32> -> vector<8x256xf32>
    %70 = vector.extract_strided_slice %65 {offsets = [0, 0], sizes = [8, 32], strides = [1, 1]} : vector<8x128xf32> to vector<8x32xf32>
    %71 = vector.extract_strided_slice %68 {offsets = [0, 0], sizes = [8, 32], strides = [1, 1]} : vector<8x128xf32> to vector<8x32xf32>
    %72 = vector.extract_strided_slice %65 {offsets = [0, 32], sizes = [8, 32], strides = [1, 1]} : vector<8x128xf32> to vector<8x32xf32>
    %73 = vector.extract_strided_slice %68 {offsets = [0, 32], sizes = [8, 32], strides = [1, 1]} : vector<8x128xf32> to vector<8x32xf32>
    %74 = vector.extract_strided_slice %65 {offsets = [0, 64], sizes = [8, 32], strides = [1, 1]} : vector<8x128xf32> to vector<8x32xf32>
    %75 = vector.extract_strided_slice %68 {offsets = [0, 64], sizes = [8, 32], strides = [1, 1]} : vector<8x128xf32> to vector<8x32xf32>
    %76 = vector.extract_strided_slice %65 {offsets = [0, 96], sizes = [8, 32], strides = [1, 1]} : vector<8x128xf32> to vector<8x32xf32>
    %77 = vector.extract_strided_slice %68 {offsets = [0, 96], sizes = [8, 32], strides = [1, 1]} : vector<8x128xf32> to vector<8x32xf32>
    %78 = tpu.concatenate %70, %71, %72, %73, %74, %75, %76, %77 in 1 : vector<8x32xf32>, vector<8x32xf32>, vector<8x32xf32>, vector<8x32xf32>, vector<8x32xf32>, vector<8x32xf32>, vector<8x32xf32>, vector<8x32xf32> -> vector<8x256xf32>
    %79 = arith.addf %69, %78 : vector<8x256xf32>
    %80 = vector.extract_strided_slice %79 {offsets = [0, 0], sizes = [8, 192], strides = [1, 1]} : vector<8x256xf32> to vector<8x192xf32>
    %81 = arith.negf %80 : vector<8x192xf32>
    %82 = math.exp %81 : vector<8x192xf32>
    %cst_35 = arith.constant 1.000000e+00 : f32
    %83 = vector.broadcast %cst_35 : f32 to vector<8x192xf32>
    %84 = arith.addf %83, %82 : vector<8x192xf32>
    %85 = arith.divf %83, %84 : vector<8x192xf32>
    %86 = vector.extract_strided_slice %79 {offsets = [0, 192], sizes = [8, 64], strides = [1, 1]} : vector<8x256xf32> to vector<8x64xf32>
    %87 = math.tanh %86 : vector<8x64xf32>
    %88 = vector.extract_strided_slice %85 {offsets = [0, 0], sizes = [8, 64], strides = [1, 1]} : vector<8x192xf32> to vector<8x64xf32>
    %89 = vector.extract_strided_slice %85 {offsets = [0, 64], sizes = [8, 64], strides = [1, 1]} : vector<8x192xf32> to vector<8x64xf32>
    %90 = vector.extract_strided_slice %85 {offsets = [0, 128], sizes = [8, 64], strides = [1, 1]} : vector<8x192xf32> to vector<8x64xf32>
    %91 = arith.mulf %89, %49 : vector<8x64xf32>
    %92 = arith.mulf %88, %87 : vector<8x64xf32>
    %93 = arith.addf %91, %92 : vector<8x64xf32>
    %94 = math.tanh %93 : vector<8x64xf32>
    %95 = arith.mulf %90, %94 : vector<8x64xf32>
    %96 = vector.extract_strided_slice %95 {offsets = [0, 0], sizes = [8, 32], strides = [1, 1]} : vector<8x64xf32> to vector<8x32xf32>
    %97 = arith.index_cast %c1_i32 : i32 to index
    %c0_36 = arith.constant 0 : index
    %c0_37 = arith.constant 0 : index
    %98 = vector.load %arg9[%97, %c0_36, %c0_37] : memref<8x8x64xf32, #tpu.memory_space<vmem>>, vector<1x8x32xf32>
    %99 = vector.shape_cast %98 : vector<1x8x32xf32> to vector<8x32xf32>
    %100 = vector.shape_cast %96 : vector<8x32xf32> to vector<1x8x32xf32>
    tpu.vector_store %arg9[%97, %c0_36, %c0_37], %100 {strides = array<i32>} : memref<8x8x64xf32, #tpu.memory_space<vmem>>, vector<1x8x32xf32>,
    %101 = vector.extract_strided_slice %95 {offsets = [0, 32], sizes = [8, 32], strides = [1, 1]} : vector<8x64xf32> to vector<8x32xf32>
    %102 = arith.index_cast %62 : i32 to index
    %c0_38 = arith.constant 0 : index
    %c32_39 = arith.constant 32 : index
    %103 = vector.load %arg9[%102, %c0_38, %c32_39] : memref<8x8x64xf32, #tpu.memory_space<vmem>>, vector<1x8x32xf32>
    %104 = vector.shape_cast %103 : vector<1x8x32xf32> to vector<8x32xf32>
    %105 = vector.shape_cast %101 : vector<8x32xf32> to vector<1x8x32xf32>
    tpu.vector_store %arg9[%102, %c0_38, %c32_39], %105 {strides = array<i32>} : memref<8x8x64xf32, #tpu.memory_space<vmem>>, vector<1x8x32xf32>,
    %c2_i32 = arith.constant 2 : i32
    %c7_i32_40 = arith.constant 7 : i32
    %106 = arith.subi %c7_i32_40, %c2_i32 : i32
    %c0_41 = arith.constant 0 : index
    %107 = arith.index_cast %c2_i32 : i32 to index
    %c0_42 = arith.constant 0 : index
    %c0_43 = arith.constant 0 : index
    %108 = vector.load %arg8[%c0_41, %107, %c0_42, %c0_43] : memref<2x8x8x128xf32, #tpu.memory_space<vmem>>, vector<1x1x8x128xf32>
    %109 = vector.shape_cast %108 : vector<1x1x8x128xf32> to vector<8x128xf32>
    %c1_44 = arith.constant 1 : index
    %110 = arith.index_cast %106 : i32 to index
    %c0_45 = arith.constant 0 : index
    %c0_46 = arith.constant 0 : index
    %111 = vector.load %arg8[%c1_44, %110, %c0_45, %c0_46] : memref<2x8x8x128xf32, #tpu.memory_space<vmem>>, vector<1x1x8x128xf32>
    %112 = vector.shape_cast %111 : vector<1x1x8x128xf32> to vector<8x128xf32>
    %cst_47 = arith.constant dense<0.000000e+00> : vector<8x256xf32>
    %113 = tpu.matmul %95, %16, %cst_47 {dimension_numbers = #tpu.dot_dimension_numbers<[1], [0], [0], [1], [0, 0, 1, 1], [], []>} : vector<8x64xf32>, vector<64x256xf32>, vector<8x256xf32> -> vector<8x256xf32>
    %114 = vector.extract_strided_slice %109 {offsets = [0, 0], sizes = [8, 32], strides = [1, 1]} : vector<8x128xf32> to vector<8x32xf32>
    %115 = vector.extract_strided_slice %112 {offsets = [0, 0], sizes = [8, 32], strides = [1, 1]} : vector<8x128xf32> to vector<8x32xf32>
    %116 = vector.extract_strided_slice %109 {offsets = [0, 32], sizes = [8, 32], strides = [1, 1]} : vector<8x128xf32> to vector<8x32xf32>
    %117 = vector.extract_strided_slice %112 {offsets = [0, 32], sizes = [8, 32], strides = [1, 1]} : vector<8x128xf32> to vector<8x32xf32>
    %118 = vector.extract_strided_slice %109 {offsets = [0, 64], sizes = [8, 32], strides = [1, 1]} : vector<8x128xf32> to vector<8x32xf32>
    %119 = vector.extract_strided_slice %112 {offsets = [0, 64], sizes = [8, 32], strides = [1, 1]} : vector<8x128xf32> to vector<8x32xf32>
    %120 = vector.extract_strided_slice %109 {offsets = [0, 96], sizes = [8, 32], strides = [1, 1]} : vector<8x128xf32> to vector<8x32xf32>
    %121 = vector.extract_strided_slice %112 {offsets = [0, 96], sizes = [8, 32], strides = [1, 1]} : vector<8x128xf32> to vector<8x32xf32>
    %122 = tpu.concatenate %114, %115, %116, %117, %118, %119, %120, %121 in 1 : vector<8x32xf32>, vector<8x32xf32>, vector<8x32xf32>, vector<8x32xf32>, vector<8x32xf32>, vector<8x32xf32>, vector<8x32xf32>, vector<8x32xf32> -> vector<8x256xf32>
    %123 = arith.addf %113, %122 : vector<8x256xf32>
    %124 = vector.extract_strided_slice %123 {offsets = [0, 0], sizes = [8, 192], strides = [1, 1]} : vector<8x256xf32> to vector<8x192xf32>
    %125 = arith.negf %124 : vector<8x192xf32>
    %126 = math.exp %125 : vector<8x192xf32>
    %cst_48 = arith.constant 1.000000e+00 : f32
    %127 = vector.broadcast %cst_48 : f32 to vector<8x192xf32>
    %128 = arith.addf %127, %126 : vector<8x192xf32>
    %129 = arith.divf %127, %128 : vector<8x192xf32>
    %130 = vector.extract_strided_slice %123 {offsets = [0, 192], sizes = [8, 64], strides = [1, 1]} : vector<8x256xf32> to vector<8x64xf32>
    %131 = math.tanh %130 : vector<8x64xf32>
    %132 = vector.extract_strided_slice %129 {offsets = [0, 0], sizes = [8, 64], strides = [1, 1]} : vector<8x192xf32> to vector<8x64xf32>
    %133 = vector.extract_strided_slice %129 {offsets = [0, 64], sizes = [8, 64], strides = [1, 1]} : vector<8x192xf32> to vector<8x64xf32>
    %134 = vector.extract_strided_slice %129 {offsets = [0, 128], sizes = [8, 64], strides = [1, 1]} : vector<8x192xf32> to vector<8x64xf32>
    %135 = arith.mulf %133, %93 : vector<8x64xf32>
    %136 = arith.mulf %132, %131 : vector<8x64xf32>
    %137 = arith.addf %135, %136 : vector<8x64xf32>
    %138 = math.tanh %137 : vector<8x64xf32>
    %139 = arith.mulf %134, %138 : vector<8x64xf32>
    %140 = vector.extract_strided_slice %139 {offsets = [0, 0], sizes = [8, 32], strides = [1, 1]} : vector<8x64xf32> to vector<8x32xf32>
    %141 = arith.index_cast %c2_i32 : i32 to index
    %c0_49 = arith.constant 0 : index
    %c0_50 = arith.constant 0 : index
    %142 = vector.load %arg9[%141, %c0_49, %c0_50] : memref<8x8x64xf32, #tpu.memory_space<vmem>>, vector<1x8x32xf32>
    %143 = vector.shape_cast %142 : vector<1x8x32xf32> to vector<8x32xf32>
    %144 = vector.shape_cast %140 : vector<8x32xf32> to vector<1x8x32xf32>
    tpu.vector_store %arg9[%141, %c0_49, %c0_50], %144 {strides = array<i32>} : memref<8x8x64xf32, #tpu.memory_space<vmem>>, vector<1x8x32xf32>,
    %145 = vector.extract_strided_slice %139 {offsets = [0, 32], sizes = [8, 32], strides = [1, 1]} : vector<8x64xf32> to vector<8x32xf32>
    %146 = arith.index_cast %106 : i32 to index
    %c0_51 = arith.constant 0 : index
    %c32_52 = arith.constant 32 : index
    %147 = vector.load %arg9[%146, %c0_51, %c32_52] : memref<8x8x64xf32, #tpu.memory_space<vmem>>, vector<1x8x32xf32>
    %148 = vector.shape_cast %147 : vector<1x8x32xf32> to vector<8x32xf32>
    %149 = vector.shape_cast %145 : vector<8x32xf32> to vector<1x8x32xf32>
    tpu.vector_store %arg9[%146, %c0_51, %c32_52], %149 {strides = array<i32>} : memref<8x8x64xf32, #tpu.memory_space<vmem>>, vector<1x8x32xf32>,
    %c3_i32 = arith.constant 3 : i32
    %c7_i32_53 = arith.constant 7 : i32
    %150 = arith.subi %c7_i32_53, %c3_i32 : i32
    %c0_54 = arith.constant 0 : index
    %151 = arith.index_cast %c3_i32 : i32 to index
    %c0_55 = arith.constant 0 : index
    %c0_56 = arith.constant 0 : index
    %152 = vector.load %arg8[%c0_54, %151, %c0_55, %c0_56] : memref<2x8x8x128xf32, #tpu.memory_space<vmem>>, vector<1x1x8x128xf32>
    %153 = vector.shape_cast %152 : vector<1x1x8x128xf32> to vector<8x128xf32>
    %c1_57 = arith.constant 1 : index
    %154 = arith.index_cast %150 : i32 to index
    %c0_58 = arith.constant 0 : index
    %c0_59 = arith.constant 0 : index
    %155 = vector.load %arg8[%c1_57, %154, %c0_58, %c0_59] : memref<2x8x8x128xf32, #tpu.memory_space<vmem>>, vector<1x1x8x128xf32>
    %156 = vector.shape_cast %155 : vector<1x1x8x128xf32> to vector<8x128xf32>
    %cst_60 = arith.constant dense<0.000000e+00> : vector<8x256xf32>
    %157 = tpu.matmul %139, %16, %cst_60 {dimension_numbers = #tpu.dot_dimension_numbers<[1], [0], [0], [1], [0, 0, 1, 1], [], []>} : vector<8x64xf32>, vector<64x256xf32>, vector<8x256xf32> -> vector<8x256xf32>
    %158 = vector.extract_strided_slice %153 {offsets = [0, 0], sizes = [8, 32], strides = [1, 1]} : vector<8x128xf32> to vector<8x32xf32>
    %159 = vector.extract_strided_slice %156 {offsets = [0, 0], sizes = [8, 32], strides = [1, 1]} : vector<8x128xf32> to vector<8x32xf32>
    %160 = vector.extract_strided_slice %153 {offsets = [0, 32], sizes = [8, 32], strides = [1, 1]} : vector<8x128xf32> to vector<8x32xf32>
    %161 = vector.extract_strided_slice %156 {offsets = [0, 32], sizes = [8, 32], strides = [1, 1]} : vector<8x128xf32> to vector<8x32xf32>
    %162 = vector.extract_strided_slice %153 {offsets = [0, 64], sizes = [8, 32], strides = [1, 1]} : vector<8x128xf32> to vector<8x32xf32>
    %163 = vector.extract_strided_slice %156 {offsets = [0, 64], sizes = [8, 32], strides = [1, 1]} : vector<8x128xf32> to vector<8x32xf32>
    %164 = vector.extract_strided_slice %153 {offsets = [0, 96], sizes = [8, 32], strides = [1, 1]} : vector<8x128xf32> to vector<8x32xf32>
    %165 = vector.extract_strided_slice %156 {offsets = [0, 96], sizes = [8, 32], strides = [1, 1]} : vector<8x128xf32> to vector<8x32xf32>
    %166 = tpu.concatenate %158, %159, %160, %161, %162, %163, %164, %165 in 1 : vector<8x32xf32>, vector<8x32xf32>, vector<8x32xf32>, vector<8x32xf32>, vector<8x32xf32>, vector<8x32xf32>, vector<8x32xf32>, vector<8x32xf32> -> vector<8x256xf32>
    %167 = arith.addf %157, %166 : vector<8x256xf32>
    %168 = vector.extract_strided_slice %167 {offsets = [0, 0], sizes = [8, 192], strides = [1, 1]} : vector<8x256xf32> to vector<8x192xf32>
    %169 = arith.negf %168 : vector<8x192xf32>
    %170 = math.exp %169 : vector<8x192xf32>
    %cst_61 = arith.constant 1.000000e+00 : f32
    %171 = vector.broadcast %cst_61 : f32 to vector<8x192xf32>
    %172 = arith.addf %171, %170 : vector<8x192xf32>
    %173 = arith.divf %171, %172 : vector<8x192xf32>
    %174 = vector.extract_strided_slice %167 {offsets = [0, 192], sizes = [8, 64], strides = [1, 1]} : vector<8x256xf32> to vector<8x64xf32>
    %175 = math.tanh %174 : vector<8x64xf32>
    %176 = vector.extract_strided_slice %173 {offsets = [0, 0], sizes = [8, 64], strides = [1, 1]} : vector<8x192xf32> to vector<8x64xf32>
    %177 = vector.extract_strided_slice %173 {offsets = [0, 64], sizes = [8, 64], strides = [1, 1]} : vector<8x192xf32> to vector<8x64xf32>
    %178 = vector.extract_strided_slice %173 {offsets = [0, 128], sizes = [8, 64], strides = [1, 1]} : vector<8x192xf32> to vector<8x64xf32>
    %179 = arith.mulf %177, %137 : vector<8x64xf32>
    %180 = arith.mulf %176, %175 : vector<8x64xf32>
    %181 = arith.addf %179, %180 : vector<8x64xf32>
    %182 = math.tanh %181 : vector<8x64xf32>
    %183 = arith.mulf %178, %182 : vector<8x64xf32>
    %184 = vector.extract_strided_slice %183 {offsets = [0, 0], sizes = [8, 32], strides = [1, 1]} : vector<8x64xf32> to vector<8x32xf32>
    %185 = arith.index_cast %c3_i32 : i32 to index
    %c0_62 = arith.constant 0 : index
    %c0_63 = arith.constant 0 : index
    %186 = vector.load %arg9[%185, %c0_62, %c0_63] : memref<8x8x64xf32, #tpu.memory_space<vmem>>, vector<1x8x32xf32>
    %187 = vector.shape_cast %186 : vector<1x8x32xf32> to vector<8x32xf32>
    %188 = vector.shape_cast %184 : vector<8x32xf32> to vector<1x8x32xf32>
    tpu.vector_store %arg9[%185, %c0_62, %c0_63], %188 {strides = array<i32>} : memref<8x8x64xf32, #tpu.memory_space<vmem>>, vector<1x8x32xf32>,
    %189 = vector.extract_strided_slice %183 {offsets = [0, 32], sizes = [8, 32], strides = [1, 1]} : vector<8x64xf32> to vector<8x32xf32>
    %190 = arith.index_cast %150 : i32 to index
    %c0_64 = arith.constant 0 : index
    %c32_65 = arith.constant 32 : index
    %191 = vector.load %arg9[%190, %c0_64, %c32_65] : memref<8x8x64xf32, #tpu.memory_space<vmem>>, vector<1x8x32xf32>
    %192 = vector.shape_cast %191 : vector<1x8x32xf32> to vector<8x32xf32>
    %193 = vector.shape_cast %189 : vector<8x32xf32> to vector<1x8x32xf32>
    tpu.vector_store %arg9[%190, %c0_64, %c32_65], %193 {strides = array<i32>} : memref<8x8x64xf32, #tpu.memory_space<vmem>>, vector<1x8x32xf32>,
    %c4_i32 = arith.constant 4 : i32
    %c7_i32_66 = arith.constant 7 : i32
    %194 = arith.subi %c7_i32_66, %c4_i32 : i32
    %c0_67 = arith.constant 0 : index
    %195 = arith.index_cast %c4_i32 : i32 to index
    %c0_68 = arith.constant 0 : index
    %c0_69 = arith.constant 0 : index
    %196 = vector.load %arg8[%c0_67, %195, %c0_68, %c0_69] : memref<2x8x8x128xf32, #tpu.memory_space<vmem>>, vector<1x1x8x128xf32>
    %197 = vector.shape_cast %196 : vector<1x1x8x128xf32> to vector<8x128xf32>
    %c1_70 = arith.constant 1 : index
    %198 = arith.index_cast %194 : i32 to index
    %c0_71 = arith.constant 0 : index
    %c0_72 = arith.constant 0 : index
    %199 = vector.load %arg8[%c1_70, %198, %c0_71, %c0_72] : memref<2x8x8x128xf32, #tpu.memory_space<vmem>>, vector<1x1x8x128xf32>
    %200 = vector.shape_cast %199 : vector<1x1x8x128xf32> to vector<8x128xf32>
    %cst_73 = arith.constant dense<0.000000e+00> : vector<8x256xf32>
    %201 = tpu.matmul %183, %16, %cst_73 {dimension_numbers = #tpu.dot_dimension_numbers<[1], [0], [0], [1], [0, 0, 1, 1], [], []>} : vector<8x64xf32>, vector<64x256xf32>, vector<8x256xf32> -> vector<8x256xf32>
    %202 = vector.extract_strided_slice %197 {offsets = [0, 0], sizes = [8, 32], strides = [1, 1]} : vector<8x128xf32> to vector<8x32xf32>
    %203 = vector.extract_strided_slice %200 {offsets = [0, 0], sizes = [8, 32], strides = [1, 1]} : vector<8x128xf32> to vector<8x32xf32>
    %204 = vector.extract_strided_slice %197 {offsets = [0, 32], sizes = [8, 32], strides = [1, 1]} : vector<8x128xf32> to vector<8x32xf32>
    %205 = vector.extract_strided_slice %200 {offsets = [0, 32], sizes = [8, 32], strides = [1, 1]} : vector<8x128xf32> to vector<8x32xf32>
    %206 = vector.extract_strided_slice %197 {offsets = [0, 64], sizes = [8, 32], strides = [1, 1]} : vector<8x128xf32> to vector<8x32xf32>
    %207 = vector.extract_strided_slice %200 {offsets = [0, 64], sizes = [8, 32], strides = [1, 1]} : vector<8x128xf32> to vector<8x32xf32>
    %208 = vector.extract_strided_slice %197 {offsets = [0, 96], sizes = [8, 32], strides = [1, 1]} : vector<8x128xf32> to vector<8x32xf32>
    %209 = vector.extract_strided_slice %200 {offsets = [0, 96], sizes = [8, 32], strides = [1, 1]} : vector<8x128xf32> to vector<8x32xf32>
    %210 = tpu.concatenate %202, %203, %204, %205, %206, %207, %208, %209 in 1 : vector<8x32xf32>, vector<8x32xf32>, vector<8x32xf32>, vector<8x32xf32>, vector<8x32xf32>, vector<8x32xf32>, vector<8x32xf32>, vector<8x32xf32> -> vector<8x256xf32>
    %211 = arith.addf %201, %210 : vector<8x256xf32>
    %212 = vector.extract_strided_slice %211 {offsets = [0, 0], sizes = [8, 192], strides = [1, 1]} : vector<8x256xf32> to vector<8x192xf32>
    %213 = arith.negf %212 : vector<8x192xf32>
    %214 = math.exp %213 : vector<8x192xf32>
    %cst_74 = arith.constant 1.000000e+00 : f32
    %215 = vector.broadcast %cst_74 : f32 to vector<8x192xf32>
    %216 = arith.addf %215, %214 : vector<8x192xf32>
    %217 = arith.divf %215, %216 : vector<8x192xf32>
    %218 = vector.extract_strided_slice %211 {offsets = [0, 192], sizes = [8, 64], strides = [1, 1]} : vector<8x256xf32> to vector<8x64xf32>
    %219 = math.tanh %218 : vector<8x64xf32>
    %220 = vector.extract_strided_slice %217 {offsets = [0, 0], sizes = [8, 64], strides = [1, 1]} : vector<8x192xf32> to vector<8x64xf32>
    %221 = vector.extract_strided_slice %217 {offsets = [0, 64], sizes = [8, 64], strides = [1, 1]} : vector<8x192xf32> to vector<8x64xf32>
    %222 = vector.extract_strided_slice %217 {offsets = [0, 128], sizes = [8, 64], strides = [1, 1]} : vector<8x192xf32> to vector<8x64xf32>
    %223 = arith.mulf %221, %181 : vector<8x64xf32>
    %224 = arith.mulf %220, %219 : vector<8x64xf32>
    %225 = arith.addf %223, %224 : vector<8x64xf32>
    %226 = math.tanh %225 : vector<8x64xf32>
    %227 = arith.mulf %222, %226 : vector<8x64xf32>
    %228 = vector.extract_strided_slice %227 {offsets = [0, 0], sizes = [8, 32], strides = [1, 1]} : vector<8x64xf32> to vector<8x32xf32>
    %229 = arith.index_cast %c4_i32 : i32 to index
    %c0_75 = arith.constant 0 : index
    %c0_76 = arith.constant 0 : index
    %230 = vector.load %arg9[%229, %c0_75, %c0_76] : memref<8x8x64xf32, #tpu.memory_space<vmem>>, vector<1x8x32xf32>
    %231 = vector.shape_cast %230 : vector<1x8x32xf32> to vector<8x32xf32>
    %232 = vector.shape_cast %228 : vector<8x32xf32> to vector<1x8x32xf32>
    tpu.vector_store %arg9[%229, %c0_75, %c0_76], %232 {strides = array<i32>} : memref<8x8x64xf32, #tpu.memory_space<vmem>>, vector<1x8x32xf32>,
    %233 = vector.extract_strided_slice %227 {offsets = [0, 32], sizes = [8, 32], strides = [1, 1]} : vector<8x64xf32> to vector<8x32xf32>
    %234 = arith.index_cast %194 : i32 to index
    %c0_77 = arith.constant 0 : index
    %c32_78 = arith.constant 32 : index
    %235 = vector.load %arg9[%234, %c0_77, %c32_78] : memref<8x8x64xf32, #tpu.memory_space<vmem>>, vector<1x8x32xf32>
    %236 = vector.shape_cast %235 : vector<1x8x32xf32> to vector<8x32xf32>
    %237 = vector.shape_cast %233 : vector<8x32xf32> to vector<1x8x32xf32>
    tpu.vector_store %arg9[%234, %c0_77, %c32_78], %237 {strides = array<i32>} : memref<8x8x64xf32, #tpu.memory_space<vmem>>, vector<1x8x32xf32>,
    %c5_i32 = arith.constant 5 : i32
    %c7_i32_79 = arith.constant 7 : i32
    %238 = arith.subi %c7_i32_79, %c5_i32 : i32
    %c0_80 = arith.constant 0 : index
    %239 = arith.index_cast %c5_i32 : i32 to index
    %c0_81 = arith.constant 0 : index
    %c0_82 = arith.constant 0 : index
    %240 = vector.load %arg8[%c0_80, %239, %c0_81, %c0_82] : memref<2x8x8x128xf32, #tpu.memory_space<vmem>>, vector<1x1x8x128xf32>
    %241 = vector.shape_cast %240 : vector<1x1x8x128xf32> to vector<8x128xf32>
    %c1_83 = arith.constant 1 : index
    %242 = arith.index_cast %238 : i32 to index
    %c0_84 = arith.constant 0 : index
    %c0_85 = arith.constant 0 : index
    %243 = vector.load %arg8[%c1_83, %242, %c0_84, %c0_85] : memref<2x8x8x128xf32, #tpu.memory_space<vmem>>, vector<1x1x8x128xf32>
    %244 = vector.shape_cast %243 : vector<1x1x8x128xf32> to vector<8x128xf32>
    %cst_86 = arith.constant dense<0.000000e+00> : vector<8x256xf32>
    %245 = tpu.matmul %227, %16, %cst_86 {dimension_numbers = #tpu.dot_dimension_numbers<[1], [0], [0], [1], [0, 0, 1, 1], [], []>} : vector<8x64xf32>, vector<64x256xf32>, vector<8x256xf32> -> vector<8x256xf32>
    %246 = vector.extract_strided_slice %241 {offsets = [0, 0], sizes = [8, 32], strides = [1, 1]} : vector<8x128xf32> to vector<8x32xf32>
    %247 = vector.extract_strided_slice %244 {offsets = [0, 0], sizes = [8, 32], strides = [1, 1]} : vector<8x128xf32> to vector<8x32xf32>
    %248 = vector.extract_strided_slice %241 {offsets = [0, 32], sizes = [8, 32], strides = [1, 1]} : vector<8x128xf32> to vector<8x32xf32>
    %249 = vector.extract_strided_slice %244 {offsets = [0, 32], sizes = [8, 32], strides = [1, 1]} : vector<8x128xf32> to vector<8x32xf32>
    %250 = vector.extract_strided_slice %241 {offsets = [0, 64], sizes = [8, 32], strides = [1, 1]} : vector<8x128xf32> to vector<8x32xf32>
    %251 = vector.extract_strided_slice %244 {offsets = [0, 64], sizes = [8, 32], strides = [1, 1]} : vector<8x128xf32> to vector<8x32xf32>
    %252 = vector.extract_strided_slice %241 {offsets = [0, 96], sizes = [8, 32], strides = [1, 1]} : vector<8x128xf32> to vector<8x32xf32>
    %253 = vector.extract_strided_slice %244 {offsets = [0, 96], sizes = [8, 32], strides = [1, 1]} : vector<8x128xf32> to vector<8x32xf32>
    %254 = tpu.concatenate %246, %247, %248, %249, %250, %251, %252, %253 in 1 : vector<8x32xf32>, vector<8x32xf32>, vector<8x32xf32>, vector<8x32xf32>, vector<8x32xf32>, vector<8x32xf32>, vector<8x32xf32>, vector<8x32xf32> -> vector<8x256xf32>
    %255 = arith.addf %245, %254 : vector<8x256xf32>
    %256 = vector.extract_strided_slice %255 {offsets = [0, 0], sizes = [8, 192], strides = [1, 1]} : vector<8x256xf32> to vector<8x192xf32>
    %257 = arith.negf %256 : vector<8x192xf32>
    %258 = math.exp %257 : vector<8x192xf32>
    %cst_87 = arith.constant 1.000000e+00 : f32
    %259 = vector.broadcast %cst_87 : f32 to vector<8x192xf32>
    %260 = arith.addf %259, %258 : vector<8x192xf32>
    %261 = arith.divf %259, %260 : vector<8x192xf32>
    %262 = vector.extract_strided_slice %255 {offsets = [0, 192], sizes = [8, 64], strides = [1, 1]} : vector<8x256xf32> to vector<8x64xf32>
    %263 = math.tanh %262 : vector<8x64xf32>
    %264 = vector.extract_strided_slice %261 {offsets = [0, 0], sizes = [8, 64], strides = [1, 1]} : vector<8x192xf32> to vector<8x64xf32>
    %265 = vector.extract_strided_slice %261 {offsets = [0, 64], sizes = [8, 64], strides = [1, 1]} : vector<8x192xf32> to vector<8x64xf32>
    %266 = vector.extract_strided_slice %261 {offsets = [0, 128], sizes = [8, 64], strides = [1, 1]} : vector<8x192xf32> to vector<8x64xf32>
    %267 = arith.mulf %265, %225 : vector<8x64xf32>
    %268 = arith.mulf %264, %263 : vector<8x64xf32>
    %269 = arith.addf %267, %268 : vector<8x64xf32>
    %270 = math.tanh %269 : vector<8x64xf32>
    %271 = arith.mulf %266, %270 : vector<8x64xf32>
    %272 = vector.extract_strided_slice %271 {offsets = [0, 0], sizes = [8, 32], strides = [1, 1]} : vector<8x64xf32> to vector<8x32xf32>
    %273 = arith.index_cast %c5_i32 : i32 to index
    %c0_88 = arith.constant 0 : index
    %c0_89 = arith.constant 0 : index
    %274 = vector.load %arg9[%273, %c0_88, %c0_89] : memref<8x8x64xf32, #tpu.memory_space<vmem>>, vector<1x8x32xf32>
    %275 = vector.shape_cast %274 : vector<1x8x32xf32> to vector<8x32xf32>
    %276 = vector.shape_cast %272 : vector<8x32xf32> to vector<1x8x32xf32>
    tpu.vector_store %arg9[%273, %c0_88, %c0_89], %276 {strides = array<i32>} : memref<8x8x64xf32, #tpu.memory_space<vmem>>, vector<1x8x32xf32>,
    %277 = vector.extract_strided_slice %271 {offsets = [0, 32], sizes = [8, 32], strides = [1, 1]} : vector<8x64xf32> to vector<8x32xf32>
    %278 = arith.index_cast %238 : i32 to index
    %c0_90 = arith.constant 0 : index
    %c32_91 = arith.constant 32 : index
    %279 = vector.load %arg9[%278, %c0_90, %c32_91] : memref<8x8x64xf32, #tpu.memory_space<vmem>>, vector<1x8x32xf32>
    %280 = vector.shape_cast %279 : vector<1x8x32xf32> to vector<8x32xf32>
    %281 = vector.shape_cast %277 : vector<8x32xf32> to vector<1x8x32xf32>
    tpu.vector_store %arg9[%278, %c0_90, %c32_91], %281 {strides = array<i32>} : memref<8x8x64xf32, #tpu.memory_space<vmem>>, vector<1x8x32xf32>,
    %c6_i32 = arith.constant 6 : i32
    %c7_i32_92 = arith.constant 7 : i32
    %282 = arith.subi %c7_i32_92, %c6_i32 : i32
    %c0_93 = arith.constant 0 : index
    %283 = arith.index_cast %c6_i32 : i32 to index
    %c0_94 = arith.constant 0 : index
    %c0_95 = arith.constant 0 : index
    %284 = vector.load %arg8[%c0_93, %283, %c0_94, %c0_95] : memref<2x8x8x128xf32, #tpu.memory_space<vmem>>, vector<1x1x8x128xf32>
    %285 = vector.shape_cast %284 : vector<1x1x8x128xf32> to vector<8x128xf32>
    %c1_96 = arith.constant 1 : index
    %286 = arith.index_cast %282 : i32 to index
    %c0_97 = arith.constant 0 : index
    %c0_98 = arith.constant 0 : index
    %287 = vector.load %arg8[%c1_96, %286, %c0_97, %c0_98] : memref<2x8x8x128xf32, #tpu.memory_space<vmem>>, vector<1x1x8x128xf32>
    %288 = vector.shape_cast %287 : vector<1x1x8x128xf32> to vector<8x128xf32>
    %cst_99 = arith.constant dense<0.000000e+00> : vector<8x256xf32>
    %289 = tpu.matmul %271, %16, %cst_99 {dimension_numbers = #tpu.dot_dimension_numbers<[1], [0], [0], [1], [0, 0, 1, 1], [], []>} : vector<8x64xf32>, vector<64x256xf32>, vector<8x256xf32> -> vector<8x256xf32>
    %290 = vector.extract_strided_slice %285 {offsets = [0, 0], sizes = [8, 32], strides = [1, 1]} : vector<8x128xf32> to vector<8x32xf32>
    %291 = vector.extract_strided_slice %288 {offsets = [0, 0], sizes = [8, 32], strides = [1, 1]} : vector<8x128xf32> to vector<8x32xf32>
    %292 = vector.extract_strided_slice %285 {offsets = [0, 32], sizes = [8, 32], strides = [1, 1]} : vector<8x128xf32> to vector<8x32xf32>
    %293 = vector.extract_strided_slice %288 {offsets = [0, 32], sizes = [8, 32], strides = [1, 1]} : vector<8x128xf32> to vector<8x32xf32>
    %294 = vector.extract_strided_slice %285 {offsets = [0, 64], sizes = [8, 32], strides = [1, 1]} : vector<8x128xf32> to vector<8x32xf32>
    %295 = vector.extract_strided_slice %288 {offsets = [0, 64], sizes = [8, 32], strides = [1, 1]} : vector<8x128xf32> to vector<8x32xf32>
    %296 = vector.extract_strided_slice %285 {offsets = [0, 96], sizes = [8, 32], strides = [1, 1]} : vector<8x128xf32> to vector<8x32xf32>
    %297 = vector.extract_strided_slice %288 {offsets = [0, 96], sizes = [8, 32], strides = [1, 1]} : vector<8x128xf32> to vector<8x32xf32>
    %298 = tpu.concatenate %290, %291, %292, %293, %294, %295, %296, %297 in 1 : vector<8x32xf32>, vector<8x32xf32>, vector<8x32xf32>, vector<8x32xf32>, vector<8x32xf32>, vector<8x32xf32>, vector<8x32xf32>, vector<8x32xf32> -> vector<8x256xf32>
    %299 = arith.addf %289, %298 : vector<8x256xf32>
    %300 = vector.extract_strided_slice %299 {offsets = [0, 0], sizes = [8, 192], strides = [1, 1]} : vector<8x256xf32> to vector<8x192xf32>
    %301 = arith.negf %300 : vector<8x192xf32>
    %302 = math.exp %301 : vector<8x192xf32>
    %cst_100 = arith.constant 1.000000e+00 : f32
    %303 = vector.broadcast %cst_100 : f32 to vector<8x192xf32>
    %304 = arith.addf %303, %302 : vector<8x192xf32>
    %305 = arith.divf %303, %304 : vector<8x192xf32>
    %306 = vector.extract_strided_slice %299 {offsets = [0, 192], sizes = [8, 64], strides = [1, 1]} : vector<8x256xf32> to vector<8x64xf32>
    %307 = math.tanh %306 : vector<8x64xf32>
    %308 = vector.extract_strided_slice %305 {offsets = [0, 0], sizes = [8, 64], strides = [1, 1]} : vector<8x192xf32> to vector<8x64xf32>
    %309 = vector.extract_strided_slice %305 {offsets = [0, 64], sizes = [8, 64], strides = [1, 1]} : vector<8x192xf32> to vector<8x64xf32>
    %310 = vector.extract_strided_slice %305 {offsets = [0, 128], sizes = [8, 64], strides = [1, 1]} : vector<8x192xf32> to vector<8x64xf32>
    %311 = arith.mulf %309, %269 : vector<8x64xf32>
    %312 = arith.mulf %308, %307 : vector<8x64xf32>
    %313 = arith.addf %311, %312 : vector<8x64xf32>
    %314 = math.tanh %313 : vector<8x64xf32>
    %315 = arith.mulf %310, %314 : vector<8x64xf32>
    %316 = vector.extract_strided_slice %315 {offsets = [0, 0], sizes = [8, 32], strides = [1, 1]} : vector<8x64xf32> to vector<8x32xf32>
    %317 = arith.index_cast %c6_i32 : i32 to index
    %c0_101 = arith.constant 0 : index
    %c0_102 = arith.constant 0 : index
    %318 = vector.load %arg9[%317, %c0_101, %c0_102] : memref<8x8x64xf32, #tpu.memory_space<vmem>>, vector<1x8x32xf32>
    %319 = vector.shape_cast %318 : vector<1x8x32xf32> to vector<8x32xf32>
    %320 = vector.shape_cast %316 : vector<8x32xf32> to vector<1x8x32xf32>
    tpu.vector_store %arg9[%317, %c0_101, %c0_102], %320 {strides = array<i32>} : memref<8x8x64xf32, #tpu.memory_space<vmem>>, vector<1x8x32xf32>,
    %321 = vector.extract_strided_slice %315 {offsets = [0, 32], sizes = [8, 32], strides = [1, 1]} : vector<8x64xf32> to vector<8x32xf32>
    %322 = arith.index_cast %282 : i32 to index
    %c0_103 = arith.constant 0 : index
    %c32_104 = arith.constant 32 : index
    %323 = vector.load %arg9[%322, %c0_103, %c32_104] : memref<8x8x64xf32, #tpu.memory_space<vmem>>, vector<1x8x32xf32>
    %324 = vector.shape_cast %323 : vector<1x8x32xf32> to vector<8x32xf32>
    %325 = vector.shape_cast %321 : vector<8x32xf32> to vector<1x8x32xf32>
    tpu.vector_store %arg9[%322, %c0_103, %c32_104], %325 {strides = array<i32>} : memref<8x8x64xf32, #tpu.memory_space<vmem>>, vector<1x8x32xf32>,
    %c7_i32_105 = arith.constant 7 : i32
    %c7_i32_106 = arith.constant 7 : i32
    %326 = arith.subi %c7_i32_106, %c7_i32_105 : i32
    %c0_107 = arith.constant 0 : index
    %327 = arith.index_cast %c7_i32_105 : i32 to index
    %c0_108 = arith.constant 0 : index
    %c0_109 = arith.constant 0 : index
    %328 = vector.load %arg8[%c0_107, %327, %c0_108, %c0_109] : memref<2x8x8x128xf32, #tpu.memory_space<vmem>>, vector<1x1x8x128xf32>
    %329 = vector.shape_cast %328 : vector<1x1x8x128xf32> to vector<8x128xf32>
    %c1_110 = arith.constant 1 : index
    %330 = arith.index_cast %326 : i32 to index
    %c0_111 = arith.constant 0 : index
    %c0_112 = arith.constant 0 : index
    %331 = vector.load %arg8[%c1_110, %330, %c0_111, %c0_112] : memref<2x8x8x128xf32, #tpu.memory_space<vmem>>, vector<1x1x8x128xf32>
    %332 = vector.shape_cast %331 : vector<1x1x8x128xf32> to vector<8x128xf32>
    %cst_113 = arith.constant dense<0.000000e+00> : vector<8x256xf32>
    %333 = tpu.matmul %315, %16, %cst_113 {dimension_numbers = #tpu.dot_dimension_numbers<[1], [0], [0], [1], [0, 0, 1, 1], [], []>} : vector<8x64xf32>, vector<64x256xf32>, vector<8x256xf32> -> vector<8x256xf32>
    %334 = vector.extract_strided_slice %329 {offsets = [0, 0], sizes = [8, 32], strides = [1, 1]} : vector<8x128xf32> to vector<8x32xf32>
    %335 = vector.extract_strided_slice %332 {offsets = [0, 0], sizes = [8, 32], strides = [1, 1]} : vector<8x128xf32> to vector<8x32xf32>
    %336 = vector.extract_strided_slice %329 {offsets = [0, 32], sizes = [8, 32], strides = [1, 1]} : vector<8x128xf32> to vector<8x32xf32>
    %337 = vector.extract_strided_slice %332 {offsets = [0, 32], sizes = [8, 32], strides = [1, 1]} : vector<8x128xf32> to vector<8x32xf32>
    %338 = vector.extract_strided_slice %329 {offsets = [0, 64], sizes = [8, 32], strides = [1, 1]} : vector<8x128xf32> to vector<8x32xf32>
    %339 = vector.extract_strided_slice %332 {offsets = [0, 64], sizes = [8, 32], strides = [1, 1]} : vector<8x128xf32> to vector<8x32xf32>
    %340 = vector.extract_strided_slice %329 {offsets = [0, 96], sizes = [8, 32], strides = [1, 1]} : vector<8x128xf32> to vector<8x32xf32>
    %341 = vector.extract_strided_slice %332 {offsets = [0, 96], sizes = [8, 32], strides = [1, 1]} : vector<8x128xf32> to vector<8x32xf32>
    %342 = tpu.concatenate %334, %335, %336, %337, %338, %339, %340, %341 in 1 : vector<8x32xf32>, vector<8x32xf32>, vector<8x32xf32>, vector<8x32xf32>, vector<8x32xf32>, vector<8x32xf32>, vector<8x32xf32>, vector<8x32xf32> -> vector<8x256xf32>
    %343 = arith.addf %333, %342 : vector<8x256xf32>
    %344 = vector.extract_strided_slice %343 {offsets = [0, 0], sizes = [8, 192], strides = [1, 1]} : vector<8x256xf32> to vector<8x192xf32>
    %345 = arith.negf %344 : vector<8x192xf32>
    %346 = math.exp %345 : vector<8x192xf32>
    %cst_114 = arith.constant 1.000000e+00 : f32
    %347 = vector.broadcast %cst_114 : f32 to vector<8x192xf32>
    %348 = arith.addf %347, %346 : vector<8x192xf32>
    %349 = arith.divf %347, %348 : vector<8x192xf32>
    %350 = vector.extract_strided_slice %343 {offsets = [0, 192], sizes = [8, 64], strides = [1, 1]} : vector<8x256xf32> to vector<8x64xf32>
    %351 = math.tanh %350 : vector<8x64xf32>
    %352 = vector.extract_strided_slice %349 {offsets = [0, 0], sizes = [8, 64], strides = [1, 1]} : vector<8x192xf32> to vector<8x64xf32>
    %353 = vector.extract_strided_slice %349 {offsets = [0, 64], sizes = [8, 64], strides = [1, 1]} : vector<8x192xf32> to vector<8x64xf32>
    %354 = vector.extract_strided_slice %349 {offsets = [0, 128], sizes = [8, 64], strides = [1, 1]} : vector<8x192xf32> to vector<8x64xf32>
    %355 = arith.mulf %353, %313 : vector<8x64xf32>
    %356 = arith.mulf %352, %351 : vector<8x64xf32>
    %357 = arith.addf %355, %356 : vector<8x64xf32>
    %358 = math.tanh %357 : vector<8x64xf32>
    %359 = arith.mulf %354, %358 : vector<8x64xf32>
    %360 = vector.extract_strided_slice %359 {offsets = [0, 0], sizes = [8, 32], strides = [1, 1]} : vector<8x64xf32> to vector<8x32xf32>
    %361 = arith.index_cast %c7_i32_105 : i32 to index
    %c0_115 = arith.constant 0 : index
    %c0_116 = arith.constant 0 : index
    %362 = vector.load %arg9[%361, %c0_115, %c0_116] : memref<8x8x64xf32, #tpu.memory_space<vmem>>, vector<1x8x32xf32>
    %363 = vector.shape_cast %362 : vector<1x8x32xf32> to vector<8x32xf32>
    %364 = vector.shape_cast %360 : vector<8x32xf32> to vector<1x8x32xf32>
    tpu.vector_store %arg9[%361, %c0_115, %c0_116], %364 {strides = array<i32>} : memref<8x8x64xf32, #tpu.memory_space<vmem>>, vector<1x8x32xf32>,
    %365 = vector.extract_strided_slice %359 {offsets = [0, 32], sizes = [8, 32], strides = [1, 1]} : vector<8x64xf32> to vector<8x32xf32>
    %366 = arith.index_cast %326 : i32 to index
    %c0_117 = arith.constant 0 : index
    %c32_118 = arith.constant 32 : index
    %367 = vector.load %arg9[%366, %c0_117, %c32_118] : memref<8x8x64xf32, #tpu.memory_space<vmem>>, vector<1x8x32xf32>
    %368 = vector.shape_cast %367 : vector<1x8x32xf32> to vector<8x32xf32>
    %369 = vector.shape_cast %365 : vector<8x32xf32> to vector<1x8x32xf32>
    tpu.vector_store %arg9[%366, %c0_117, %c32_118], %369 {strides = array<i32>} : memref<8x8x64xf32, #tpu.memory_space<vmem>>, vector<1x8x32xf32>,
    %c8_i32 = arith.constant 8 : i32
    %c0_119 = arith.constant 0 : index
    %c0_120 = arith.constant 0 : index
    %c0_121 = arith.constant 0 : index
    %370 = vector.load %arg9[%c0_119, %c0_120, %c0_121] : memref<8x8x64xf32, #tpu.memory_space<vmem>>, vector<8x8x64xf32>
    %371 = vector.shape_cast %370 : vector<8x8x64xf32> to vector<64x64xf32>
    %c0_122 = arith.constant 0 : index
    %c0_123 = arith.constant 0 : index
    %372 = vector.load %arg5[%c0_122, %c0_123] : memref<64x128xf32, #tpu.memory_space<vmem>>, vector<64x128xf32>
    %cst_124 = arith.constant dense<0.000000e+00> : vector<64x128xf32>
    %373 = tpu.matmul %371, %372, %cst_124 {dimension_numbers = #tpu.dot_dimension_numbers<[1], [0], [0], [1], [0, 0, 1, 1], [], []>} : vector<64x64xf32>, vector<64x128xf32>, vector<64x128xf32> -> vector<64x128xf32>
    %c0_125 = arith.constant 0 : index
    %c0_126 = arith.constant 0 : index
    %374 = vector.load %arg6[%c0_125, %c0_126] : memref<1x128xf32, #tpu.memory_space<vmem>>, vector<1x128xf32>
    %375 = vector.broadcast %374 : vector<1x128xf32> to vector<64x128xf32>
    %376 = arith.addf %373, %375 : vector<64x128xf32>
    %377 = vector.shape_cast %376 : vector<64x128xf32> to vector<8x8x128xf32>
    %c0_127 = arith.constant 0 : index
    %c0_128 = arith.constant 0 : index
    %c0_129 = arith.constant 0 : index
    %378 = vector.load %arg7[%c0_127, %c0_128, %c0_129] : memref<8x8x128xf32, #tpu.memory_space<vmem>>, vector<8x8x128xf32>
    tpu.vector_store %arg7[%c0_127, %c0_128, %c0_129], %377 {strides = array<i32>} : memref<8x8x128xf32, #tpu.memory_space<vmem>>, vector<8x8x128xf32>,
    return
  }
  func.func @transform_0(%arg0: i32) -> (i32, i32, i32) {
    %c0_i32 = arith.constant 0 : i32
    %c0_i32_0 = arith.constant 0 : i32
    %c0_i32_1 = arith.constant 0 : i32
    return %c0_i32, %arg0, %c0_i32_0 : i32, i32, i32
  }
  func.func @transform_1(%arg0: i32) -> (i32, i32) {
    %c0_i32 = arith.constant 0 : i32
    %c0_i32_0 = arith.constant 0 : i32
    %c0_i32_1 = arith.constant 0 : i32
    return %c0_i32, %c0_i32_0 : i32, i32
  }
  func.func @transform_2(%arg0: i32) -> (i32, i32) {
    %c0_i32 = arith.constant 0 : i32
    %c0_i32_0 = arith.constant 0 : i32
    %c0_i32_1 = arith.constant 0 : i32
    return %c0_i32, %c0_i32_0 : i32, i32
  }
  func.func @transform_3(%arg0: i32) -> (i32, i32) {
    %c0_i32 = arith.constant 0 : i32
    %c0_i32_0 = arith.constant 0 : i32
    %c0_i32_1 = arith.constant 0 : i32
    return %c0_i32, %c0_i32_0 : i32, i32
  }
  func.func @transform_4(%arg0: i32) -> (i32, i32) {
    %c0_i32 = arith.constant 0 : i32
    %c0_i32_0 = arith.constant 0 : i32
    %c0_i32_1 = arith.constant 0 : i32
    return %c0_i32, %c0_i32_0 : i32, i32
  }
  func.func @transform_5(%arg0: i32) -> (i32, i32) {
    %c0_i32 = arith.constant 0 : i32
    %c0_i32_0 = arith.constant 0 : i32
    %c0_i32_1 = arith.constant 0 : i32
    return %c0_i32, %c0_i32_0 : i32, i32
  }
  func.func @transform_6(%arg0: i32) -> (i32, i32, i32) {
    %c0_i32 = arith.constant 0 : i32
    %c0_i32_0 = arith.constant 0 : i32
    %c0_i32_1 = arith.constant 0 : i32
    return %c0_i32, %arg0, %c0_i32_0 : i32, i32, i32
  }
}

module attributes {stable_mosaic.version = 11 : i64} {
  func.func @joint_kernel(%arg0: i32, %arg1: memref<8x8x32xf32, #tpu.memory_space<vmem>>, %arg2: memref<32x256xf32, #tpu.memory_space<vmem>>, %arg3: memref<1x256xf32, #tpu.memory_space<vmem>>, %arg4: memref<64x256xf32, #tpu.memory_space<vmem>>, %arg5: memref<64x128xf32, #tpu.memory_space<vmem>>, %arg6: memref<1x128xf32, #tpu.memory_space<vmem>>, %arg7: memref<8x8x128xf32, #tpu.memory_space<vmem>>, %arg8: memref<2x8x8x128xf32, #tpu.memory_space<vmem>>, %arg9: memref<8x8x64xf32, #tpu.memory_space<vmem>>) attributes {dimension_semantics = [#tpu.dimension_semantics<parallel>], iteration_bounds = array<i64: 1>, scalar_prefetch = 0 : i64, scratch_operands = 2 : i64, tpu.core_type = #tpu.core_type<tc>, window_params = [{transform_indices = @transform_0, window_bounds = array<i64: 8, 8, 32>}, {pipeline_mode = #tpu.pipeline_mode<synchronous>, transform_indices = @transform_1, window_bounds = array<i64: 32, 256>}, {pipeline_mode = #tpu.pipeline_mode<synchronous>, transform_indices = @transform_2, window_bounds = array<i64: 1, 256>}, {pipeline_mode = #tpu.pipeline_mode<synchronous>, transform_indices = @transform_3, window_bounds = array<i64: 64, 256>}, {pipeline_mode = #tpu.pipeline_mode<synchronous>, transform_indices = @transform_4, window_bounds = array<i64: 64, 128>}, {pipeline_mode = #tpu.pipeline_mode<synchronous>, transform_indices = @transform_5, window_bounds = array<i64: 1, 128>}, {transform_indices = @transform_6, window_bounds = array<i64: 8, 8, 128>}]} {
    %c0 = arith.constant 0 : index
    %c0_0 = arith.constant 0 : index
    %c0_1 = arith.constant 0 : index
    %0 = vector.load %arg1[%c0, %c0_0, %c0_1] : memref<8x8x32xf32, #tpu.memory_space<vmem>>, vector<8x8x32xf32>
    %1 = vector.shape_cast %0 : vector<8x8x32xf32> to vector<64x32xf32>
    %c0_2 = arith.constant 0 : index
    %c0_3 = arith.constant 0 : index
    %2 = vector.load %arg2[%c0_2, %c0_3] : memref<32x256xf32, #tpu.memory_space<vmem>>, vector<32x256xf32>
    %cst = arith.constant dense<0.000000e+00> : vector<64x256xf32>
    %3 = tpu.matmul %1, %2, %cst {dimension_numbers = #tpu.dot_dimension_numbers<[1], [0], [0], [1], [0, 0, 1, 1], [], []>} : vector<64x32xf32>, vector<32x256xf32>, vector<64x256xf32> -> vector<64x256xf32>
    %c0_4 = arith.constant 0 : index
    %c0_5 = arith.constant 0 : index
    %4 = vector.load %arg3[%c0_4, %c0_5] : memref<1x256xf32, #tpu.memory_space<vmem>>, vector<1x256xf32>
    %5 = vector.broadcast %4 : vector<1x256xf32> to vector<64x256xf32>
    %6 = arith.addf %3, %5 : vector<64x256xf32>
    %7 = vector.shape_cast %6 : vector<64x256xf32> to vector<8x8x256xf32>
    %8 = vector.extract_strided_slice %7 {offsets = [0, 0, 0], sizes = [8, 8, 128], strides = [1, 1, 1]} : vector<8x8x256xf32> to vector<8x8x128xf32>
    %c0_6 = arith.constant 0 : index
    %c0_7 = arith.constant 0 : index
    %c0_8 = arith.constant 0 : index
    %c0_9 = arith.constant 0 : index
    %9 = vector.load %arg8[%c0_6, %c0_7, %c0_8, %c0_9] : memref<2x8x8x128xf32, #tpu.memory_space<vmem>>, vector<1x8x8x128xf32>
    %10 = vector.shape_cast %9 : vector<1x8x8x128xf32> to vector<8x8x128xf32>
    %11 = vector.shape_cast %8 : vector<8x8x128xf32> to vector<1x8x8x128xf32>
    tpu.vector_store %arg8[%c0_6, %c0_7, %c0_8, %c0_9], %11 {strides = array<i32>} : memref<2x8x8x128xf32, #tpu.memory_space<vmem>>, vector<1x8x8x128xf32>,
    %12 = vector.extract_strided_slice %7 {offsets = [0, 0, 128], sizes = [8, 8, 128], strides = [1, 1, 1]} : vector<8x8x256xf32> to vector<8x8x128xf32>
    %c1 = arith.constant 1 : index
    %c0_10 = arith.constant 0 : index
    %c0_11 = arith.constant 0 : index
    %c0_12 = arith.constant 0 : index
    %13 = vector.load %arg8[%c1, %c0_10, %c0_11, %c0_12] : memref<2x8x8x128xf32, #tpu.memory_space<vmem>>, vector<1x8x8x128xf32>
    %14 = vector.shape_cast %13 : vector<1x8x8x128xf32> to vector<8x8x128xf32>
    %15 = vector.shape_cast %12 : vector<8x8x128xf32> to vector<1x8x8x128xf32>
    tpu.vector_store %arg8[%c1, %c0_10, %c0_11, %c0_12], %15 {strides = array<i32>} : memref<2x8x8x128xf32, #tpu.memory_space<vmem>>, vector<1x8x8x128xf32>,
    %c0_13 = arith.constant 0 : index
    %c0_14 = arith.constant 0 : index
    %16 = vector.load %arg4[%c0_13, %c0_14] : memref<64x256xf32, #tpu.memory_space<vmem>>, vector<64x256xf32>
    %cst_15 = arith.constant 0.000000e+00 : f32
    %17 = vector.broadcast %cst_15 : f32 to vector<8x64xf32>
    %c0_i32 = arith.constant 0 : i32
    %c7_i32 = arith.constant 7 : i32
    %18 = arith.subi %c7_i32, %c0_i32 : i32
    %c0_16 = arith.constant 0 : index
    %19 = arith.index_cast %c0_i32 : i32 to index
    %c0_17 = arith.constant 0 : index
    %c0_18 = arith.constant 0 : index
    %20 = vector.load %arg8[%c0_16, %19, %c0_17, %c0_18] : memref<2x8x8x128xf32, #tpu.memory_space<vmem>>, vector<1x1x8x128xf32>
    %21 = vector.shape_cast %20 : vector<1x1x8x128xf32> to vector<8x128xf32>
    %c1_19 = arith.constant 1 : index
    %22 = arith.index_cast %18 : i32 to index
    %c0_20 = arith.constant 0 : index
    %c0_21 = arith.constant 0 : index
    %23 = vector.load %arg8[%c1_19, %22, %c0_20, %c0_21] : memref<2x8x8x128xf32, #tpu.memory_space<vmem>>, vector<1x1x8x128xf32>
    %24 = vector.shape_cast %23 : vector<1x1x8x128xf32> to vector<8x128xf32>
    %cst_22 = arith.constant dense<0.000000e+00> : vector<8x256xf32>
    %25 = tpu.matmul %17, %16, %cst_22 {dimension_numbers = #tpu.dot_dimension_numbers<[1], [0], [0], [1], [0, 0, 1, 1], [], []>} : vector<8x64xf32>, vector<64x256xf32>, vector<8x256xf32> -> vector<8x256xf32>
    %26 = vector.extract_strided_slice %21 {offsets = [0, 0], sizes = [8, 32], strides = [1, 1]} : vector<8x128xf32> to vector<8x32xf32>
    %27 = vector.extract_strided_slice %24 {offsets = [0, 0], sizes = [8, 32], strides = [1, 1]} : vector<8x128xf32> to vector<8x32xf32>
    %28 = vector.extract_strided_slice %21 {offsets = [0, 32], sizes = [8, 32], strides = [1, 1]} : vector<8x128xf32> to vector<8x32xf32>
    %29 = vector.extract_strided_slice %24 {offsets = [0, 32], sizes = [8, 32], strides = [1, 1]} : vector<8x128xf32> to vector<8x32xf32>
    %30 = vector.extract_strided_slice %21 {offsets = [0, 64], sizes = [8, 32], strides = [1, 1]} : vector<8x128xf32> to vector<8x32xf32>
    %31 = vector.extract_strided_slice %24 {offsets = [0, 64], sizes = [8, 32], strides = [1, 1]} : vector<8x128xf32> to vector<8x32xf32>
    %32 = vector.extract_strided_slice %21 {offsets = [0, 96], sizes = [8, 32], strides = [1, 1]} : vector<8x128xf32> to vector<8x32xf32>
    %33 = vector.extract_strided_slice %24 {offsets = [0, 96], sizes = [8, 32], strides = [1, 1]} : vector<8x128xf32> to vector<8x32xf32>
    %34 = tpu.concatenate %26, %27, %28, %29, %30, %31, %32, %33 in 1 : vector<8x32xf32>, vector<8x32xf32>, vector<8x32xf32>, vector<8x32xf32>, vector<8x32xf32>, vector<8x32xf32>, vector<8x32xf32>, vector<8x32xf32> -> vector<8x256xf32>
    %35 = arith.addf %25, %34 : vector<8x256xf32>
    %36 = vector.extract_strided_slice %35 {offsets = [0, 0], sizes = [8, 192], strides = [1, 1]} : vector<8x256xf32> to vector<8x192xf32>
    %37 = arith.negf %36 : vector<8x192xf32>
    %38 = math.exp %37 : vector<8x192xf32>
    %cst_23 = arith.constant 1.000000e+00 : f32
    %39 = vector.broadcast %cst_23 : f32 to vector<8x192xf32>
    %40 = arith.addf %39, %38 : vector<8x192xf32>
    %41 = arith.divf %39, %40 : vector<8x192xf32>
    %42 = vector.extract_strided_slice %35 {offsets = [0, 192], sizes = [8, 64], strides = [1, 1]} : vector<8x256xf32> to vector<8x64xf32>
    %43 = math.tanh %42 : vector<8x64xf32>
    %44 = vector.extract_strided_slice %41 {offsets = [0, 0], sizes = [8, 64], strides = [1, 1]} : vector<8x192xf32> to vector<8x64xf32>
    %45 = vector.extract_strided_slice %41 {offsets = [0, 64], sizes = [8, 64], strides = [1, 1]} : vector<8x192xf32> to vector<8x64xf32>
    %46 = vector.extract_strided_slice %41 {offsets = [0, 128], sizes = [8, 64], strides = [1, 1]} : vector<8x192xf32> to vector<8x64xf32>
    %47 = arith.mulf %45, %17 : vector<8x64xf32>
    %48 = arith.mulf %44, %43 : vector<8x64xf32>
    %49 = arith.addf %47, %48 : vector<8x64xf32>
    %50 = math.tanh %49 : vector<8x64xf32>
    %51 = arith.mulf %46, %50 : vector<8x64xf32>
    %52 = vector.extract_strided_slice %51 {offsets = [0, 0], sizes = [8, 32], strides = [1, 1]} : vector<8x64xf32> to vector<8x32xf32>
    %53 = arith.index_cast %c0_i32 : i32 to index
    %c0_24 = arith.constant 0 : index
    %c0_25 = arith.constant 0 : index
    %54 = vector.load %arg9[%53, %c0_24, %c0_25] : memref<8x8x64xf32, #tpu.memory_space<vmem>>, vector<1x8x32xf32>
    %55 = vector.shape_cast %54 : vector<1x8x32xf32> to vector<8x32xf32>
    %56 = vector.shape_cast %52 : vector<8x32xf32> to vector<1x8x32xf32>
    tpu.vector_store %arg9[%53, %c0_24, %c0_25], %56 {strides = array<i32>} : memref<8x8x64xf32, #tpu.memory_space<vmem>>, vector<1x8x32xf32>,
    %57 = vector.extract_strided_slice %51 {offsets = [0, 32], sizes = [8, 32], strides = [1, 1]} : vector<8x64xf32> to vector<8x32xf32>
    %58 = arith.index_cast %18 : i32 to index
    %c0_26 = arith.constant 0 : index
    %c32 = arith.constant 32 : index
    %59 = vector.load %arg9[%58, %c0_26, %c32] : memref<8x8x64xf32, #tpu.memory_space<vmem>>, vector<1x8x32xf32>
    %60 = vector.shape_cast %59 : vector<1x8x32xf32> to vector<8x32xf32>
    %61 = vector.shape_cast %57 : vector<8x32xf32> to vector<1x8x32xf32>
    tpu.vector_store %arg9[%58, %c0_26, %c32], %61 {strides = array<i32>} : memref<8x8x64xf32, #tpu.memory_space<vmem>>, vector<1x8x32xf32>,
    %c1_i32 = arith.constant 1 : i32
    %c7_i32_27 = arith.constant 7 : i32
    %62 = arith.subi %c7_i32_27, %c1_i32 : i32
    %c0_28 = arith.constant 0 : index
    %63 = arith.index_cast %c1_i32 : i32 to index
    %c0_29 = arith.constant 0 : index
    %c0_30 = arith.constant 0 : index
    %64 = vector.load %arg8[%c0_28, %63, %c0_29, %c0_30] : memref<2x8x8x128xf32, #tpu.memory_space<vmem>>, vector<1x1x8x128xf32>
    %65 = vector.shape_cast %64 : vector<1x1x8x128xf32> to vector<8x128xf32>
    %c1_31 = arith.constant 1 : index
    %66 = arith.index_cast %62 : i32 to index
    %c0_32 = arith.constant 0 : index
    %c0_33 = arith.constant 0 : index
    %67 = vector.load %arg8[%c1_31, %66, %c0_32, %c0_33] : memref<2x8x8x128xf32, #tpu.memory_space<vmem>>, vector<1x1x8x128xf32>
    %68 = vector.shape_cast %67 : vector<1x1x8x128xf32> to vector<8x128xf32>
    %cst_34 = arith.constant dense<0.000000e+00> : vector<8x256xf32>
    %69 = tpu.matmul %51, %16, %cst_34 {dimension_numbers = #tpu.dot_dimension_numbers<[1], [0], [0], [1], [0, 0, 1, 1], [], []>} : vector<8x64xf32>, vector<64x256xf32>, vector<8x256xf32> -> vector<8x256xf32>
    %70 = vector.extract_strided_slice %65 {offsets = [0, 0], sizes = [8, 32], strides = [1, 1]} : vector<8x128xf32> to vector<8x32xf32>
    %71 = vector.extract_strided_slice %68 {offsets = [0, 0], sizes = [8, 32], strides = [1, 1]} : vector<8x128xf32> to vector<8x32xf32>
    %72 = vector.extract_strided_slice %65 {offsets = [0, 32], sizes = [8, 32], strides = [1, 1]} : vector<8x128xf32> to vector<8x32xf32>
    %73 = vector.extract_strided_slice %68 {offsets = [0, 32], sizes = [8, 32], strides = [1, 1]} : vector<8x128xf32> to vector<8x32xf32>
    %74 = vector.extract_strided_slice %65 {offsets = [0, 64], sizes = [8, 32], strides = [1, 1]} : vector<8x128xf32> to vector<8x32xf32>
    %75 = vector.extract_strided_slice %68 {offsets = [0, 64], sizes = [8, 32], strides = [1, 1]} : vector<8x128xf32> to vector<8x32xf32>
    %76 = vector.extract_strided_slice %65 {offsets = [0, 96], sizes = [8, 32], strides = [1, 1]} : vector<8x128xf32> to vector<8x32xf32>
    %77 = vector.extract_strided_slice %68 {offsets = [0, 96], sizes = [8, 32], strides = [1, 1]} : vector<8x128xf32> to vector<8x32xf32>
    %78 = tpu.concatenate %70, %71, %72, %73, %74, %75, %76, %77 in 1 : vector<8x32xf32>, vector<8x32xf32>, vector<8x32xf32>, vector<8x32xf32>, vector<8x32xf32>, vector<8x32xf32>, vector<8x32xf32>, vector<8x32xf32> -> vector<8x256xf32>
    %79 = arith.addf %69, %78 : vector<8x256xf32>
    %80 = vector.extract_strided_slice %79 {offsets = [0, 0], sizes = [8, 192], strides = [1, 1]} : vector<8x256xf32> to vector<8x192xf32>
    %81 = arith.negf %80 : vector<8x192xf32>
    %82 = math.exp %81 : vector<8x192xf32>
    %cst_35 = arith.constant 1.000000e+00 : f32
    %83 = vector.broadcast %cst_35 : f32 to vector<8x192xf32>
    %84 = arith.addf %83, %82 : vector<8x192xf32>
    %85 = arith.divf %83, %84 : vector<8x192xf32>
    %86 = vector.extract_strided_slice %79 {offsets = [0, 192], sizes = [8, 64], strides = [1, 1]} : vector<8x256xf32> to vector<8x64xf32>
    %87 = math.tanh %86 : vector<8x64xf32>
    %88 = vector.extract_strided_slice %85 {offsets = [0, 0], sizes = [8, 64], strides = [1, 1]} : vector<8x192xf32> to vector<8x64xf32>
    %89 = vector.extract_strided_slice %85 {offsets = [0, 64], sizes = [8, 64], strides = [1, 1]} : vector<8x192xf32> to vector<8x64xf32>
    %90 = vector.extract_strided_slice %85 {offsets = [0, 128], sizes = [8, 64], strides = [1, 1]} : vector<8x192xf32> to vector<8x64xf32>
    %91 = arith.mulf %89, %49 : vector<8x64xf32>
    %92 = arith.mulf %88, %87 : vector<8x64xf32>
    %93 = arith.addf %91, %92 : vector<8x64xf32>
    %94 = math.tanh %93 : vector<8x64xf32>
    %95 = arith.mulf %90, %94 : vector<8x64xf32>
    %96 = vector.extract_strided_slice %95 {offsets = [0, 0], sizes = [8, 32], strides = [1, 1]} : vector<8x64xf32> to vector<8x32xf32>
    %97 = arith.index_cast %c1_i32 : i32 to index
    %c0_36 = arith.constant 0 : index
    %c0_37 = arith.constant 0 : index
    %98 = vector.load %arg9[%97, %c0_36, %c0_37] : memref<8x8x64xf32, #tpu.memory_space<vmem>>, vector<1x8x32xf32>
    %99 = vector.shape_cast %98 : vector<1x8x32xf32> to vector<8x32xf32>
    %100 = vector.shape_cast %96 : vector<8x32xf32> to vector<1x8x32xf32>
    tpu.vector_store %arg9[%97, %c0_36, %c0_37], %100 {strides = array<i32>} : memref<8x8x64xf32, #tpu.memory_space<vmem>>, vector<1x8x32xf32>,
    %101 = vector.extract_strided_slice %95 {offsets = [0, 32], sizes = [8, 32], strides = [1, 1]} : vector<8x64xf32> to vector<8x32xf32>
    %102 = arith.index_cast %62 : i32 to index
    %c0_38 = arith.constant 0 : index
    %c32_39 = arith.constant 32 : index
    %103 = vector.load %arg9[%102, %c0_38, %c32_39] : memref<8x8x64xf32, #tpu.memory_space<vmem>>, vector<1x8x32xf32>
    %104 = vector.shape_cast %103 : vector<1x8x32xf32> to vector<8x32xf32>
    %105 = vector.shape_cast %101 : vector<8x32xf32> to vector<1x8x32xf32>
    tpu.vector_store %arg9[%102, %c0_38, %c32_39], %105 {strides = array<i32>} : memref<8x8x64xf32, #tpu.memory_space<vmem>>, vector<1x8x32xf32>,
    %c2_i32 = arith.constant 2 : i32
    %c7_i32_40 = arith.constant 7 : i32
    %106 = arith.subi %c7_i32_40, %c2_i32 : i32
    %c0_41 = arith.constant 0 : index
    %107 = arith.index_cast %c2_i32 : i32 to index
    %c0_42 = arith.constant 0 : index
    %c0_43 = arith.constant 0 : index
    %108 = vector.load %arg8[%c0_41, %107, %c0_42, %c0_43] : memref<2x8x8x128xf32, #tpu.memory_space<vmem>>, vector<1x1x8x128xf32>
    %109 = vector.shape_cast %108 : vector<1x1x8x128xf32> to vector<8x128xf32>
    %c1_44 = arith.constant 1 : index
    %110 = arith.index_cast %106 : i32 to index
    %c0_45 = arith.constant 0 : index
    %c0_46 = arith.constant 0 : index
    %111 = vector.load %arg8[%c1_44, %110, %c0_45, %c0_46] : memref<2x8x8x128xf32, #tpu.memory_space<vmem>>, vector<1x1x8x128xf32>
    %112 = vector.shape_cast %111 : vector<1x1x8x128xf32> to vector<8x128xf32>
    %cst_47 = arith.constant dense<0.000000e+00> : vector<8x256xf32>
    %113 = tpu.matmul %95, %16, %cst_47 {dimension_numbers = #tpu.dot_dimension_numbers<[1], [0], [0], [1], [0, 0, 1, 1], [], []>} : vector<8x64xf32>, vector<64x256xf32>, vector<8x256xf32> -> vector<8x256xf32>
    %114 = vector.extract_strided_slice %109 {offsets = [0, 0], sizes = [8, 32], strides = [1, 1]} : vector<8x128xf32> to vector<8x32xf32>
    %115 = vector.extract_strided_slice %112 {offsets = [0, 0], sizes = [8, 32], strides = [1, 1]} : vector<8x128xf32> to vector<8x32xf32>
    %116 = vector.extract_strided_slice %109 {offsets = [0, 32], sizes = [8, 32], strides = [1, 1]} : vector<8x128xf32> to vector<8x32xf32>
    %117 = vector.extract_strided_slice %112 {offsets = [0, 32], sizes = [8, 32], strides = [1, 1]} : vector<8x128xf32> to vector<8x32xf32>
    %118 = vector.extract_strided_slice %109 {offsets = [0, 64], sizes = [8, 32], strides = [1, 1]} : vector<8x128xf32> to vector<8x32xf32>
    %119 = vector.extract_strided_slice %112 {offsets = [0, 64], sizes = [8, 32], strides = [1, 1]} : vector<8x128xf32> to vector<8x32xf32>
    %120 = vector.extract_strided_slice %109 {offsets = [0, 96], sizes = [8, 32], strides = [1, 1]} : vector<8x128xf32> to vector<8x32xf32>
    %121 = vector.extract_strided_slice %112 {offsets = [0, 96], sizes = [8, 32], strides = [1, 1]} : vector<8x128xf32> to vector<8x32xf32>
    %122 = tpu.concatenate %114, %115, %116, %117, %118, %119, %120, %121 in 1 : vector<8x32xf32>, vector<8x32xf32>, vector<8x32xf32>, vector<8x32xf32>, vector<8x32xf32>, vector<8x32xf32>, vector<8x32xf32>, vector<8x32xf32> -> vector<8x256xf32>
    %123 = arith.addf %113, %122 : vector<8x256xf32>
    %124 = vector.extract_strided_slice %123 {offsets = [0, 0], sizes = [8, 192], strides = [1, 1]} : vector<8x256xf32> to vector<8x192xf32>
    %125 = arith.negf %124 : vector<8x192xf32>
    %126 = math.exp %125 : vector<8x192xf32>
    %cst_48 = arith.constant 1.000000e+00 : f32
    %127 = vector.broadcast %cst_48 : f32 to vector<8x192xf32>
    %128 = arith.addf %127, %126 : vector<8x192xf32>
    %129 = arith.divf %127, %128 : vector<8x192xf32>
    %130 = vector.extract_strided_slice %123 {offsets = [0, 192], sizes = [8, 64], strides = [1, 1]} : vector<8x256xf32> to vector<8x64xf32>
    %131 = math.tanh %130 : vector<8x64xf32>
    %132 = vector.extract_strided_slice %129 {offsets = [0, 0], sizes = [8, 64], strides = [1, 1]} : vector<8x192xf32> to vector<8x64xf32>
    %133 = vector.extract_strided_slice %129 {offsets = [0, 64], sizes = [8, 64], strides = [1, 1]} : vector<8x192xf32> to vector<8x64xf32>
    %134 = vector.extract_strided_slice %129 {offsets = [0, 128], sizes = [8, 64], strides = [1, 1]} : vector<8x192xf32> to vector<8x64xf32>
    %135 = arith.mulf %133, %93 : vector<8x64xf32>
    %136 = arith.mulf %132, %131 : vector<8x64xf32>
    %137 = arith.addf %135, %136 : vector<8x64xf32>
    %138 = math.tanh %137 : vector<8x64xf32>
    %139 = arith.mulf %134, %138 : vector<8x64xf32>
    %140 = vector.extract_strided_slice %139 {offsets = [0, 0], sizes = [8, 32], strides = [1, 1]} : vector<8x64xf32> to vector<8x32xf32>
    %141 = arith.index_cast %c2_i32 : i32 to index
    %c0_49 = arith.constant 0 : index
    %c0_50 = arith.constant 0 : index
    %142 = vector.load %arg9[%141, %c0_49, %c0_50] : memref<8x8x64xf32, #tpu.memory_space<vmem>>, vector<1x8x32xf32>
    %143 = vector.shape_cast %142 : vector<1x8x32xf32> to vector<8x32xf32>
    %144 = vector.shape_cast %140 : vector<8x32xf32> to vector<1x8x32xf32>
    tpu.vector_store %arg9[%141, %c0_49, %c0_50], %144 {strides = array<i32>} : memref<8x8x64xf32, #tpu.memory_space<vmem>>, vector<1x8x32xf32>,
    %145 = vector.extract_strided_slice %139 {offsets = [0, 32], sizes = [8, 32], strides = [1, 1]} : vector<8x64xf32> to vector<8x32xf32>
    %146 = arith.index_cast %106 : i32 to index
    %c0_51 = arith.constant 0 : index
    %c32_52 = arith.constant 32 : index
    %147 = vector.load %arg9[%146, %c0_51, %c32_52] : memref<8x8x64xf32, #tpu.memory_space<vmem>>, vector<1x8x32xf32>
    %148 = vector.shape_cast %147 : vector<1x8x32xf32> to vector<8x32xf32>
    %149 = vector.shape_cast %145 : vector<8x32xf32> to vector<1x8x32xf32>
    tpu.vector_store %arg9[%146, %c0_51, %c32_52], %149 {strides = array<i32>} : memref<8x8x64xf32, #tpu.memory_space<vmem>>, vector<1x8x32xf32>,
    %c3_i32 = arith.constant 3 : i32
    %c7_i32_53 = arith.constant 7 : i32
    %150 = arith.subi %c7_i32_53, %c3_i32 : i32
    %c0_54 = arith.constant 0 : index
    %151 = arith.index_cast %c3_i32 : i32 to index
    %c0_55 = arith.constant 0 : index
    %c0_56 = arith.constant 0 : index
    %152 = vector.load %arg8[%c0_54, %151, %c0_55, %c0_56] : memref<2x8x8x128xf32, #tpu.memory_space<vmem>>, vector<1x1x8x128xf32>
    %153 = vector.shape_cast %152 : vector<1x1x8x128xf32> to vector<8x128xf32>
    %c1_57 = arith.constant 1 : index
    %154 = arith.index_cast %150 : i32 to index
    %c0_58 = arith.constant 0 : index
    %c0_59 = arith.constant 0 : index
    %155 = vector.load %arg8[%c1_57, %154, %c0_58, %c0_59] : memref<2x8x8x128xf32, #tpu.memory_space<vmem>>, vector<1x1x8x128xf32>
    %156 = vector.shape_cast %155 : vector<1x1x8x128xf32> to vector<8x128xf32>
    %cst_60 = arith.constant dense<0.000000e+00> : vector<8x256xf32>
    %157 = tpu.matmul %139, %16, %cst_60 {dimension_numbers = #tpu.dot_dimension_numbers<[1], [0], [0], [1], [0, 0, 1, 1], [], []>} : vector<8x64xf32>, vector<64x256xf32>, vector<8x256xf32> -> vector<8x256xf32>
    %158 = vector.extract_strided_slice %153 {offsets = [0, 0], sizes = [8, 32], strides = [1, 1]} : vector<8x128xf32> to vector<8x32xf32>
    %159 = vector.extract_strided_slice %156 {offsets = [0, 0], sizes = [8, 32], strides = [1, 1]} : vector<8x128xf32> to vector<8x32xf32>
    %160 = vector.extract_strided_slice %153 {offsets = [0, 32], sizes = [8, 32], strides = [1, 1]} : vector<8x128xf32> to vector<8x32xf32>
    %161 = vector.extract_strided_slice %156 {offsets = [0, 32], sizes = [8, 32], strides = [1, 1]} : vector<8x128xf32> to vector<8x32xf32>
    %162 = vector.extract_strided_slice %153 {offsets = [0, 64], sizes = [8, 32], strides = [1, 1]} : vector<8x128xf32> to vector<8x32xf32>
    %163 = vector.extract_strided_slice %156 {offsets = [0, 64], sizes = [8, 32], strides = [1, 1]} : vector<8x128xf32> to vector<8x32xf32>
    %164 = vector.extract_strided_slice %153 {offsets = [0, 96], sizes = [8, 32], strides = [1, 1]} : vector<8x128xf32> to vector<8x32xf32>
    %165 = vector.extract_strided_slice %156 {offsets = [0, 96], sizes = [8, 32], strides = [1, 1]} : vector<8x128xf32> to vector<8x32xf32>
    %166 = tpu.concatenate %158, %159, %160, %161, %162, %163, %164, %165 in 1 : vector<8x32xf32>, vector<8x32xf32>, vector<8x32xf32>, vector<8x32xf32>, vector<8x32xf32>, vector<8x32xf32>, vector<8x32xf32>, vector<8x32xf32> -> vector<8x256xf32>
    %167 = arith.addf %157, %166 : vector<8x256xf32>
    %168 = vector.extract_strided_slice %167 {offsets = [0, 0], sizes = [8, 192], strides = [1, 1]} : vector<8x256xf32> to vector<8x192xf32>
    %169 = arith.negf %168 : vector<8x192xf32>
    %170 = math.exp %169 : vector<8x192xf32>
    %cst_61 = arith.constant 1.000000e+00 : f32
    %171 = vector.broadcast %cst_61 : f32 to vector<8x192xf32>
    %172 = arith.addf %171, %170 : vector<8x192xf32>
    %173 = arith.divf %171, %172 : vector<8x192xf32>
    %174 = vector.extract_strided_slice %167 {offsets = [0, 192], sizes = [8, 64], strides = [1, 1]} : vector<8x256xf32> to vector<8x64xf32>
    %175 = math.tanh %174 : vector<8x64xf32>
    %176 = vector.extract_strided_slice %173 {offsets = [0, 0], sizes = [8, 64], strides = [1, 1]} : vector<8x192xf32> to vector<8x64xf32>
    %177 = vector.extract_strided_slice %173 {offsets = [0, 64], sizes = [8, 64], strides = [1, 1]} : vector<8x192xf32> to vector<8x64xf32>
    %178 = vector.extract_strided_slice %173 {offsets = [0, 128], sizes = [8, 64], strides = [1, 1]} : vector<8x192xf32> to vector<8x64xf32>
    %179 = arith.mulf %177, %137 : vector<8x64xf32>
    %180 = arith.mulf %176, %175 : vector<8x64xf32>
    %181 = arith.addf %179, %180 : vector<8x64xf32>
    %182 = math.tanh %181 : vector<8x64xf32>
    %183 = arith.mulf %178, %182 : vector<8x64xf32>
    %184 = vector.extract_strided_slice %183 {offsets = [0, 0], sizes = [8, 32], strides = [1, 1]} : vector<8x64xf32> to vector<8x32xf32>
    %185 = arith.index_cast %c3_i32 : i32 to index
    %c0_62 = arith.constant 0 : index
    %c0_63 = arith.constant 0 : index
    %186 = vector.load %arg9[%185, %c0_62, %c0_63] : memref<8x8x64xf32, #tpu.memory_space<vmem>>, vector<1x8x32xf32>
    %187 = vector.shape_cast %186 : vector<1x8x32xf32> to vector<8x32xf32>
    %188 = vector.shape_cast %184 : vector<8x32xf32> to vector<1x8x32xf32>
    tpu.vector_store %arg9[%185, %c0_62, %c0_63], %188 {strides = array<i32>} : memref<8x8x64xf32, #tpu.memory_space<vmem>>, vector<1x8x32xf32>,
    %189 = vector.extract_strided_slice %183 {offsets = [0, 32], sizes = [8, 32], strides = [1, 1]} : vector<8x64xf32> to vector<8x32xf32>
    %190 = arith.index_cast %150 : i32 to index
    %c0_64 = arith.constant 0 : index
    %c32_65 = arith.constant 32 : index
    %191 = vector.load %arg9[%190, %c0_64, %c32_65] : memref<8x8x64xf32, #tpu.memory_space<vmem>>, vector<1x8x32xf32>
    %192 = vector.shape_cast %191 : vector<1x8x32xf32> to vector<8x32xf32>
    %193 = vector.shape_cast %189 : vector<8x32xf32> to vector<1x8x32xf32>
    tpu.vector_store %arg9[%190, %c0_64, %c32_65], %193 {strides = array<i32>} : memref<8x8x64xf32, #tpu.memory_space<vmem>>, vector<1x8x32xf32>,
    %c4_i32 = arith.constant 4 : i32
    %c7_i32_66 = arith.constant 7 : i32
    %194 = arith.subi %c7_i32_66, %c4_i32 : i32
    %c0_67 = arith.constant 0 : index
    %195 = arith.index_cast %c4_i32 : i32 to index
    %c0_68 = arith.constant 0 : index
    %c0_69 = arith.constant 0 : index
    %196 = vector.load %arg8[%c0_67, %195, %c0_68, %c0_69] : memref<2x8x8x128xf32, #tpu.memory_space<vmem>>, vector<1x1x8x128xf32>
    %197 = vector.shape_cast %196 : vector<1x1x8x128xf32> to vector<8x128xf32>
    %c1_70 = arith.constant 1 : index
    %198 = arith.index_cast %194 : i32 to index
    %c0_71 = arith.constant 0 : index
    %c0_72 = arith.constant 0 : index
    %199 = vector.load %arg8[%c1_70, %198, %c0_71, %c0_72] : memref<2x8x8x128xf32, #tpu.memory_space<vmem>>, vector<1x1x8x128xf32>
    %200 = vector.shape_cast %199 : vector<1x1x8x128xf32> to vector<8x128xf32>
    %cst_73 = arith.constant dense<0.000000e+00> : vector<8x256xf32>
    %201 = tpu.matmul %183, %16, %cst_73 {dimension_numbers = #tpu.dot_dimension_numbers<[1], [0], [0], [1], [0, 0, 1, 1], [], []>} : vector<8x64xf32>, vector<64x256xf32>, vector<8x256xf32> -> vector<8x256xf32>
    %202 = vector.extract_strided_slice %197 {offsets = [0, 0], sizes = [8, 32], strides = [1, 1]} : vector<8x128xf32> to vector<8x32xf32>
    %203 = vector.extract_strided_slice %200 {offsets = [0, 0], sizes = [8, 32], strides = [1, 1]} : vector<8x128xf32> to vector<8x32xf32>
    %204 = vector.extract_strided_slice %197 {offsets = [0, 32], sizes = [8, 32], strides = [1, 1]} : vector<8x128xf32> to vector<8x32xf32>
    %205 = vector.extract_strided_slice %200 {offsets = [0, 32], sizes = [8, 32], strides = [1, 1]} : vector<8x128xf32> to vector<8x32xf32>
    %206 = vector.extract_strided_slice %197 {offsets = [0, 64], sizes = [8, 32], strides = [1, 1]} : vector<8x128xf32> to vector<8x32xf32>
    %207 = vector.extract_strided_slice %200 {offsets = [0, 64], sizes = [8, 32], strides = [1, 1]} : vector<8x128xf32> to vector<8x32xf32>
    %208 = vector.extract_strided_slice %197 {offsets = [0, 96], sizes = [8, 32], strides = [1, 1]} : vector<8x128xf32> to vector<8x32xf32>
    %209 = vector.extract_strided_slice %200 {offsets = [0, 96], sizes = [8, 32], strides = [1, 1]} : vector<8x128xf32> to vector<8x32xf32>
    %210 = tpu.concatenate %202, %203, %204, %205, %206, %207, %208, %209 in 1 : vector<8x32xf32>, vector<8x32xf32>, vector<8x32xf32>, vector<8x32xf32>, vector<8x32xf32>, vector<8x32xf32>, vector<8x32xf32>, vector<8x32xf32> -> vector<8x256xf32>
    %211 = arith.addf %201, %210 : vector<8x256xf32>
    %212 = vector.extract_strided_slice %211 {offsets = [0, 0], sizes = [8, 192], strides = [1, 1]} : vector<8x256xf32> to vector<8x192xf32>
    %213 = arith.negf %212 : vector<8x192xf32>
    %214 = math.exp %213 : vector<8x192xf32>
    %cst_74 = arith.constant 1.000000e+00 : f32
    %215 = vector.broadcast %cst_74 : f32 to vector<8x192xf32>
    %216 = arith.addf %215, %214 : vector<8x192xf32>
    %217 = arith.divf %215, %216 : vector<8x192xf32>
    %218 = vector.extract_strided_slice %211 {offsets = [0, 192], sizes = [8, 64], strides = [1, 1]} : vector<8x256xf32> to vector<8x64xf32>
    %219 = math.tanh %218 : vector<8x64xf32>
    %220 = vector.extract_strided_slice %217 {offsets = [0, 0], sizes = [8, 64], strides = [1, 1]} : vector<8x192xf32> to vector<8x64xf32>
    %221 = vector.extract_strided_slice %217 {offsets = [0, 64], sizes = [8, 64], strides = [1, 1]} : vector<8x192xf32> to vector<8x64xf32>
    %222 = vector.extract_strided_slice %217 {offsets = [0, 128], sizes = [8, 64], strides = [1, 1]} : vector<8x192xf32> to vector<8x64xf32>
    %223 = arith.mulf %221, %181 : vector<8x64xf32>
    %224 = arith.mulf %220, %219 : vector<8x64xf32>
    %225 = arith.addf %223, %224 : vector<8x64xf32>
    %226 = math.tanh %225 : vector<8x64xf32>
    %227 = arith.mulf %222, %226 : vector<8x64xf32>
    %228 = vector.extract_strided_slice %227 {offsets = [0, 0], sizes = [8, 32], strides = [1, 1]} : vector<8x64xf32> to vector<8x32xf32>
    %229 = arith.index_cast %c4_i32 : i32 to index
    %c0_75 = arith.constant 0 : index
    %c0_76 = arith.constant 0 : index
    %230 = vector.load %arg9[%229, %c0_75, %c0_76] : memref<8x8x64xf32, #tpu.memory_space<vmem>>, vector<1x8x32xf32>
    %231 = vector.shape_cast %230 : vector<1x8x32xf32> to vector<8x32xf32>
    %232 = vector.shape_cast %228 : vector<8x32xf32> to vector<1x8x32xf32>
    tpu.vector_store %arg9[%229, %c0_75, %c0_76], %232 {strides = array<i32>} : memref<8x8x64xf32, #tpu.memory_space<vmem>>, vector<1x8x32xf32>,
    %233 = vector.extract_strided_slice %227 {offsets = [0, 32], sizes = [8, 32], strides = [1, 1]} : vector<8x64xf32> to vector<8x32xf32>
    %234 = arith.index_cast %194 : i32 to index
    %c0_77 = arith.constant 0 : index
    %c32_78 = arith.constant 32 : index
    %235 = vector.load %arg9[%234, %c0_77, %c32_78] : memref<8x8x64xf32, #tpu.memory_space<vmem>>, vector<1x8x32xf32>
    %236 = vector.shape_cast %235 : vector<1x8x32xf32> to vector<8x32xf32>
    %237 = vector.shape_cast %233 : vector<8x32xf32> to vector<1x8x32xf32>
    tpu.vector_store %arg9[%234, %c0_77, %c32_78], %237 {strides = array<i32>} : memref<8x8x64xf32, #tpu.memory_space<vmem>>, vector<1x8x32xf32>,
    %c5_i32 = arith.constant 5 : i32
    %c7_i32_79 = arith.constant 7 : i32
    %238 = arith.subi %c7_i32_79, %c5_i32 : i32
    %c0_80 = arith.constant 0 : index
    %239 = arith.index_cast %c5_i32 : i32 to index
    %c0_81 = arith.constant 0 : index
    %c0_82 = arith.constant 0 : index
    %240 = vector.load %arg8[%c0_80, %239, %c0_81, %c0_82] : memref<2x8x8x128xf32, #tpu.memory_space<vmem>>, vector<1x1x8x128xf32>
    %241 = vector.shape_cast %240 : vector<1x1x8x128xf32> to vector<8x128xf32>
    %c1_83 = arith.constant 1 : index
    %242 = arith.index_cast %238 : i32 to index
    %c0_84 = arith.constant 0 : index
    %c0_85 = arith.constant 0 : index
    %243 = vector.load %arg8[%c1_83, %242, %c0_84, %c0_85] : memref<2x8x8x128xf32, #tpu.memory_space<vmem>>, vector<1x1x8x128xf32>
    %244 = vector.shape_cast %243 : vector<1x1x8x128xf32> to vector<8x128xf32>
    %cst_86 = arith.constant dense<0.000000e+00> : vector<8x256xf32>
    %245 = tpu.matmul %227, %16, %cst_86 {dimension_numbers = #tpu.dot_dimension_numbers<[1], [0], [0], [1], [0, 0, 1, 1], [], []>} : vector<8x64xf32>, vector<64x256xf32>, vector<8x256xf32> -> vector<8x256xf32>
    %246 = vector.extract_strided_slice %241 {offsets = [0, 0], sizes = [8, 32], strides = [1, 1]} : vector<8x128xf32> to vector<8x32xf32>
    %247 = vector.extract_strided_slice %244 {offsets = [0, 0], sizes = [8, 32], strides = [1, 1]} : vector<8x128xf32> to vector<8x32xf32>
    %248 = vector.extract_strided_slice %241 {offsets = [0, 32], sizes = [8, 32], strides = [1, 1]} : vector<8x128xf32> to vector<8x32xf32>
    %249 = vector.extract_strided_slice %244 {offsets = [0, 32], sizes = [8, 32], strides = [1, 1]} : vector<8x128xf32> to vector<8x32xf32>
    %250 = vector.extract_strided_slice %241 {offsets = [0, 64], sizes = [8, 32], strides = [1, 1]} : vector<8x128xf32> to vector<8x32xf32>
    %251 = vector.extract_strided_slice %244 {offsets = [0, 64], sizes = [8, 32], strides = [1, 1]} : vector<8x128xf32> to vector<8x32xf32>
    %252 = vector.extract_strided_slice %241 {offsets = [0, 96], sizes = [8, 32], strides = [1, 1]} : vector<8x128xf32> to vector<8x32xf32>
    %253 = vector.extract_strided_slice %244 {offsets = [0, 96], sizes = [8, 32], strides = [1, 1]} : vector<8x128xf32> to vector<8x32xf32>
    %254 = tpu.concatenate %246, %247, %248, %249, %250, %251, %252, %253 in 1 : vector<8x32xf32>, vector<8x32xf32>, vector<8x32xf32>, vector<8x32xf32>, vector<8x32xf32>, vector<8x32xf32>, vector<8x32xf32>, vector<8x32xf32> -> vector<8x256xf32>
    %255 = arith.addf %245, %254 : vector<8x256xf32>
    %256 = vector.extract_strided_slice %255 {offsets = [0, 0], sizes = [8, 192], strides = [1, 1]} : vector<8x256xf32> to vector<8x192xf32>
    %257 = arith.negf %256 : vector<8x192xf32>
    %258 = math.exp %257 : vector<8x192xf32>
    %cst_87 = arith.constant 1.000000e+00 : f32
    %259 = vector.broadcast %cst_87 : f32 to vector<8x192xf32>
    %260 = arith.addf %259, %258 : vector<8x192xf32>
    %261 = arith.divf %259, %260 : vector<8x192xf32>
    %262 = vector.extract_strided_slice %255 {offsets = [0, 192], sizes = [8, 64], strides = [1, 1]} : vector<8x256xf32> to vector<8x64xf32>
    %263 = math.tanh %262 : vector<8x64xf32>
    %264 = vector.extract_strided_slice %261 {offsets = [0, 0], sizes = [8, 64], strides = [1, 1]} : vector<8x192xf32> to vector<8x64xf32>
    %265 = vector.extract_strided_slice %261 {offsets = [0, 64], sizes = [8, 64], strides = [1, 1]} : vector<8x192xf32> to vector<8x64xf32>
    %266 = vector.extract_strided_slice %261 {offsets = [0, 128], sizes = [8, 64], strides = [1, 1]} : vector<8x192xf32> to vector<8x64xf32>
    %267 = arith.mulf %265, %225 : vector<8x64xf32>
    %268 = arith.mulf %264, %263 : vector<8x64xf32>
    %269 = arith.addf %267, %268 : vector<8x64xf32>
    %270 = math.tanh %269 : vector<8x64xf32>
    %271 = arith.mulf %266, %270 : vector<8x64xf32>
    %272 = vector.extract_strided_slice %271 {offsets = [0, 0], sizes = [8, 32], strides = [1, 1]} : vector<8x64xf32> to vector<8x32xf32>
    %273 = arith.index_cast %c5_i32 : i32 to index
    %c0_88 = arith.constant 0 : index
    %c0_89 = arith.constant 0 : index
    %274 = vector.load %arg9[%273, %c0_88, %c0_89] : memref<8x8x64xf32, #tpu.memory_space<vmem>>, vector<1x8x32xf32>
    %275 = vector.shape_cast %274 : vector<1x8x32xf32> to vector<8x32xf32>
    %276 = vector.shape_cast %272 : vector<8x32xf32> to vector<1x8x32xf32>
    tpu.vector_store %arg9[%273, %c0_88, %c0_89], %276 {strides = array<i32>} : memref<8x8x64xf32, #tpu.memory_space<vmem>>, vector<1x8x32xf32>,
    %277 = vector.extract_strided_slice %271 {offsets = [0, 32], sizes = [8, 32], strides = [1, 1]} : vector<8x64xf32> to vector<8x32xf32>
    %278 = arith.index_cast %238 : i32 to index
    %c0_90 = arith.constant 0 : index
    %c32_91 = arith.constant 32 : index
    %279 = vector.load %arg9[%278, %c0_90, %c32_91] : memref<8x8x64xf32, #tpu.memory_space<vmem>>, vector<1x8x32xf32>
    %280 = vector.shape_cast %279 : vector<1x8x32xf32> to vector<8x32xf32>
    %281 = vector.shape_cast %277 : vector<8x32xf32> to vector<1x8x32xf32>
    tpu.vector_store %arg9[%278, %c0_90, %c32_91], %281 {strides = array<i32>} : memref<8x8x64xf32, #tpu.memory_space<vmem>>, vector<1x8x32xf32>,
    %c6_i32 = arith.constant 6 : i32
    %c7_i32_92 = arith.constant 7 : i32
    %282 = arith.subi %c7_i32_92, %c6_i32 : i32
    %c0_93 = arith.constant 0 : index
    %283 = arith.index_cast %c6_i32 : i32 to index
    %c0_94 = arith.constant 0 : index
    %c0_95 = arith.constant 0 : index
    %284 = vector.load %arg8[%c0_93, %283, %c0_94, %c0_95] : memref<2x8x8x128xf32, #tpu.memory_space<vmem>>, vector<1x1x8x128xf32>
    %285 = vector.shape_cast %284 : vector<1x1x8x128xf32> to vector<8x128xf32>
    %c1_96 = arith.constant 1 : index
    %286 = arith.index_cast %282 : i32 to index
    %c0_97 = arith.constant 0 : index
    %c0_98 = arith.constant 0 : index
    %287 = vector.load %arg8[%c1_96, %286, %c0_97, %c0_98] : memref<2x8x8x128xf32, #tpu.memory_space<vmem>>, vector<1x1x8x128xf32>
    %288 = vector.shape_cast %287 : vector<1x1x8x128xf32> to vector<8x128xf32>
    %cst_99 = arith.constant dense<0.000000e+00> : vector<8x256xf32>
    %289 = tpu.matmul %271, %16, %cst_99 {dimension_numbers = #tpu.dot_dimension_numbers<[1], [0], [0], [1], [0, 0, 1, 1], [], []>} : vector<8x64xf32>, vector<64x256xf32>, vector<8x256xf32> -> vector<8x256xf32>
    %290 = vector.extract_strided_slice %285 {offsets = [0, 0], sizes = [8, 32], strides = [1, 1]} : vector<8x128xf32> to vector<8x32xf32>
    %291 = vector.extract_strided_slice %288 {offsets = [0, 0], sizes = [8, 32], strides = [1, 1]} : vector<8x128xf32> to vector<8x32xf32>
    %292 = vector.extract_strided_slice %285 {offsets = [0, 32], sizes = [8, 32], strides = [1, 1]} : vector<8x128xf32> to vector<8x32xf32>
    %293 = vector.extract_strided_slice %288 {offsets = [0, 32], sizes = [8, 32], strides = [1, 1]} : vector<8x128xf32> to vector<8x32xf32>
    %294 = vector.extract_strided_slice %285 {offsets = [0, 64], sizes = [8, 32], strides = [1, 1]} : vector<8x128xf32> to vector<8x32xf32>
    %295 = vector.extract_strided_slice %288 {offsets = [0, 64], sizes = [8, 32], strides = [1, 1]} : vector<8x128xf32> to vector<8x32xf32>
    %296 = vector.extract_strided_slice %285 {offsets = [0, 96], sizes = [8, 32], strides = [1, 1]} : vector<8x128xf32> to vector<8x32xf32>
    %297 = vector.extract_strided_slice %288 {offsets = [0, 96], sizes = [8, 32], strides = [1, 1]} : vector<8x128xf32> to vector<8x32xf32>
    %298 = tpu.concatenate %290, %291, %292, %293, %294, %295, %296, %297 in 1 : vector<8x32xf32>, vector<8x32xf32>, vector<8x32xf32>, vector<8x32xf32>, vector<8x32xf32>, vector<8x32xf32>, vector<8x32xf32>, vector<8x32xf32> -> vector<8x256xf32>
    %299 = arith.addf %289, %298 : vector<8x256xf32>
    %300 = vector.extract_strided_slice %299 {offsets = [0, 0], sizes = [8, 192], strides = [1, 1]} : vector<8x256xf32> to vector<8x192xf32>
    %301 = arith.negf %300 : vector<8x192xf32>
    %302 = math.exp %301 : vector<8x192xf32>
    %cst_100 = arith.constant 1.000000e+00 : f32
    %303 = vector.broadcast %cst_100 : f32 to vector<8x192xf32>
    %304 = arith.addf %303, %302 : vector<8x192xf32>
    %305 = arith.divf %303, %304 : vector<8x192xf32>
    %306 = vector.extract_strided_slice %299 {offsets = [0, 192], sizes = [8, 64], strides = [1, 1]} : vector<8x256xf32> to vector<8x64xf32>
    %307 = math.tanh %306 : vector<8x64xf32>
    %308 = vector.extract_strided_slice %305 {offsets = [0, 0], sizes = [8, 64], strides = [1, 1]} : vector<8x192xf32> to vector<8x64xf32>
    %309 = vector.extract_strided_slice %305 {offsets = [0, 64], sizes = [8, 64], strides = [1, 1]} : vector<8x192xf32> to vector<8x64xf32>
    %310 = vector.extract_strided_slice %305 {offsets = [0, 128], sizes = [8, 64], strides = [1, 1]} : vector<8x192xf32> to vector<8x64xf32>
    %311 = arith.mulf %309, %269 : vector<8x64xf32>
    %312 = arith.mulf %308, %307 : vector<8x64xf32>
    %313 = arith.addf %311, %312 : vector<8x64xf32>
    %314 = math.tanh %313 : vector<8x64xf32>
    %315 = arith.mulf %310, %314 : vector<8x64xf32>
    %316 = vector.extract_strided_slice %315 {offsets = [0, 0], sizes = [8, 32], strides = [1, 1]} : vector<8x64xf32> to vector<8x32xf32>
    %317 = arith.index_cast %c6_i32 : i32 to index
    %c0_101 = arith.constant 0 : index
    %c0_102 = arith.constant 0 : index
    %318 = vector.load %arg9[%317, %c0_101, %c0_102] : memref<8x8x64xf32, #tpu.memory_space<vmem>>, vector<1x8x32xf32>
    %319 = vector.shape_cast %318 : vector<1x8x32xf32> to vector<8x32xf32>
    %320 = vector.shape_cast %316 : vector<8x32xf32> to vector<1x8x32xf32>
    tpu.vector_store %arg9[%317, %c0_101, %c0_102], %320 {strides = array<i32>} : memref<8x8x64xf32, #tpu.memory_space<vmem>>, vector<1x8x32xf32>,
    %321 = vector.extract_strided_slice %315 {offsets = [0, 32], sizes = [8, 32], strides = [1, 1]} : vector<8x64xf32> to vector<8x32xf32>
    %322 = arith.index_cast %282 : i32 to index
    %c0_103 = arith.constant 0 : index
    %c32_104 = arith.constant 32 : index
    %323 = vector.load %arg9[%322, %c0_103, %c32_104] : memref<8x8x64xf32, #tpu.memory_space<vmem>>, vector<1x8x32xf32>
    %324 = vector.shape_cast %323 : vector<1x8x32xf32> to vector<8x32xf32>
    %325 = vector.shape_cast %321 : vector<8x32xf32> to vector<1x8x32xf32>
    tpu.vector_store %arg9[%322, %c0_103, %c32_104], %325 {strides = array<i32>} : memref<8x8x64xf32, #tpu.memory_space<vmem>>, vector<1x8x32xf32>,
    %c7_i32_105 = arith.constant 7 : i32
    %c7_i32_106 = arith.constant 7 : i32
    %326 = arith.subi %c7_i32_106, %c7_i32_105 : i32
    %c0_107 = arith.constant 0 : index
    %327 = arith.index_cast %c7_i32_105 : i32 to index
    %c0_108 = arith.constant 0 : index
    %c0_109 = arith.constant 0 : index
    %328 = vector.load %arg8[%c0_107, %327, %c0_108, %c0_109] : memref<2x8x8x128xf32, #tpu.memory_space<vmem>>, vector<1x1x8x128xf32>
    %329 = vector.shape_cast %328 : vector<1x1x8x128xf32> to vector<8x128xf32>
    %c1_110 = arith.constant 1 : index
    %330 = arith.index_cast %326 : i32 to index
    %c0_111 = arith.constant 0 : index
    %c0_112 = arith.constant 0 : index
    %331 = vector.load %arg8[%c1_110, %330, %c0_111, %c0_112] : memref<2x8x8x128xf32, #tpu.memory_space<vmem>>, vector<1x1x8x128xf32>
    %332 = vector.shape_cast %331 : vector<1x1x8x128xf32> to vector<8x128xf32>
    %cst_113 = arith.constant dense<0.000000e+00> : vector<8x256xf32>
    %333 = tpu.matmul %315, %16, %cst_113 {dimension_numbers = #tpu.dot_dimension_numbers<[1], [0], [0], [1], [0, 0, 1, 1], [], []>} : vector<8x64xf32>, vector<64x256xf32>, vector<8x256xf32> -> vector<8x256xf32>
    %334 = vector.extract_strided_slice %329 {offsets = [0, 0], sizes = [8, 32], strides = [1, 1]} : vector<8x128xf32> to vector<8x32xf32>
    %335 = vector.extract_strided_slice %332 {offsets = [0, 0], sizes = [8, 32], strides = [1, 1]} : vector<8x128xf32> to vector<8x32xf32>
    %336 = vector.extract_strided_slice %329 {offsets = [0, 32], sizes = [8, 32], strides = [1, 1]} : vector<8x128xf32> to vector<8x32xf32>
    %337 = vector.extract_strided_slice %332 {offsets = [0, 32], sizes = [8, 32], strides = [1, 1]} : vector<8x128xf32> to vector<8x32xf32>
    %338 = vector.extract_strided_slice %329 {offsets = [0, 64], sizes = [8, 32], strides = [1, 1]} : vector<8x128xf32> to vector<8x32xf32>
    %339 = vector.extract_strided_slice %332 {offsets = [0, 64], sizes = [8, 32], strides = [1, 1]} : vector<8x128xf32> to vector<8x32xf32>
    %340 = vector.extract_strided_slice %329 {offsets = [0, 96], sizes = [8, 32], strides = [1, 1]} : vector<8x128xf32> to vector<8x32xf32>
    %341 = vector.extract_strided_slice %332 {offsets = [0, 96], sizes = [8, 32], strides = [1, 1]} : vector<8x128xf32> to vector<8x32xf32>
    %342 = tpu.concatenate %334, %335, %336, %337, %338, %339, %340, %341 in 1 : vector<8x32xf32>, vector<8x32xf32>, vector<8x32xf32>, vector<8x32xf32>, vector<8x32xf32>, vector<8x32xf32>, vector<8x32xf32>, vector<8x32xf32> -> vector<8x256xf32>
    %343 = arith.addf %333, %342 : vector<8x256xf32>
    %344 = vector.extract_strided_slice %343 {offsets = [0, 0], sizes = [8, 192], strides = [1, 1]} : vector<8x256xf32> to vector<8x192xf32>
    %345 = arith.negf %344 : vector<8x192xf32>
    %346 = math.exp %345 : vector<8x192xf32>
    %cst_114 = arith.constant 1.000000e+00 : f32
    %347 = vector.broadcast %cst_114 : f32 to vector<8x192xf32>
    %348 = arith.addf %347, %346 : vector<8x192xf32>
    %349 = arith.divf %347, %348 : vector<8x192xf32>
    %350 = vector.extract_strided_slice %343 {offsets = [0, 192], sizes = [8, 64], strides = [1, 1]} : vector<8x256xf32> to vector<8x64xf32>
    %351 = math.tanh %350 : vector<8x64xf32>
    %352 = vector.extract_strided_slice %349 {offsets = [0, 0], sizes = [8, 64], strides = [1, 1]} : vector<8x192xf32> to vector<8x64xf32>
    %353 = vector.extract_strided_slice %349 {offsets = [0, 64], sizes = [8, 64], strides = [1, 1]} : vector<8x192xf32> to vector<8x64xf32>
    %354 = vector.extract_strided_slice %349 {offsets = [0, 128], sizes = [8, 64], strides = [1, 1]} : vector<8x192xf32> to vector<8x64xf32>
    %355 = arith.mulf %353, %313 : vector<8x64xf32>
    %356 = arith.mulf %352, %351 : vector<8x64xf32>
    %357 = arith.addf %355, %356 : vector<8x64xf32>
    %358 = math.tanh %357 : vector<8x64xf32>
    %359 = arith.mulf %354, %358 : vector<8x64xf32>
    %360 = vector.extract_strided_slice %359 {offsets = [0, 0], sizes = [8, 32], strides = [1, 1]} : vector<8x64xf32> to vector<8x32xf32>
    %361 = arith.index_cast %c7_i32_105 : i32 to index
    %c0_115 = arith.constant 0 : index
    %c0_116 = arith.constant 0 : index
    %362 = vector.load %arg9[%361, %c0_115, %c0_116] : memref<8x8x64xf32, #tpu.memory_space<vmem>>, vector<1x8x32xf32>
    %363 = vector.shape_cast %362 : vector<1x8x32xf32> to vector<8x32xf32>
    %364 = vector.shape_cast %360 : vector<8x32xf32> to vector<1x8x32xf32>
    tpu.vector_store %arg9[%361, %c0_115, %c0_116], %364 {strides = array<i32>} : memref<8x8x64xf32, #tpu.memory_space<vmem>>, vector<1x8x32xf32>,
    %365 = vector.extract_strided_slice %359 {offsets = [0, 32], sizes = [8, 32], strides = [1, 1]} : vector<8x64xf32> to vector<8x32xf32>
    %366 = arith.index_cast %326 : i32 to index
    %c0_117 = arith.constant 0 : index
    %c32_118 = arith.constant 32 : index
    %367 = vector.load %arg9[%366, %c0_117, %c32_118] : memref<8x8x64xf32, #tpu.memory_space<vmem>>, vector<1x8x32xf32>
    %368 = vector.shape_cast %367 : vector<1x8x32xf32> to vector<8x32xf32>
    %369 = vector.shape_cast %365 : vector<8x32xf32> to vector<1x8x32xf32>
    tpu.vector_store %arg9[%366, %c0_117, %c32_118], %369 {strides = array<i32>} : memref<8x8x64xf32, #tpu.memory_space<vmem>>, vector<1x8x32xf32>,
    %c8_i32 = arith.constant 8 : i32
    %c0_119 = arith.constant 0 : index
    %c0_120 = arith.constant 0 : index
    %c0_121 = arith.constant 0 : index
    %370 = vector.load %arg9[%c0_119, %c0_120, %c0_121] : memref<8x8x64xf32, #tpu.memory_space<vmem>>, vector<8x8x64xf32>
    %371 = vector.shape_cast %370 : vector<8x8x64xf32> to vector<64x64xf32>
    %c0_122 = arith.constant 0 : index
    %c0_123 = arith.constant 0 : index
    %372 = vector.load %arg5[%c0_122, %c0_123] : memref<64x128xf32, #tpu.memory_space<vmem>>, vector<64x128xf32>
    %cst_124 = arith.constant dense<0.000000e+00> : vector<64x128xf32>
    %373 = tpu.matmul %371, %372, %cst_124 {dimension_numbers = #tpu.dot_dimension_numbers<[1], [0], [0], [1], [0, 0, 1, 1], [], []>} : vector<64x64xf32>, vector<64x128xf32>, vector<64x128xf32> -> vector<64x128xf32>
    %c0_125 = arith.constant 0 : index
    %c0_126 = arith.constant 0 : index
    %374 = vector.load %arg6[%c0_125, %c0_126] : memref<1x128xf32, #tpu.memory_space<vmem>>, vector<1x128xf32>
    %375 = vector.broadcast %374 : vector<1x128xf32> to vector<64x128xf32>
    %376 = arith.addf %373, %375 : vector<64x128xf32>
    %377 = vector.shape_cast %376 : vector<64x128xf32> to vector<8x8x128xf32>
    %c0_127 = arith.constant 0 : index
    %c0_128 = arith.constant 0 : index
    %c0_129 = arith.constant 0 : index
    %378 = vector.load %arg7[%c0_127, %c0_128, %c0_129] : memref<8x8x128xf32, #tpu.memory_space<vmem>>, vector<8x8x128xf32>
    tpu.vector_store %arg7[%c0_127, %c0_128, %c0_129], %377 {strides = array<i32>} : memref<8x8x128xf32, #tpu.memory_space<vmem>>, vector<8x8x128xf32>,
    return
  }
  func.func @transform_0(%arg0: i32) -> (i32, i32, i32) {
    %c0_i32 = arith.constant 0 : i32
    %c0_i32_0 = arith.constant 0 : i32
    %c0_i32_1 = arith.constant 0 : i32
    return %c0_i32, %arg0, %c0_i32_0 : i32, i32, i32
  }
  func.func @transform_1(%arg0: i32) -> (i32, i32) {
    %c0_i32 = arith.constant 0 : i32
    %c0_i32_0 = arith.constant 0 : i32
    %c0_i32_1 = arith.constant 0 : i32
    return %c0_i32, %c0_i32_0 : i32, i32
  }
  func.func @transform_2(%arg0: i32) -> (i32, i32) {
    %c0_i32 = arith.constant 0 : i32
    %c0_i32_0 = arith.constant 0 : i32
    %c0_i32_1 = arith.constant 0 : i32
    return %c0_i32, %c0_i32_0 : i32, i32
  }
  func.func @transform_3(%arg0: i32) -> (i32, i32) {
    %c0_i32 = arith.constant 0 : i32
    %c0_i32_0 = arith.constant 0 : i32
    %c0_i32_1 = arith.constant 0 : i32
    return %c0_i32, %c0_i32_0 : i32, i32
  }
  func.func @transform_4(%arg0: i32) -> (i32, i32) {
    %c0_i32 = arith.constant 0 : i32
    %c0_i32_0 = arith.constant 0 : i32
    %c0_i32_1 = arith.constant 0 : i32
    return %c0_i32, %c0_i32_0 : i32, i32
  }
  func.func @transform_5(%arg0: i32) -> (i32, i32) {
    %c0_i32 = arith.constant 0 : i32
    %c0_i32_0 = arith.constant 0 : i32
    %c0_i32_1 = arith.constant 0 : i32
    return %c0_i32, %c0_i32_0 : i32, i32
  }
  func.func @transform_6(%arg0: i32) -> (i32, i32, i32) {
    %c0_i32 = arith.constant 0 : i32
    %c0_i32_0 = arith.constant 0 : i32
    %c0_i32_1 = arith.constant 0 : i32
    return %c0_i32, %arg0, %c0_i32_0 : i32, i32, i32
  }
}

</mosaic_0001>

<llo_original>
// kernel: tpu_custom_call.1
$region0: #{tpu_custom_call.1}
  #allocation0 [shape = 'u32[]', space=smem, size = 0x4, offset = 0x4, fixed_abs, tag = 'smem constant byte address 0x4 - core index']
  #allocation1 [shape = 'u32[144,128]{1,0:T(1,128)}', space=vmem, size = 0x12000, scoped, tag = 'internal scratch']
  #allocation2 [shape = 'f32[2,8,8,128]{3,2,1,0:T(8,128)}', space=vmem, size = 0x10000, scoped, tag = 'scratch operand']
  #allocation3 [shape = 'f32[8,8,64]{2,1,0:T(8,128)}', space=vmem, size = 0x8000, scoped, tag = 'scratch operand']
  %s0 = inlined_call_operand.hbm [shape: f32[8,8,32], index: 0, kind: input, shape index: {}]
  %s1 = inlined_call_operand.hbm [shape: f32[32,256], index: 1, kind: input, shape index: {}]
  %s2 = inlined_call_operand.vmem [shape: f32[1,256], index: 2, kind: input, shape index: {}]
  %s3 = inlined_call_operand.hbm [shape: f32[64,256], index: 3, kind: input, shape index: {}]
  %s4 = inlined_call_operand.hbm [shape: f32[64,128], index: 4, kind: input, shape index: {}]
  %s5 = inlined_call_operand.vmem [shape: f32[1,128], index: 5, kind: input, shape index: {}]
  %s6 = inlined_call_operand.hbm [shape: f32[8,8,128], index: 6, kind: output, shape index: {}]
  %s7 = sld [smem:[#allocation0]]
  $region50: #{tpu_custom_call.1} parent=0
    _
  %s9 = ssub.s32 1, %s7
  %s10 = scalar_select 0, %s9, %s7
  $region1: #{tpu_custom_call.1} parent=0
    #allocation4 [shape = 'u8[32768]{0}', space=vmem, size = 0x8000, scoped, tag = 'input window, operand 0, single buffered']
    #allocation5 [shape = 's32[1]{0}', space=sflag, size = 0x4, scoped, tag = 'scoped memory for tpu_custom_call.1']
    #allocation6 [shape = 's32[1]{0}', space=sflag, size = 0x4, scoped, tag = 'scoped memory for tpu_custom_call.1']
    #allocation7 [shape = 'u8[32768]{0}', space=vmem, size = 0x8000, scoped, tag = 'input window, operand 1, single buffered']
    #allocation8 [shape = 's32[1]{0}', space=sflag, size = 0x4, scoped, tag = 'scoped memory for tpu_custom_call.1']
    #allocation9 [shape = 'u8[65536]{0}', space=vmem, size = 0x10000, scoped, tag = 'input window, operand 3, single buffered']
    #allocation10 [shape = 'u8[32768]{0}', space=vmem, size = 0x8000, scoped, tag = 'input window, operand 4, single buffered']
    #allocation11 [shape = 's32[1]{0}', space=sflag, size = 0x4, scoped, tag = 'scoped memory for tpu_custom_call.1']
    #allocation12 [shape = 'u8[32768]{0}', space=vmem, size = 0x8000, scoped, tag = 'output window, operand 0, single buffered']
    %11 = vsyncpa [#allocation5], 0
    %12 = vsyncpa [#allocation8], 0
    %13 = vsyncpa [#allocation11], 0
    %14 = vsyncpa [#allocation6], 0
    // Predicated region
    $region2: #{tpu_custom_call.1} parent=1 // pred_check
      _
    $region3: #{tpu_custom_call.1} parent=1 // pred_check_branch
      %16 = sbr.rel (0) target = $region5
    $region4: #{tpu_custom_call.1} parent=1 // pred_region
      %s18 = ssub.s32 1024, 1024
      %19 = vsyncadd [#allocation5], %s18
      %s20 = sshll.u32 [#allocation4], 4
      %s21 = int_to_ptr.vmem [resolvable:$true] %s20
      %26 = dma.hbm_to_vmem [thread:$0]  %s0, 1024, %s21, [#allocation5], 128, 128, 8
    $region5: #{tpu_custom_call.1} parent=1 // pred_fallthru
      _
    // Predicated region
    $region6: #{tpu_custom_call.1} parent=1 // pred_check
      _
    $region7: #{tpu_custom_call.1} parent=1 // pred_check_branch
      %28 = sbr.rel (0) target = $region9
    $region8: #{tpu_custom_call.1} parent=1 // pred_region
      %s30 = ssub.s32 1024, 1024
      %31 = vsyncadd [#allocation8], %s30
      %s32 = sshll.u32 [#allocation7], 4
      %s33 = int_to_ptr.vmem [resolvable:$true] %s32
      %38 = dma.hbm_to_vmem [thread:$0]  %s1, 1024, %s33, [#allocation8], 256, 256, 16
    $region9: #{tpu_custom_call.1} parent=1 // pred_fallthru
      _
    // Predicated region
    $region10: #{tpu_custom_call.1} parent=1 // pred_check
      _
    $region11: #{tpu_custom_call.1} parent=1 // pred_check_branch
      %40 = sbr.rel (0) target = $region13
    $region12: #{tpu_custom_call.1} parent=1 // pred_region
      _
    $region13: #{tpu_custom_call.1} parent=1 // pred_fallthru
      _
    // Predicated region
    $region14: #{tpu_custom_call.1} parent=1 // pred_check
      _
    $region15: #{tpu_custom_call.1} parent=1 // pred_check_branch
      %42 = sbr.rel (0) target = $region17
    $region16: #{tpu_custom_call.1} parent=1 // pred_region
      %s44 = ssub.s32 2048, 2048
      %45 = vsyncadd [#allocation8], %s44
      %s46 = sshll.u32 [#allocation9], 4
      %s47 = int_to_ptr.vmem [resolvable:$true] %s46
      %52 = dma.hbm_to_vmem [thread:$0]  %s3, 2048, %s47, [#allocation8], 256, 256, 16
    $region17: #{tpu_custom_call.1} parent=1 // pred_fallthru
      _
    // Predicated region
    $region18: #{tpu_custom_call.1} parent=1 // pred_check
      _
    $region19: #{tpu_custom_call.1} parent=1 // pred_check_branch
      %54 = sbr.rel (0) target = $region21
    $region20: #{tpu_custom_call.1} parent=1 // pred_region
      %s56 = ssub.s32 1024, 1024
      %57 = vsyncadd [#allocation11], %s56
      %s58 = sshll.u32 [#allocation10], 4
      %s59 = int_to_ptr.vmem [resolvable:$true] %s58
      %64 = dma.hbm_to_vmem [thread:$0]  %s4, 1024, %s59, [#allocation11], 128, 128, 8
    $region21: #{tpu_custom_call.1} parent=1 // pred_fallthru
      _
    // Predicated region
    $region22: #{tpu_custom_call.1} parent=1 // pred_check
      _
    $region23: #{tpu_custom_call.1} parent=1 // pred_check_branch
      %66 = sbr.rel (0) target = $region25
    $region24: #{tpu_custom_call.1} parent=1 // pred_region
      _
    $region25: #{tpu_custom_call.1} parent=1 // pred_fallthru
      _
    // Predicated region
    $region26: #{tpu_custom_call.1} parent=1 // pred_check
      _
    $region27: #{tpu_custom_call.1} parent=1 // pred_check_branch
      %68 = sbr.rel (0) target = $region29
    $region28: #{tpu_custom_call.1} parent=1 // pred_region
      %69 = dma.done [#allocation5], 1024
    $region29: #{tpu_custom_call.1} parent=1 // pred_fallthru
      _
    // Predicated region
    $region30: #{tpu_custom_call.1} parent=1 // pred_check
      _
    $region31: #{tpu_custom_call.1} parent=1 // pred_check_branch
      %71 = sbr.rel (0) target = $region33
    $region32: #{tpu_custom_call.1} parent=1 // pred_region
      %72 = dma.done [#allocation8], 1024
    $region33: #{tpu_custom_call.1} parent=1 // pred_fallthru
      _
    // Predicated region
    $region34: #{tpu_custom_call.1} parent=1 // pred_check
      _
    $region35: #{tpu_custom_call.1} parent=1 // pred_check_branch
      %74 = sbr.rel (0) target = $region37
    $region36: #{tpu_custom_call.1} parent=1 // pred_region
      %75 = dma.done [#allocation8], 2048
    $region37: #{tpu_custom_call.1} parent=1 // pred_fallthru
      _
    // Predicated region
    $region38: #{tpu_custom_call.1} parent=1 // pred_check
      _
    $region39: #{tpu_custom_call.1} parent=1 // pred_check_branch
      %77 = sbr.rel (0) target = $region41
    $region40: #{tpu_custom_call.1} parent=1 // pred_region
      %78 = dma.done [#allocation11], 1024
    $region41: #{tpu_custom_call.1} parent=1 // pred_fallthru
      _
    %v79 = vld [vmem:[#allocation4] sm:$0xff]
    %v80 = vld [vmem:[#allocation4 + $0x8] sm:$0xff]
    %v81 = vld [vmem:[#allocation4 + $0x10] sm:$0xff]
    %v82 = vld [vmem:[#allocation4 + $0x18] sm:$0xff]
    %v83 = vld [vmem:[#allocation4 + $0x20] sm:$0xff]
    %v84 = vld [vmem:[#allocation4 + $0x28] sm:$0xff]
    %v85 = vld [vmem:[#allocation4 + $0x30] sm:$0xff]
    %v86 = vld [vmem:[#allocation4 + $0x38] sm:$0xff]
    %v87 = vld [vmem:[#allocation7] sm:$0xff]
    %v88 = vld [vmem:[#allocation7 + $0x8] sm:$0xff]
    %v89 = vld [vmem:[#allocation7 + $0x10] sm:$0xff]
    %v90 = vld [vmem:[#allocation7 + $0x18] sm:$0xff]
    %v91 = vld [vmem:[#allocation7 + $0x20] sm:$0xff]
    %v92 = vld [vmem:[#allocation7 + $0x28] sm:$0xff]
    %v93 = vld [vmem:[#allocation7 + $0x30] sm:$0xff]
    %v94 = vld [vmem:[#allocation7 + $0x38] sm:$0xff]
    %v95 = vld [vmem:[%s2] sm:$0x3]
    %v97 = vlaneseq
    %v98 = vshrl.u32 %v97, 7
    %v99 = vsub.s32 0, %v98
    %v100 = vrot.slane %v95, %v99
    %v101 = vlaneseq
    %v102 = vshrl.u32 %v101, 7
    %v103 = vsub.s32 1, %v102
    %v104 = vrot.slane %v95, %v103
    %vm107 = vcmask 261120
    %v109 = vsel %vm107, %v79, 0
    %v112 = vsel %vm107, %v80, 0
    %v115 = vsel %vm107, %v81, 0
    %v118 = vsel %vm107, %v82, 0
    %v121 = vsel %vm107, %v83, 0
    %v124 = vsel %vm107, %v84, 0
    %v127 = vsel %vm107, %v85, 0
    %v130 = vsel %vm107, %v86, 0
    %132 = vmatprep.subr.mxu0 %v88
    %133 = vmatpush1.msra.mxu0 %v87
    %134 = vmatprep.subr.mxu0 %v90
    %135 = vmatpush1.msra.mxu0 %v89
    %136 = vmatprep.subr.mxu0 %v92
    %137 = vmatpush1.msra.mxu0 %v91
    %138 = vmatprep.subr.mxu0 %v94
    %139 = vmatpush1.msra.mxu0 %v93
    %140 = vmatprep.subr.mxu0 0.0
    %141 = vmatpush1.msra.mxu0 0.0
    %142 = vmatprep.subr.mxu0 0.0
    %143 = vmatpush1.msra.mxu0 0.0
    %144 = vmatprep.subr.mxu0 0.0
    %145 = vmatpush1.msra.mxu0 0.0
    %146 = vmatprep.subr.mxu0 0.0
    %147 = vmatpush1.msra.mxu0 0.0
    %148 = vmatprep.subr.mxu0 0.0
    %149 = vmatpush1.msra.mxu0 0.0
    %150 = vmatprep.subr.mxu0 0.0
    %151 = vmatpush1.msra.mxu0 0.0
    %152 = vmatprep.subr.mxu0 0.0
    %153 = vmatpush1.msra.mxu0 0.0
    %154 = vmatprep.subr.mxu0 0.0
    %155 = vmatpush1.msra.mxu0 0.0
    %156 = vmatprep.subr.mxu0 0.0
    %157 = vmatpush1.msra.mxu0 0.0
    %158 = vmatprep.subr.mxu0 0.0
    %159 = vmatpush1.msra.mxu0 0.0
    %160 = vmatprep.subr.mxu0 0.0
    %161 = vmatpush1.msra.mxu0 0.0
    %162 = vmatprep.subr.mxu0 0.0
    %163 = vmatpush1.msra.mxu0 0.0
    %164 = vmatprep.subr.mxu0 0.0
    %165 = vmatpush1.msra.mxu0 0.0
    %166 = vmatprep.subr.mxu0 0.0
    %167 = vmatpush1.msra.mxu0 0.0
    %168 = vmatprep.subr.mxu0 0.0
    %169 = vmatpush1.msra.mxu0 0.0
    %170 = vmatprep.subr.mxu0 0.0
    %171 = vmatpush1.msra.mxu0 0.0
    %172 = vmatprep.subr.mxu0 0.0
    %173 = vmatpush1.msra.mxu0 0.0
    %174 = vmatprep.subr.mxu0 0.0
    %175 = vmatpush1.msra.mxu0 0.0
    %176 = vmatprep.subr.mxu0 0.0
    %177 = vmatpush1.msra.mxu0 0.0
    %178 = vmatprep.subr.mxu0 0.0
    %179 = vmatpush1.msra.mxu0 0.0
    %180 = vmatprep.subr.mxu0 0.0
    %181 = vmatpush1.msra.mxu0 0.0
    %182 = vmatprep.subr.mxu0 0.0
    %183 = vmatpush1.msra.mxu0 0.0
    %184 = vmatprep.subr.mxu0 0.0
    %185 = vmatpush1.msra.mxu0 0.0
    %186 = vmatprep.subr.mxu0 0.0
    %187 = vmatpush1.msra.mxu0 0.0
    %188 = vmatprep.subr.mxu0 0.0
    %189 = vmatpush1.msra.mxu0 0.0
    %190 = vmatprep.subr.mxu0 0.0
    %191 = vmatpush1.msra.mxu0 0.0
    %192 = vmatprep.subr.mxu0 0.0
    %193 = vmatpush1.msra.mxu0 0.0
    %194 = vmatprep.subr.mxu0 0.0
    %195 = vmatpush1.msra.mxu0 0.0
    %196 = vmatprep.mubr.f32.mxu0 0.0
    %197 = vmatmul.mubr.f32.gmra.mrb[0].mxu0 %v109
    %v198 = vpop.f32.mrb[0].mxu0
    %v199 = vadd.f32 %v100, %v198
    %v200 = vpop.f32.mrb[0].mxu0
    %v201 = vadd.f32 %v104, %v200
    %202 = vmatprep.mubr.f32.mxu0 0.0
    %203 = vmatmul.mubr.f32.gmra.mrb[0].mxu0 %v112
    %v204 = vpop.f32.mrb[0].mxu0
    %v205 = vadd.f32 %v100, %v204
    %v206 = vpop.f32.mrb[0].mxu0
    %v207 = vadd.f32 %v104, %v206
    %208 = vmatprep.mubr.f32.mxu0 0.0
    %209 = vmatmul.mubr.f32.gmra.mrb[0].mxu0 %v115
    %v210 = vpop.f32.mrb[0].mxu0
    %v211 = vadd.f32 %v100, %v210
    %v212 = vpop.f32.mrb[0].mxu0
    %v213 = vadd.f32 %v104, %v212
    %214 = vmatprep.mubr.f32.mxu0 0.0
    %215 = vmatmul.mubr.f32.gmra.mrb[0].mxu0 %v118
    %v216 = vpop.f32.mrb[0].mxu0
    %v217 = vadd.f32 %v100, %v216
    %v218 = vpop.f32.mrb[0].mxu0
    %v219 = vadd.f32 %v104, %v218
    %220 = vmatprep.mubr.f32.mxu0 0.0
    %221 = vmatmul.mubr.f32.gmra.mrb[0].mxu0 %v121
    %v222 = vpop.f32.mrb[0].mxu0
    %v223 = vadd.f32 %v100, %v222
    %v224 = vpop.f32.mrb[0].mxu0
    %v225 = vadd.f32 %v104, %v224
    %226 = vmatprep.mubr.f32.mxu0 0.0
    %227 = vmatmul.mubr.f32.gmra.mrb[0].mxu0 %v124
    %v228 = vpop.f32.mrb[0].mxu0
    %v229 = vadd.f32 %v100, %v228
    %v230 = vpop.f32.mrb[0].mxu0
    %v231 = vadd.f32 %v104, %v230
    %232 = vmatprep.mubr.f32.mxu0 0.0
    %233 = vmatmul.mubr.f32.gmra.mrb[0].mxu0 %v127
    %v234 = vpop.f32.mrb[0].mxu0
    %v235 = vadd.f32 %v100, %v234
    %v236 = vpop.f32.mrb[0].mxu0
    %v237 = vadd.f32 %v104, %v236
    %238 = vmatprep.mubr.f32.mxu0 0.0
    %239 = vmatmul.mubr.f32.gmra.mrb[0].mxu0 %v130
    %v240 = vpop.f32.mrb[0].mxu0
    %v241 = vadd.f32 %v100, %v240
    %v242 = vpop.f32.mrb[0].mxu0
    %v243 = vadd.f32 %v104, %v242
    %244 = vdwg.mxu0
    %245 = vst [vmem:[#allocation2] sm:$0xff] %v199
    %246 = vst [vmem:[#allocation2 + $0x8] sm:$0xff] %v205
    %247 = vst [vmem:[#allocation2 + $0x10] sm:$0xff] %v211
    %248 = vst [vmem:[#allocation2 + $0x18] sm:$0xff] %v217
    %249 = vst [vmem:[#allocation2 + $0x20] sm:$0xff] %v223
    %250 = vst [vmem:[#allocation2 + $0x28] sm:$0xff] %v229
    %251 = vst [vmem:[#allocation2 + $0x30] sm:$0xff] %v235
    %252 = vst [vmem:[#allocation2 + $0x38] sm:$0xff] %v241
    %s253 = scalar_lea.vmem [#allocation2], 64
    %254 = vst [vmem:[%s253] sm:$0xff] %v201
    %255 = vst [vmem:[%s253 + $0x8] sm:$0xff] %v207
    %256 = vst [vmem:[%s253 + $0x10] sm:$0xff] %v213
    %257 = vst [vmem:[%s253 + $0x18] sm:$0xff] %v219
    %258 = vst [vmem:[%s253 + $0x20] sm:$0xff] %v225
    %259 = vst [vmem:[%s253 + $0x28] sm:$0xff] %v231
    %260 = vst [vmem:[%s253 + $0x30] sm:$0xff] %v237
    %261 = vst [vmem:[%s253 + $0x38] sm:$0xff] %v243
    %v262 = vld [vmem:[#allocation9] sm:$0xff]
    %v263 = vld [vmem:[#allocation9 + $0x8] sm:$0xff]
    %v264 = vld [vmem:[#allocation9 + $0x10] sm:$0xff]
    %v265 = vld [vmem:[#allocation9 + $0x18] sm:$0xff]
    %v266 = vld [vmem:[#allocation9 + $0x20] sm:$0xff]
    %v267 = vld [vmem:[#allocation9 + $0x28] sm:$0xff]
    %v268 = vld [vmem:[#allocation9 + $0x30] sm:$0xff]
    %v269 = vld [vmem:[#allocation9 + $0x38] sm:$0xff]
    %v270 = vld [vmem:[#allocation9 + $0x40] sm:$0xff]
    %v271 = vld [vmem:[#allocation9 + $0x48] sm:$0xff]
    %v272 = vld [vmem:[#allocation9 + $0x50] sm:$0xff]
    %v273 = vld [vmem:[#allocation9 + $0x58] sm:$0xff]
    %v274 = vld [vmem:[#allocation9 + $0x60] sm:$0xff]
    %v275 = vld [vmem:[#allocation9 + $0x68] sm:$0xff]
    %v276 = vld [vmem:[#allocation9 + $0x70] sm:$0xff]
    %v277 = vld [vmem:[#allocation9 + $0x78] sm:$0xff]
    %v278 = vld [vmem:[#allocation2] sm:$0xff]
    %s279 = scalar_lea.vmem [#allocation2], 120
    %v280 = vld [vmem:[%s279] sm:$0xff]
    %282 = vrot.lane.b32.xlu0 %v280, 32
    %v283 = vpop.permute.xlu0 %282
    %286 = vrot.lane.b32.xlu0 %v278, 32
    %v287 = vpop.permute.xlu0 %286
    %289 = vrot.lane.b32.xlu0 %v280, 64
    %v290 = vpop.permute.xlu0 %289
    %292 = vrot.lane.b32.xlu0 %v278, 64
    %v293 = vpop.permute.xlu0 %292
    %295 = vrot.lane.b32.xlu0 %v280, 96
    %v296 = vpop.permute.xlu0 %295
    %298 = vrot.lane.b32.xlu0 %v278, 96
    %v299 = vpop.permute.xlu0 %298
    %v301 = vsel %vm107, %v278, %v283
    %vm302 = vcmask 523264
    %v303 = vsel %vm302, %v301, %v287
    %vm304 = vcmask 785408
    %v305 = vsel %vm304, %v303, %v290
    %v306 = vsel %vm107, %v293, %v296
    %v307 = vsel %vm302, %v306, %v299
    %v308 = vsel %vm304, %v307, %v280
    %v310 = vsel %vm302, 0.0, 0
    %312 = vmatprep.subr.mxu0 %v263
    %313 = vmatpush1.msra.mxu0 %v262
    %314 = vmatprep.subr.mxu0 %v265
    %315 = vmatpush1.msra.mxu0 %v264
    %316 = vmatprep.subr.mxu0 %v267
    %317 = vmatpush1.msra.mxu0 %v266
    %318 = vmatprep.subr.mxu0 %v269
    %319 = vmatpush1.msra.mxu0 %v268
    %320 = vmatprep.subr.mxu0 %v271
    %321 = vmatpush1.msra.mxu0 %v270
    %322 = vmatprep.subr.mxu0 %v273
    %323 = vmatpush1.msra.mxu0 %v272
    %324 = vmatprep.subr.mxu0 %v275
    %325 = vmatpush1.msra.mxu0 %v274
    %326 = vmatprep.subr.mxu0 %v277
    %327 = vmatpush1.msra.mxu0 %v276
    %328 = vmatprep.subr.mxu0 0.0
    %329 = vmatpush1.msra.mxu0 0.0
    %330 = vmatprep.subr.mxu0 0.0
    %331 = vmatpush1.msra.mxu0 0.0
    %332 = vmatprep.subr.mxu0 0.0
    %333 = vmatpush1.msra.mxu0 0.0
    %334 = vmatprep.subr.mxu0 0.0
    %335 = vmatpush1.msra.mxu0 0.0
    %336 = vmatprep.subr.mxu0 0.0
    %337 = vmatpush1.msra.mxu0 0.0
    %338 = vmatprep.subr.mxu0 0.0
    %339 = vmatpush1.msra.mxu0 0.0
    %340 = vmatprep.subr.mxu0 0.0
    %341 = vmatpush1.msra.mxu0 0.0
    %342 = vmatprep.subr.mxu0 0.0
    %343 = vmatpush1.msra.mxu0 0.0
    %344 = vmatprep.subr.mxu0 0.0
    %345 = vmatpush1.msra.mxu0 0.0
    %346 = vmatprep.subr.mxu0 0.0
    %347 = vmatpush1.msra.mxu0 0.0
    %348 = vmatprep.subr.mxu0 0.0
    %349 = vmatpush1.msra.mxu0 0.0
    %350 = vmatprep.subr.mxu0 0.0
    %351 = vmatpush1.msra.mxu0 0.0
    %352 = vmatprep.subr.mxu0 0.0
    %353 = vmatpush1.msra.mxu0 0.0
    %354 = vmatprep.subr.mxu0 0.0
    %355 = vmatpush1.msra.mxu0 0.0
    %356 = vmatprep.subr.mxu0 0.0
    %357 = vmatpush1.msra.mxu0 0.0
    %358 = vmatprep.subr.mxu0 0.0
    %359 = vmatpush1.msra.mxu0 0.0
    %360 = vmatprep.subr.mxu0 0.0
    %361 = vmatpush1.msra.mxu0 0.0
    %362 = vmatprep.subr.mxu0 0.0
    %363 = vmatpush1.msra.mxu0 0.0
    %364 = vmatprep.subr.mxu0 0.0
    %365 = vmatpush1.msra.mxu0 0.0
    %366 = vmatprep.subr.mxu0 0.0
    %367 = vmatpush1.msra.mxu0 0.0
    %368 = vmatprep.subr.mxu0 0.0
    %369 = vmatpush1.msra.mxu0 0.0
    %370 = vmatprep.subr.mxu0 0.0
    %371 = vmatpush1.msra.mxu0 0.0
    %372 = vmatprep.subr.mxu0 0.0
    %373 = vmatpush1.msra.mxu0 0.0
    %374 = vmatprep.subr.mxu0 0.0
    %375 = vmatpush1.msra.mxu0 0.0
    %376 = vmatprep.mubr.f32.mxu0 0.0
    %377 = vmatmul.mubr.f32.gmra.mrb[0].mxu0 %v310
    %v378 = vpop.f32.mrb[0].mxu0
    %v379 = vadd.f32 %v305, %v378
    %v380 = vpop.f32.mrb[0].mxu0
    %v381 = vadd.f32 %v308, %v380
    %382 = vdwg.mxu0
    %v383 = vxor.u32 %v379, 2147483648
    %v384 = vxor.u32 %v381, 2147483648
    %v385 = vmul.f32 %v383, 1.442695
    %v386 = vpow.pop %v385
    %v387 = vmul.f32 %v384, 1.442695
    %v388 = vpow.pop %v387
    %v389 = vadd.f32 %v386, 1.0
    %v390 = vadd.f32 %v388, 1.0
    %v391 = vrcp.pop %v389
    %v392 = vmul.f32 1.0, %v391
    %v393 = vrcp.pop %v390
    %v394 = vmul.f32 1.0, %v393
    %v395 = vtanh.pop %v381
    %v396 = vmul.f32 %v392, 0.0
    %398 = vrot.lane.b32.xlu0 %v395, 64
    %v399 = vpop.permute.xlu0 %398
    %v401 = vmul.f32 %v392, %v399
    %403 = vrot.lane.b32.xlu0 %v401, 64
    %v404 = vpop.permute.xlu0 %403
    %v406 = vadd.f32 %v396, %v404
    %v407 = vtanh.pop %v406
    %409 = vrot.lane.b32.xlu0 %v407, 64
    %v410 = vpop.permute.xlu0 %409
    %v412 = vmul.f32 %v394, %v410
    %413 = vst.msk [vmem:[#allocation3] sm:$0xff] %vm107, %v412
    %s414 = scalar_lea.vmem [#allocation3], 56
    %vm415 = vcmask 523520
    %416 = vst.msk [vmem:[%s414] sm:$0xff] %vm415, %v412
    %s417 = scalar_lea.vmem [#allocation2], 8
    %v418 = vld [vmem:[%s417] sm:$0xff]
    %s419 = scalar_lea.vmem [#allocation2], 112
    %v420 = vld [vmem:[%s419] sm:$0xff]
    %422 = vrot.lane.b32.xlu0 %v420, 32
    %v423 = vpop.permute.xlu0 %422
    %426 = vrot.lane.b32.xlu0 %v418, 32
    %v427 = vpop.permute.xlu0 %426
    %429 = vrot.lane.b32.xlu0 %v420, 64
    %v430 = vpop.permute.xlu0 %429
    %432 = vrot.lane.b32.xlu0 %v418, 64
    %v433 = vpop.permute.xlu0 %432
    %435 = vrot.lane.b32.xlu0 %v420, 96
    %v436 = vpop.permute.xlu0 %435
    %438 = vrot.lane.b32.xlu0 %v418, 96
    %v439 = vpop.permute.xlu0 %438
    %v441 = vsel %vm107, %v418, %v423
    %v442 = vsel %vm302, %v441, %v427
    %v443 = vsel %vm304, %v442, %v430
    %v444 = vsel %vm107, %v433, %v436
    %v445 = vsel %vm302, %v444, %v439
    %v446 = vsel %vm304, %v445, %v420
    %v448 = vsel %vm302, %v412, 0
    %450 = vmatprep.subr.mxu0 %v263
    %451 = vmatpush1.msra.mxu0 %v262
    %452 = vmatprep.subr.mxu0 %v265
    %453 = vmatpush1.msra.mxu0 %v264
    %454 = vmatprep.subr.mxu0 %v267
    %455 = vmatpush1.msra.mxu0 %v266
    %456 = vmatprep.subr.mxu0 %v269
    %457 = vmatpush1.msra.mxu0 %v268
    %458 = vmatprep.subr.mxu0 %v271
    %459 = vmatpush1.msra.mxu0 %v270
    %460 = vmatprep.subr.mxu0 %v273
    %461 = vmatpush1.msra.mxu0 %v272
    %462 = vmatprep.subr.mxu0 %v275
    %463 = vmatpush1.msra.mxu0 %v274
    %464 = vmatprep.subr.mxu0 %v277
    %465 = vmatpush1.msra.mxu0 %v276
    %466 = vmatprep.subr.mxu0 0.0
    %467 = vmatpush1.msra.mxu0 0.0
    %468 = vmatprep.subr.mxu0 0.0
    %469 = vmatpush1.msra.mxu0 0.0
    %470 = vmatprep.subr.mxu0 0.0
    %471 = vmatpush1.msra.mxu0 0.0
    %472 = vmatprep.subr.mxu0 0.0
    %473 = vmatpush1.msra.mxu0 0.0
    %474 = vmatprep.subr.mxu0 0.0
    %475 = vmatpush1.msra.mxu0 0.0
    %476 = vmatprep.subr.mxu0 0.0
    %477 = vmatpush1.msra.mxu0 0.0
    %478 = vmatprep.subr.mxu0 0.0
    %479 = vmatpush1.msra.mxu0 0.0
    %480 = vmatprep.subr.mxu0 0.0
    %481 = vmatpush1.msra.mxu0 0.0
    %482 = vmatprep.subr.mxu0 0.0
    %483 = vmatpush1.msra.mxu0 0.0
    %484 = vmatprep.subr.mxu0 0.0
    %485 = vmatpush1.msra.mxu0 0.0
    %486 = vmatprep.subr.mxu0 0.0
    %487 = vmatpush1.msra.mxu0 0.0
    %488 = vmatprep.subr.mxu0 0.0
    %489 = vmatpush1.msra.mxu0 0.0
    %490 = vmatprep.subr.mxu0 0.0
    %491 = vmatpush1.msra.mxu0 0.0
    %492 = vmatprep.subr.mxu0 0.0
    %493 = vmatpush1.msra.mxu0 0.0
    %494 = vmatprep.subr.mxu0 0.0
    %495 = vmatpush1.msra.mxu0 0.0
    %496 = vmatprep.subr.mxu0 0.0
    %497 = vmatpush1.msra.mxu0 0.0
    %498 = vmatprep.subr.mxu0 0.0
    %499 = vmatpush1.msra.mxu0 0.0
    %500 = vmatprep.subr.mxu0 0.0
    %501 = vmatpush1.msra.mxu0 0.0
    %502 = vmatprep.subr.mxu0 0.0
    %503 = vmatpush1.msra.mxu0 0.0
    %504 = vmatprep.subr.mxu0 0.0
    %505 = vmatpush1.msra.mxu0 0.0
    %506 = vmatprep.subr.mxu0 0.0
    %507 = vmatpush1.msra.mxu0 0.0
    %508 = vmatprep.subr.mxu0 0.0
    %509 = vmatpush1.msra.mxu0 0.0
    %510 = vmatprep.subr.mxu0 0.0
    %511 = vmatpush1.msra.mxu0 0.0
    %512 = vmatprep.subr.mxu0 0.0
    %513 = vmatpush1.msra.mxu0 0.0
    %514 = vmatprep.mubr.f32.mxu0 0.0
    %515 = vmatmul.mubr.f32.gmra.mrb[0].mxu0 %v448
    %v516 = vpop.f32.mrb[0].mxu0
    %v517 = vadd.f32 %v443, %v516
    %v518 = vpop.f32.mrb[0].mxu0
    %v519 = vadd.f32 %v446, %v518
    %520 = vdwg.mxu0
    %v521 = vxor.u32 %v517, 2147483648
    %v522 = vxor.u32 %v519, 2147483648
    %v523 = vmul.f32 %v521, 1.442695
    %v524 = vpow.pop %v523
    %v525 = vmul.f32 %v522, 1.442695
    %v526 = vpow.pop %v525
    %v527 = vadd.f32 %v524, 1.0
    %v528 = vadd.f32 %v526, 1.0
    %v529 = vrcp.pop %v527
    %v530 = vmul.f32 1.0, %v529
    %v531 = vrcp.pop %v528
    %v532 = vmul.f32 1.0, %v531
    %v533 = vtanh.pop %v519
    %v534 = vmul.f32 %v530, %v406
    %536 = vrot.lane.b32.xlu0 %v533, 64
    %v537 = vpop.permute.xlu0 %536
    %v539 = vmul.f32 %v530, %v537
    %541 = vrot.lane.b32.xlu0 %v539, 64
    %v542 = vpop.permute.xlu0 %541
    %v544 = vadd.f32 %v534, %v542
    %v545 = vtanh.pop %v544
    %547 = vrot.lane.b32.xlu0 %v545, 64
    %v548 = vpop.permute.xlu0 %547
    %v550 = vmul.f32 %v532, %v548
    %s551 = scalar_lea.vmem [#allocation3], 8
    %552 = vst.msk [vmem:[%s551] sm:$0xff] %vm107, %v550
    %s553 = scalar_lea.vmem [#allocation3], 48
    %554 = vst.msk [vmem:[%s553] sm:$0xff] %vm415, %v550
    %s555 = scalar_lea.vmem [#allocation2], 16
    %v556 = vld [vmem:[%s555] sm:$0xff]
    %s557 = scalar_lea.vmem [#allocation2], 104
    %v558 = vld [vmem:[%s557] sm:$0xff]
    %560 = vrot.lane.b32.xlu0 %v558, 32
    %v561 = vpop.permute.xlu0 %560
    %564 = vrot.lane.b32.xlu0 %v556, 32
    %v565 = vpop.permute.xlu0 %564
    %567 = vrot.lane.b32.xlu0 %v558, 64
    %v568 = vpop.permute.xlu0 %567
    %570 = vrot.lane.b32.xlu0 %v556, 64
    %v571 = vpop.permute.xlu0 %570
    %573 = vrot.lane.b32.xlu0 %v558, 96
    %v574 = vpop.permute.xlu0 %573
    %576 = vrot.lane.b32.xlu0 %v556, 96
    %v577 = vpop.permute.xlu0 %576
    %v579 = vsel %vm107, %v556, %v561
    %v580 = vsel %vm302, %v579, %v565
    %v581 = vsel %vm304, %v580, %v568
    %v582 = vsel %vm107, %v571, %v574
    %v583 = vsel %vm302, %v582, %v577
    %v584 = vsel %vm304, %v583, %v558
    %v586 = vsel %vm302, %v550, 0
    %588 = vmatprep.subr.mxu0 %v263
    %589 = vmatpush1.msra.mxu0 %v262
    %590 = vmatprep.subr.mxu0 %v265
    %591 = vmatpush1.msra.mxu0 %v264
    %592 = vmatprep.subr.mxu0 %v267
    %593 = vmatpush1.msra.mxu0 %v266
    %594 = vmatprep.subr.mxu0 %v269
    %595 = vmatpush1.msra.mxu0 %v268
    %596 = vmatprep.subr.mxu0 %v271
    %597 = vmatpush1.msra.mxu0 %v270
    %598 = vmatprep.subr.mxu0 %v273
    %599 = vmatpush1.msra.mxu0 %v272
    %600 = vmatprep.subr.mxu0 %v275
    %601 = vmatpush1.msra.mxu0 %v274
    %602 = vmatprep.subr.mxu0 %v277
    %603 = vmatpush1.msra.mxu0 %v276
    %604 = vmatprep.subr.mxu0 0.0
    %605 = vmatpush1.msra.mxu0 0.0
    %606 = vmatprep.subr.mxu0 0.0
    %607 = vmatpush1.msra.mxu0 0.0
    %608 = vmatprep.subr.mxu0 0.0
    %609 = vmatpush1.msra.mxu0 0.0
    %610 = vmatprep.subr.mxu0 0.0
    %611 = vmatpush1.msra.mxu0 0.0
    %612 = vmatprep.subr.mxu0 0.0
    %613 = vmatpush1.msra.mxu0 0.0
    %614 = vmatprep.subr.mxu0 0.0
    %615 = vmatpush1.msra.mxu0 0.0
    %616 = vmatprep.subr.mxu0 0.0
    %617 = vmatpush1.msra.mxu0 0.0
    %618 = vmatprep.subr.mxu0 0.0
    %619 = vmatpush1.msra.mxu0 0.0
    %620 = vmatprep.subr.mxu0 0.0
    %621 = vmatpush1.msra.mxu0 0.0
    %622 = vmatprep.subr.mxu0 0.0
    %623 = vmatpush1.msra.mxu0 0.0
    %624 = vmatprep.subr.mxu0 0.0
    %625 = vmatpush1.msra.mxu0 0.0
    %626 = vmatprep.subr.mxu0 0.0
    %627 = vmatpush1.msra.mxu0 0.0
    %628 = vmatprep.subr.mxu0 0.0
    %629 = vmatpush1.msra.mxu0 0.0
    %630 = vmatprep.subr.mxu0 0.0
    %631 = vmatpush1.msra.mxu0 0.0
    %632 = vmatprep.subr.mxu0 0.0
    %633 = vmatpush1.msra.mxu0 0.0
    %634 = vmatprep.subr.mxu0 0.0
    %635 = vmatpush1.msra.mxu0 0.0
    %636 = vmatprep.subr.mxu0 0.0
    %637 = vmatpush1.msra.mxu0 0.0
    %638 = vmatprep.subr.mxu0 0.0
    %639 = vmatpush1.msra.mxu0 0.0
    %640 = vmatprep.subr.mxu0 0.0
    %641 = vmatpush1.msra.mxu0 0.0
    %642 = vmatprep.subr.mxu0 0.0
    %643 = vmatpush1.msra.mxu0 0.0
    %644 = vmatprep.subr.mxu0 0.0
    %645 = vmatpush1.msra.mxu0 0.0
    %646 = vmatprep.subr.mxu0 0.0
    %647 = vmatpush1.msra.mxu0 0.0
    %648 = vmatprep.subr.mxu0 0.0
    %649 = vmatpush1.msra.mxu0 0.0
    %650 = vmatprep.subr.mxu0 0.0
    %651 = vmatpush1.msra.mxu0 0.0
    %652 = vmatprep.mubr.f32.mxu0 0.0
    %653 = vmatmul.mubr.f32.gmra.mrb[0].mxu0 %v586
    %v654 = vpop.f32.mrb[0].mxu0
    %v655 = vadd.f32 %v581, %v654
    %v656 = vpop.f32.mrb[0].mxu0
    %v657 = vadd.f32 %v584, %v656
    %658 = vdwg.mxu0
    %v659 = vxor.u32 %v655, 2147483648
    %v660 = vxor.u32 %v657, 2147483648
    %v661 = vmul.f32 %v659, 1.442695
    %v662 = vpow.pop %v661
    %v663 = vmul.f32 %v660, 1.442695
    %v664 = vpow.pop %v663
    %v665 = vadd.f32 %v662, 1.0
    %v666 = vadd.f32 %v664, 1.0
    %v667 = vrcp.pop %v665
    %v668 = vmul.f32 1.0, %v667
    %v669 = vrcp.pop %v666
    %v670 = vmul.f32 1.0, %v669
    %v671 = vtanh.pop %v657
    %v672 = vmul.f32 %v668, %v544
    %674 = vrot.lane.b32.xlu0 %v671, 64
    %v675 = vpop.permute.xlu0 %674
    %v677 = vmul.f32 %v668, %v675
    %679 = vrot.lane.b32.xlu0 %v677, 64
    %v680 = vpop.permute.xlu0 %679
    %v682 = vadd.f32 %v672, %v680
    %v683 = vtanh.pop %v682
    %685 = vrot.lane.b32.xlu0 %v683, 64
    %v686 = vpop.permute.xlu0 %685
    %v688 = vmul.f32 %v670, %v686
    %s689 = scalar_lea.vmem [#allocation3], 16
    %690 = vst.msk [vmem:[%s689] sm:$0xff] %vm107, %v688
    %s691 = scalar_lea.vmem [#allocation3], 40
    %692 = vst.msk [vmem:[%s691] sm:$0xff] %vm415, %v688
    %s693 = scalar_lea.vmem [#allocation2], 24
    %v694 = vld [vmem:[%s693] sm:$0xff]
    %s695 = scalar_lea.vmem [#allocation2], 96
    %v696 = vld [vmem:[%s695] sm:$0xff]
    %698 = vrot.lane.b32.xlu0 %v696, 32
    %v699 = vpop.permute.xlu0 %698
    %702 = vrot.lane.b32.xlu0 %v694, 32
    %v703 = vpop.permute.xlu0 %702
    %705 = vrot.lane.b32.xlu0 %v696, 64
    %v706 = vpop.permute.xlu0 %705
    %708 = vrot.lane.b32.xlu0 %v694, 64
    %v709 = vpop.permute.xlu0 %708
    %711 = vrot.lane.b32.xlu0 %v696, 96
    %v712 = vpop.permute.xlu0 %711
    %714 = vrot.lane.b32.xlu0 %v694, 96
    %v715 = vpop.permute.xlu0 %714
    %v717 = vsel %vm107, %v694, %v699
    %v718 = vsel %vm302, %v717, %v703
    %v719 = vsel %vm304, %v718, %v706
    %v720 = vsel %vm107, %v709, %v712
    %v721 = vsel %vm302, %v720, %v715
    %v722 = vsel %vm304, %v721, %v696
    %v724 = vsel %vm302, %v688, 0
    %726 = vmatprep.subr.mxu0 %v263
    %727 = vmatpush1.msra.mxu0 %v262
    %728 = vmatprep.subr.mxu0 %v265
    %729 = vmatpush1.msra.mxu0 %v264
    %730 = vmatprep.subr.mxu0 %v267
    %731 = vmatpush1.msra.mxu0 %v266
    %732 = vmatprep.subr.mxu0 %v269
    %733 = vmatpush1.msra.mxu0 %v268
    %734 = vmatprep.subr.mxu0 %v271
    %735 = vmatpush1.msra.mxu0 %v270
    %736 = vmatprep.subr.mxu0 %v273
    %737 = vmatpush1.msra.mxu0 %v272
    %738 = vmatprep.subr.mxu0 %v275
    %739 = vmatpush1.msra.mxu0 %v274
    %740 = vmatprep.subr.mxu0 %v277
    %741 = vmatpush1.msra.mxu0 %v276
    %742 = vmatprep.subr.mxu0 0.0
    %743 = vmatpush1.msra.mxu0 0.0
    %744 = vmatprep.subr.mxu0 0.0
    %745 = vmatpush1.msra.mxu0 0.0
    %746 = vmatprep.subr.mxu0 0.0
    %747 = vmatpush1.msra.mxu0 0.0
    %748 = vmatprep.subr.mxu0 0.0
    %749 = vmatpush1.msra.mxu0 0.0
    %750 = vmatprep.subr.mxu0 0.0
    %751 = vmatpush1.msra.mxu0 0.0
    %752 = vmatprep.subr.mxu0 0.0
    %753 = vmatpush1.msra.mxu0 0.0
    %754 = vmatprep.subr.mxu0 0.0
    %755 = vmatpush1.msra.mxu0 0.0
    %756 = vmatprep.subr.mxu0 0.0
    %757 = vmatpush1.msra.mxu0 0.0
    %758 = vmatprep.subr.mxu0 0.0
    %759 = vmatpush1.msra.mxu0 0.0
    %760 = vmatprep.subr.mxu0 0.0
    %761 = vmatpush1.msra.mxu0 0.0
    %762 = vmatprep.subr.mxu0 0.0
    %763 = vmatpush1.msra.mxu0 0.0
    %764 = vmatprep.subr.mxu0 0.0
    %765 = vmatpush1.msra.mxu0 0.0
    %766 = vmatprep.subr.mxu0 0.0
    %767 = vmatpush1.msra.mxu0 0.0
    %768 = vmatprep.subr.mxu0 0.0
    %769 = vmatpush1.msra.mxu0 0.0
    %770 = vmatprep.subr.mxu0 0.0
    %771 = vmatpush1.msra.mxu0 0.0
    %772 = vmatprep.subr.mxu0 0.0
    %773 = vmatpush1.msra.mxu0 0.0
    %774 = vmatprep.subr.mxu0 0.0
    %775 = vmatpush1.msra.mxu0 0.0
    %776 = vmatprep.subr.mxu0 0.0
    %777 = vmatpush1.msra.mxu0 0.0
    %778 = vmatprep.subr.mxu0 0.0
    %779 = vmatpush1.msra.mxu0 0.0
    %780 = vmatprep.subr.mxu0 0.0
    %781 = vmatpush1.msra.mxu0 0.0
    %782 = vmatprep.subr.mxu0 0.0
    %783 = vmatpush1.msra.mxu0 0.0
    %784 = vmatprep.subr.mxu0 0.0
    %785 = vmatpush1.msra.mxu0 0.0
    %786 = vmatprep.subr.mxu0 0.0
    %787 = vmatpush1.msra.mxu0 0.0
    %788 = vmatprep.subr.mxu0 0.0
    %789 = vmatpush1.msra.mxu0 0.0
    %790 = vmatprep.mubr.f32.mxu0 0.0
    %791 = vmatmul.mubr.f32.gmra.mrb[0].mxu0 %v724
    %v792 = vpop.f32.mrb[0].mxu0
    %v793 = vadd.f32 %v719, %v792
    %v794 = vpop.f32.mrb[0].mxu0
    %v795 = vadd.f32 %v722, %v794
    %796 = vdwg.mxu0
    %v797 = vxor.u32 %v793, 2147483648
    %v798 = vxor.u32 %v795, 2147483648
    %v799 = vmul.f32 %v797, 1.442695
    %v800 = vpow.pop %v799
    %v801 = vmul.f32 %v798, 1.442695
    %v802 = vpow.pop %v801
    %v803 = vadd.f32 %v800, 1.0
    %v804 = vadd.f32 %v802, 1.0
    %v805 = vrcp.pop %v803
    %v806 = vmul.f32 1.0, %v805
    %v807 = vrcp.pop %v804
    %v808 = vmul.f32 1.0, %v807
    %v809 = vtanh.pop %v795
    %v810 = vmul.f32 %v806, %v682
    %812 = vrot.lane.b32.xlu0 %v809, 64
    %v813 = vpop.permute.xlu0 %812
    %v815 = vmul.f32 %v806, %v813
    %817 = vrot.lane.b32.xlu0 %v815, 64
    %v818 = vpop.permute.xlu0 %817
    %v820 = vadd.f32 %v810, %v818
    %v821 = vtanh.pop %v820
    %823 = vrot.lane.b32.xlu0 %v821, 64
    %v824 = vpop.permute.xlu0 %823
    %v826 = vmul.f32 %v808, %v824
    %s827 = scalar_lea.vmem [#allocation3], 24
    %828 = vst.msk [vmem:[%s827] sm:$0xff] %vm107, %v826
    %s829 = scalar_lea.vmem [#allocation3], 32
    %830 = vst.msk [vmem:[%s829] sm:$0xff] %vm415, %v826
    %s831 = scalar_lea.vmem [#allocation2], 32
    %v832 = vld [vmem:[%s831] sm:$0xff]
    %s833 = scalar_lea.vmem [#allocation2], 88
    %v834 = vld [vmem:[%s833] sm:$0xff]
    %836 = vrot.lane.b32.xlu0 %v834, 32
    %v837 = vpop.permute.xlu0 %836
    %840 = vrot.lane.b32.xlu0 %v832, 32
    %v841 = vpop.permute.xlu0 %840
    %843 = vrot.lane.b32.xlu0 %v834, 64
    %v844 = vpop.permute.xlu0 %843
    %846 = vrot.lane.b32.xlu0 %v832, 64
    %v847 = vpop.permute.xlu0 %846
    %849 = vrot.lane.b32.xlu0 %v834, 96
    %v850 = vpop.permute.xlu0 %849
    %852 = vrot.lane.b32.xlu0 %v832, 96
    %v853 = vpop.permute.xlu0 %852
    %v855 = vsel %vm107, %v832, %v837
    %v856 = vsel %vm302, %v855, %v841
    %v857 = vsel %vm304, %v856, %v844
    %v858 = vsel %vm107, %v847, %v850
    %v859 = vsel %vm302, %v858, %v853
    %v860 = vsel %vm304, %v859, %v834
    %v862 = vsel %vm302, %v826, 0
    %864 = vmatprep.subr.mxu0 %v263
    %865 = vmatpush1.msra.mxu0 %v262
    %866 = vmatprep.subr.mxu0 %v265
    %867 = vmatpush1.msra.mxu0 %v264
    %868 = vmatprep.subr.mxu0 %v267
    %869 = vmatpush1.msra.mxu0 %v266
    %870 = vmatprep.subr.mxu0 %v269
    %871 = vmatpush1.msra.mxu0 %v268
    %872 = vmatprep.subr.mxu0 %v271
    %873 = vmatpush1.msra.mxu0 %v270
    %874 = vmatprep.subr.mxu0 %v273
    %875 = vmatpush1.msra.mxu0 %v272
    %876 = vmatprep.subr.mxu0 %v275
    %877 = vmatpush1.msra.mxu0 %v274
    %878 = vmatprep.subr.mxu0 %v277
    %879 = vmatpush1.msra.mxu0 %v276
    %880 = vmatprep.subr.mxu0 0.0
    %881 = vmatpush1.msra.mxu0 0.0
    %882 = vmatprep.subr.mxu0 0.0
    %883 = vmatpush1.msra.mxu0 0.0
    %884 = vmatprep.subr.mxu0 0.0
    %885 = vmatpush1.msra.mxu0 0.0
    %886 = vmatprep.subr.mxu0 0.0
    %887 = vmatpush1.msra.mxu0 0.0
    %888 = vmatprep.subr.mxu0 0.0
    %889 = vmatpush1.msra.mxu0 0.0
    %890 = vmatprep.subr.mxu0 0.0
    %891 = vmatpush1.msra.mxu0 0.0
    %892 = vmatprep.subr.mxu0 0.0
    %893 = vmatpush1.msra.mxu0 0.0
    %894 = vmatprep.subr.mxu0 0.0
    %895 = vmatpush1.msra.mxu0 0.0
    %896 = vmatprep.subr.mxu0 0.0
    %897 = vmatpush1.msra.mxu0 0.0
    %898 = vmatprep.subr.mxu0 0.0
    %899 = vmatpush1.msra.mxu0 0.0
    %900 = vmatprep.subr.mxu0 0.0
    %901 = vmatpush1.msra.mxu0 0.0
    %902 = vmatprep.subr.mxu0 0.0
    %903 = vmatpush1.msra.mxu0 0.0
    %904 = vmatprep.subr.mxu0 0.0
    %905 = vmatpush1.msra.mxu0 0.0
    %906 = vmatprep.subr.mxu0 0.0
    %907 = vmatpush1.msra.mxu0 0.0
    %908 = vmatprep.subr.mxu0 0.0
    %909 = vmatpush1.msra.mxu0 0.0
    %910 = vmatprep.subr.mxu0 0.0
    %911 = vmatpush1.msra.mxu0 0.0
    %912 = vmatprep.subr.mxu0 0.0
    %913 = vmatpush1.msra.mxu0 0.0
    %914 = vmatprep.subr.mxu0 0.0
    %915 = vmatpush1.msra.mxu0 0.0
    %916 = vmatprep.subr.mxu0 0.0
    %917 = vmatpush1.msra.mxu0 0.0
    %918 = vmatprep.subr.mxu0 0.0
    %919 = vmatpush1.msra.mxu0 0.0
    %920 = vmatprep.subr.mxu0 0.0
    %921 = vmatpush1.msra.mxu0 0.0
    %922 = vmatprep.subr.mxu0 0.0
    %923 = vmatpush1.msra.mxu0 0.0
    %924 = vmatprep.subr.mxu0 0.0
    %925 = vmatpush1.msra.mxu0 0.0
    %926 = vmatprep.subr.mxu0 0.0
    %927 = vmatpush1.msra.mxu0 0.0
    %928 = vmatprep.mubr.f32.mxu0 0.0
    %929 = vmatmul.mubr.f32.gmra.mrb[0].mxu0 %v862
    %v930 = vpop.f32.mrb[0].mxu0
    %v931 = vadd.f32 %v857, %v930
    %v932 = vpop.f32.mrb[0].mxu0
    %v933 = vadd.f32 %v860, %v932
    %934 = vdwg.mxu0
    %v935 = vxor.u32 %v931, 2147483648
    %v936 = vxor.u32 %v933, 2147483648
    %v937 = vmul.f32 %v935, 1.442695
    %v938 = vpow.pop %v937
    %v939 = vmul.f32 %v936, 1.442695
    %v940 = vpow.pop %v939
    %v941 = vadd.f32 %v938, 1.0
    %v942 = vadd.f32 %v940, 1.0
    %v943 = vrcp.pop %v941
    %v944 = vmul.f32 1.0, %v943
    %v945 = vrcp.pop %v942
    %v946 = vmul.f32 1.0, %v945
    %v947 = vtanh.pop %v933
    %v948 = vmul.f32 %v944, %v820
    %950 = vrot.lane.b32.xlu0 %v947, 64
    %v951 = vpop.permute.xlu0 %950
    %v953 = vmul.f32 %v944, %v951
    %955 = vrot.lane.b32.xlu0 %v953, 64
    %v956 = vpop.permute.xlu0 %955
    %v958 = vadd.f32 %v948, %v956
    %v959 = vtanh.pop %v958
    %961 = vrot.lane.b32.xlu0 %v959, 64
    %v962 = vpop.permute.xlu0 %961
    %v964 = vmul.f32 %v946, %v962
    %965 = vst.msk [vmem:[%s829] sm:$0xff] %vm107, %v964
    %966 = vst.msk [vmem:[%s827] sm:$0xff] %vm415, %v964
    %s967 = scalar_lea.vmem [#allocation2], 40
    %v968 = vld [vmem:[%s967] sm:$0xff]
    %s969 = scalar_lea.vmem [#allocation2], 80
    %v970 = vld [vmem:[%s969] sm:$0xff]
    %972 = vrot.lane.b32.xlu0 %v970, 32
    %v973 = vpop.permute.xlu0 %972
    %976 = vrot.lane.b32.xlu0 %v968, 32
    %v977 = vpop.permute.xlu0 %976
    %979 = vrot.lane.b32.xlu0 %v970, 64
    %v980 = vpop.permute.xlu0 %979
    %982 = vrot.lane.b32.xlu0 %v968, 64
    %v983 = vpop.permute.xlu0 %982
    %985 = vrot.lane.b32.xlu0 %v970, 96
    %v986 = vpop.permute.xlu0 %985
    %988 = vrot.lane.b32.xlu0 %v968, 96
    %v989 = vpop.permute.xlu0 %988
    %v991 = vsel %vm107, %v968, %v973
    %v992 = vsel %vm302, %v991, %v977
    %v993 = vsel %vm304, %v992, %v980
    %v994 = vsel %vm107, %v983, %v986
    %v995 = vsel %vm302, %v994, %v989
    %v996 = vsel %vm304, %v995, %v970
    %v998 = vsel %vm302, %v964, 0
    %1000 = vmatprep.subr.mxu0 %v263
    %1001 = vmatpush1.msra.mxu0 %v262
    %1002 = vmatprep.subr.mxu0 %v265
    %1003 = vmatpush1.msra.mxu0 %v264
    %1004 = vmatprep.subr.mxu0 %v267
    %1005 = vmatpush1.msra.mxu0 %v266
    %1006 = vmatprep.subr.mxu0 %v269
    %1007 = vmatpush1.msra.mxu0 %v268
    %1008 = vmatprep.subr.mxu0 %v271
    %1009 = vmatpush1.msra.mxu0 %v270
    %1010 = vmatprep.subr.mxu0 %v273
    %1011 = vmatpush1.msra.mxu0 %v272
    %1012 = vmatprep.subr.mxu0 %v275
    %1013 = vmatpush1.msra.mxu0 %v274
    %1014 = vmatprep.subr.mxu0 %v277
    %1015 = vmatpush1.msra.mxu0 %v276
    %1016 = vmatprep.subr.mxu0 0.0
    %1017 = vmatpush1.msra.mxu0 0.0
    %1018 = vmatprep.subr.mxu0 0.0
    %1019 = vmatpush1.msra.mxu0 0.0
    %1020 = vmatprep.subr.mxu0 0.0
    %1021 = vmatpush1.msra.mxu0 0.0
    %1022 = vmatprep.subr.mxu0 0.0
    %1023 = vmatpush1.msra.mxu0 0.0
    %1024 = vmatprep.subr.mxu0 0.0
    %1025 = vmatpush1.msra.mxu0 0.0
    %1026 = vmatprep.subr.mxu0 0.0
    %1027 = vmatpush1.msra.mxu0 0.0
    %1028 = vmatprep.subr.mxu0 0.0
    %1029 = vmatpush1.msra.mxu0 0.0
    %1030 = vmatprep.subr.mxu0 0.0
    %1031 = vmatpush1.msra.mxu0 0.0
    %1032 = vmatprep.subr.mxu0 0.0
    %1033 = vmatpush1.msra.mxu0 0.0
    %1034 = vmatprep.subr.mxu0 0.0
    %1035 = vmatpush1.msra.mxu0 0.0
    %1036 = vmatprep.subr.mxu0 0.0
    %1037 = vmatpush1.msra.mxu0 0.0
    %1038 = vmatprep.subr.mxu0 0.0
    %1039 = vmatpush1.msra.mxu0 0.0
    %1040 = vmatprep.subr.mxu0 0.0
    %1041 = vmatpush1.msra.mxu0 0.0
    %1042 = vmatprep.subr.mxu0 0.0
    %1043 = vmatpush1.msra.mxu0 0.0
    %1044 = vmatprep.subr.mxu0 0.0
    %1045 = vmatpush1.msra.mxu0 0.0
    %1046 = vmatprep.subr.mxu0 0.0
    %1047 = vmatpush1.msra.mxu0 0.0
    %1048 = vmatprep.subr.mxu0 0.0
    %1049 = vmatpush1.msra.mxu0 0.0
    %1050 = vmatprep.subr.mxu0 0.0
    %1051 = vmatpush1.msra.mxu0 0.0
    %1052 = vmatprep.subr.mxu0 0.0
    %1053 = vmatpush1.msra.mxu0 0.0
    %1054 = vmatprep.subr.mxu0 0.0
    %1055 = vmatpush1.msra.mxu0 0.0
    %1056 = vmatprep.subr.mxu0 0.0
    %1057 = vmatpush1.msra.mxu0 0.0
    %1058 = vmatprep.subr.mxu0 0.0
    %1059 = vmatpush1.msra.mxu0 0.0
    %1060 = vmatprep.subr.mxu0 0.0
    %1061 = vmatpush1.msra.mxu0 0.0
    %1062 = vmatprep.subr.mxu0 0.0
    %1063 = vmatpush1.msra.mxu0 0.0
    %1064 = vmatprep.mubr.f32.mxu0 0.0
    %1065 = vmatmul.mubr.f32.gmra.mrb[0].mxu0 %v998
    %v1066 = vpop.f32.mrb[0].mxu0
    %v1067 = vadd.f32 %v993, %v1066
    %v1068 = vpop.f32.mrb[0].mxu0
    %v1069 = vadd.f32 %v996, %v1068
    %1070 = vdwg.mxu0
    %v1071 = vxor.u32 %v1067, 2147483648
    %v1072 = vxor.u32 %v1069, 2147483648
    %v1073 = vmul.f32 %v1071, 1.442695
    %v1074 = vpow.pop %v1073
    %v1075 = vmul.f32 %v1072, 1.442695
    %v1076 = vpow.pop %v1075
    %v1077 = vadd.f32 %v1074, 1.0
    %v1078 = vadd.f32 %v1076, 1.0
    %v1079 = vrcp.pop %v1077
    %v1080 = vmul.f32 1.0, %v1079
    %v1081 = vrcp.pop %v1078
    %v1082 = vmul.f32 1.0, %v1081
    %v1083 = vtanh.pop %v1069
    %v1084 = vmul.f32 %v1080, %v958
    %1086 = vrot.lane.b32.xlu0 %v1083, 64
    %v1087 = vpop.permute.xlu0 %1086
    %v1089 = vmul.f32 %v1080, %v1087
    %1091 = vrot.lane.b32.xlu0 %v1089, 64
    %v1092 = vpop.permute.xlu0 %1091
    %v1094 = vadd.f32 %v1084, %v1092
    %v1095 = vtanh.pop %v1094
    %1097 = vrot.lane.b32.xlu0 %v1095, 64
    %v1098 = vpop.permute.xlu0 %1097
    %v1100 = vmul.f32 %v1082, %v1098
    %1101 = vst.msk [vmem:[%s691] sm:$0xff] %vm107, %v1100
    %1102 = vst.msk [vmem:[%s689] sm:$0xff] %vm415, %v1100
    %s1103 = scalar_lea.vmem [#allocation2], 48
    %v1104 = vld [vmem:[%s1103] sm:$0xff]
    %s1105 = scalar_lea.vmem [#allocation2], 72
    %v1106 = vld [vmem:[%s1105] sm:$0xff]
    %1108 = vrot.lane.b32.xlu0 %v1106, 32
    %v1109 = vpop.permute.xlu0 %1108
    %1112 = vrot.lane.b32.xlu0 %v1104, 32
    %v1113 = vpop.permute.xlu0 %1112
    %1115 = vrot.lane.b32.xlu0 %v1106, 64
    %v1116 = vpop.permute.xlu0 %1115
    %1118 = vrot.lane.b32.xlu0 %v1104, 64
    %v1119 = vpop.permute.xlu0 %1118
    %1121 = vrot.lane.b32.xlu0 %v1106, 96
    %v1122 = vpop.permute.xlu0 %1121
    %1124 = vrot.lane.b32.xlu0 %v1104, 96
    %v1125 = vpop.permute.xlu0 %1124
    %v1127 = vsel %vm107, %v1104, %v1109
    %v1128 = vsel %vm302, %v1127, %v1113
    %v1129 = vsel %vm304, %v1128, %v1116
    %v1130 = vsel %vm107, %v1119, %v1122
    %v1131 = vsel %vm302, %v1130, %v1125
    %v1132 = vsel %vm304, %v1131, %v1106
    %v1134 = vsel %vm302, %v1100, 0
    %1136 = vmatprep.subr.mxu0 %v263
    %1137 = vmatpush1.msra.mxu0 %v262
    %1138 = vmatprep.subr.mxu0 %v265
    %1139 = vmatpush1.msra.mxu0 %v264
    %1140 = vmatprep.subr.mxu0 %v267
    %1141 = vmatpush1.msra.mxu0 %v266
    %1142 = vmatprep.subr.mxu0 %v269
    %1143 = vmatpush1.msra.mxu0 %v268
    %1144 = vmatprep.subr.mxu0 %v271
    %1145 = vmatpush1.msra.mxu0 %v270
    %1146 = vmatprep.subr.mxu0 %v273
    %1147 = vmatpush1.msra.mxu0 %v272
    %1148 = vmatprep.subr.mxu0 %v275
    %1149 = vmatpush1.msra.mxu0 %v274
    %1150 = vmatprep.subr.mxu0 %v277
    %1151 = vmatpush1.msra.mxu0 %v276
    %1152 = vmatprep.subr.mxu0 0.0
    %1153 = vmatpush1.msra.mxu0 0.0
    %1154 = vmatprep.subr.mxu0 0.0
    %1155 = vmatpush1.msra.mxu0 0.0
    %1156 = vmatprep.subr.mxu0 0.0
    %1157 = vmatpush1.msra.mxu0 0.0
    %1158 = vmatprep.subr.mxu0 0.0
    %1159 = vmatpush1.msra.mxu0 0.0
    %1160 = vmatprep.subr.mxu0 0.0
    %1161 = vmatpush1.msra.mxu0 0.0
    %1162 = vmatprep.subr.mxu0 0.0
    %1163 = vmatpush1.msra.mxu0 0.0
    %1164 = vmatprep.subr.mxu0 0.0
    %1165 = vmatpush1.msra.mxu0 0.0
    %1166 = vmatprep.subr.mxu0 0.0
    %1167 = vmatpush1.msra.mxu0 0.0
    %1168 = vmatprep.subr.mxu0 0.0
    %1169 = vmatpush1.msra.mxu0 0.0
    %1170 = vmatprep.subr.mxu0 0.0
    %1171 = vmatpush1.msra.mxu0 0.0
    %1172 = vmatprep.subr.mxu0 0.0
    %1173 = vmatpush1.msra.mxu0 0.0
    %1174 = vmatprep.subr.mxu0 0.0
    %1175 = vmatpush1.msra.mxu0 0.0
    %1176 = vmatprep.subr.mxu0 0.0
    %1177 = vmatpush1.msra.mxu0 0.0
    %1178 = vmatprep.subr.mxu0 0.0
    %1179 = vmatpush1.msra.mxu0 0.0
    %1180 = vmatprep.subr.mxu0 0.0
    %1181 = vmatpush1.msra.mxu0 0.0
    %1182 = vmatprep.subr.mxu0 0.0
    %1183 = vmatpush1.msra.mxu0 0.0
    %1184 = vmatprep.subr.mxu0 0.0
    %1185 = vmatpush1.msra.mxu0 0.0
    %1186 = vmatprep.subr.mxu0 0.0
    %1187 = vmatpush1.msra.mxu0 0.0
    %1188 = vmatprep.subr.mxu0 0.0
    %1189 = vmatpush1.msra.mxu0 0.0
    %1190 = vmatprep.subr.mxu0 0.0
    %1191 = vmatpush1.msra.mxu0 0.0
    %1192 = vmatprep.subr.mxu0 0.0
    %1193 = vmatpush1.msra.mxu0 0.0
    %1194 = vmatprep.subr.mxu0 0.0
    %1195 = vmatpush1.msra.mxu0 0.0
    %1196 = vmatprep.subr.mxu0 0.0
    %1197 = vmatpush1.msra.mxu0 0.0
    %1198 = vmatprep.subr.mxu0 0.0
    %1199 = vmatpush1.msra.mxu0 0.0
    %1200 = vmatprep.mubr.f32.mxu0 0.0
    %1201 = vmatmul.mubr.f32.gmra.mrb[0].mxu0 %v1134
    %v1202 = vpop.f32.mrb[0].mxu0
    %v1203 = vadd.f32 %v1129, %v1202
    %v1204 = vpop.f32.mrb[0].mxu0
    %v1205 = vadd.f32 %v1132, %v1204
    %1206 = vdwg.mxu0
    %v1207 = vxor.u32 %v1203, 2147483648
    %v1208 = vxor.u32 %v1205, 2147483648
    %v1209 = vmul.f32 %v1207, 1.442695
    %v1210 = vpow.pop %v1209
    %v1211 = vmul.f32 %v1208, 1.442695
    %v1212 = vpow.pop %v1211
    %v1213 = vadd.f32 %v1210, 1.0
    %v1214 = vadd.f32 %v1212, 1.0
    %v1215 = vrcp.pop %v1213
    %v1216 = vmul.f32 1.0, %v1215
    %v1217 = vrcp.pop %v1214
    %v1218 = vmul.f32 1.0, %v1217
    %v1219 = vtanh.pop %v1205
    %v1220 = vmul.f32 %v1216, %v1094
    %1222 = vrot.lane.b32.xlu0 %v1219, 64
    %v1223 = vpop.permute.xlu0 %1222
    %v1225 = vmul.f32 %v1216, %v1223
    %1227 = vrot.lane.b32.xlu0 %v1225, 64
    %v1228 = vpop.permute.xlu0 %1227
    %v1230 = vadd.f32 %v1220, %v1228
    %v1231 = vtanh.pop %v1230
    %1233 = vrot.lane.b32.xlu0 %v1231, 64
    %v1234 = vpop.permute.xlu0 %1233
    %v1236 = vmul.f32 %v1218, %v1234
    %1237 = vst.msk [vmem:[%s553] sm:$0xff] %vm107, %v1236
    %1238 = vst.msk [vmem:[%s551] sm:$0xff] %vm415, %v1236
    %s1239 = scalar_lea.vmem [#allocation2], 56
    %v1240 = vld [vmem:[%s1239] sm:$0xff]
    %v1241 = vld [vmem:[%s253] sm:$0xff]
    %1243 = vrot.lane.b32.xlu0 %v1241, 32
    %v1244 = vpop.permute.xlu0 %1243
    %1247 = vrot.lane.b32.xlu0 %v1240, 32
    %v1248 = vpop.permute.xlu0 %1247
    %1250 = vrot.lane.b32.xlu0 %v1241, 64
    %v1251 = vpop.permute.xlu0 %1250
    %1253 = vrot.lane.b32.xlu0 %v1240, 64
    %v1254 = vpop.permute.xlu0 %1253
    %1256 = vrot.lane.b32.xlu0 %v1241, 96
    %v1257 = vpop.permute.xlu0 %1256
    %1259 = vrot.lane.b32.xlu0 %v1240, 96
    %v1260 = vpop.permute.xlu0 %1259
    %v1262 = vsel %vm107, %v1240, %v1244
    %v1263 = vsel %vm302, %v1262, %v1248
    %v1264 = vsel %vm304, %v1263, %v1251
    %v1265 = vsel %vm107, %v1254, %v1257
    %v1266 = vsel %vm302, %v1265, %v1260
    %v1267 = vsel %vm304, %v1266, %v1241
    %v1269 = vsel %vm302, %v1236, 0
    %1271 = vmatprep.subr.mxu0 %v263
    %1272 = vmatpush1.msra.mxu0 %v262
    %1273 = vmatprep.subr.mxu0 %v265
    %1274 = vmatpush1.msra.mxu0 %v264
    %1275 = vmatprep.subr.mxu0 %v267
    %1276 = vmatpush1.msra.mxu0 %v266
    %1277 = vmatprep.subr.mxu0 %v269
    %1278 = vmatpush1.msra.mxu0 %v268
    %1279 = vmatprep.subr.mxu0 %v271
    %1280 = vmatpush1.msra.mxu0 %v270
    %1281 = vmatprep.subr.mxu0 %v273
    %1282 = vmatpush1.msra.mxu0 %v272
    %1283 = vmatprep.subr.mxu0 %v275
    %1284 = vmatpush1.msra.mxu0 %v274
    %1285 = vmatprep.subr.mxu0 %v277
    %1286 = vmatpush1.msra.mxu0 %v276
    %1287 = vmatprep.subr.mxu0 0.0
    %1288 = vmatpush1.msra.mxu0 0.0
    %1289 = vmatprep.subr.mxu0 0.0
    %1290 = vmatpush1.msra.mxu0 0.0
    %1291 = vmatprep.subr.mxu0 0.0
    %1292 = vmatpush1.msra.mxu0 0.0
    %1293 = vmatprep.subr.mxu0 0.0
    %1294 = vmatpush1.msra.mxu0 0.0
    %1295 = vmatprep.subr.mxu0 0.0
    %1296 = vmatpush1.msra.mxu0 0.0
    %1297 = vmatprep.subr.mxu0 0.0
    %1298 = vmatpush1.msra.mxu0 0.0
    %1299 = vmatprep.subr.mxu0 0.0
    %1300 = vmatpush1.msra.mxu0 0.0
    %1301 = vmatprep.subr.mxu0 0.0
    %1302 = vmatpush1.msra.mxu0 0.0
    %1303 = vmatprep.subr.mxu0 0.0
    %1304 = vmatpush1.msra.mxu0 0.0
    %1305 = vmatprep.subr.mxu0 0.0
    %1306 = vmatpush1.msra.mxu0 0.0
    %1307 = vmatprep.subr.mxu0 0.0
    %1308 = vmatpush1.msra.mxu0 0.0
    %1309 = vmatprep.subr.mxu0 0.0
    %1310 = vmatpush1.msra.mxu0 0.0
    %1311 = vmatprep.subr.mxu0 0.0
    %1312 = vmatpush1.msra.mxu0 0.0
    %1313 = vmatprep.subr.mxu0 0.0
    %1314 = vmatpush1.msra.mxu0 0.0
    %1315 = vmatprep.subr.mxu0 0.0
    %1316 = vmatpush1.msra.mxu0 0.0
    %1317 = vmatprep.subr.mxu0 0.0
    %1318 = vmatpush1.msra.mxu0 0.0
    %1319 = vmatprep.subr.mxu0 0.0
    %1320 = vmatpush1.msra.mxu0 0.0
    %1321 = vmatprep.subr.mxu0 0.0
    %1322 = vmatpush1.msra.mxu0 0.0
    %1323 = vmatprep.subr.mxu0 0.0
    %1324 = vmatpush1.msra.mxu0 0.0
    %1325 = vmatprep.subr.mxu0 0.0
    %1326 = vmatpush1.msra.mxu0 0.0
    %1327 = vmatprep.subr.mxu0 0.0
    %1328 = vmatpush1.msra.mxu0 0.0
    %1329 = vmatprep.subr.mxu0 0.0
    %1330 = vmatpush1.msra.mxu0 0.0
    %1331 = vmatprep.subr.mxu0 0.0
    %1332 = vmatpush1.msra.mxu0 0.0
    %1333 = vmatprep.subr.mxu0 0.0
    %1334 = vmatpush1.msra.mxu0 0.0
    %1335 = vmatprep.mubr.f32.mxu0 0.0
    %1336 = vmatmul.mubr.f32.gmra.mrb[0].mxu0 %v1269
    %v1337 = vpop.f32.mrb[0].mxu0
    %v1338 = vadd.f32 %v1264, %v1337
    %v1339 = vpop.f32.mrb[0].mxu0
    %v1340 = vadd.f32 %v1267, %v1339
    %1341 = vdwg.mxu0
    %v1342 = vxor.u32 %v1338, 2147483648
    %v1343 = vxor.u32 %v1340, 2147483648
    %v1344 = vmul.f32 %v1342, 1.442695
    %v1345 = vpow.pop %v1344
    %v1346 = vmul.f32 %v1343, 1.442695
    %v1347 = vpow.pop %v1346
    %v1348 = vadd.f32 %v1345, 1.0
    %v1349 = vadd.f32 %v1347, 1.0
    %v1350 = vrcp.pop %v1348
    %v1351 = vmul.f32 1.0, %v1350
    %v1352 = vrcp.pop %v1349
    %v1353 = vmul.f32 1.0, %v1352
    %v1354 = vtanh.pop %v1340
    %v1355 = vmul.f32 %v1351, %v1230
    %1357 = vrot.lane.b32.xlu0 %v1354, 64
    %v1358 = vpop.permute.xlu0 %1357
    %v1360 = vmul.f32 %v1351, %v1358
    %1362 = vrot.lane.b32.xlu0 %v1360, 64
    %v1363 = vpop.permute.xlu0 %1362
    %v1365 = vadd.f32 %v1355, %v1363
    %v1366 = vtanh.pop %v1365
    %1368 = vrot.lane.b32.xlu0 %v1366, 64
    %v1369 = vpop.permute.xlu0 %1368
    %v1371 = vmul.f32 %v1353, %v1369
    %1372 = vst.msk [vmem:[%s414] sm:$0xff] %vm107, %v1371
    %1373 = vst.msk [vmem:[#allocation3] sm:$0xff] %vm415, %v1371
    %v1374 = vld [vmem:[#allocation3] sm:$0xff]
    %v1375 = vld [vmem:[#allocation3 + $0x8] sm:$0xff]
    %v1376 = vld [vmem:[#allocation3 + $0x10] sm:$0xff]
    %v1377 = vld [vmem:[#allocation3 + $0x18] sm:$0xff]
    %v1378 = vld [vmem:[#allocation3 + $0x20] sm:$0xff]
    %v1379 = vld [vmem:[#allocation3 + $0x28] sm:$0xff]
    %v1380 = vld [vmem:[#allocation3 + $0x30] sm:$0xff]
    %v1381 = vld [vmem:[#allocation3 + $0x38] sm:$0xff]
    %v1382 = vld [vmem:[#allocation10] sm:$0xff]
    %v1383 = vld [vmem:[#allocation10 + $0x8] sm:$0xff]
    %v1384 = vld [vmem:[#allocation10 + $0x10] sm:$0xff]
    %v1385 = vld [vmem:[#allocation10 + $0x18] sm:$0xff]
    %v1386 = vld [vmem:[#allocation10 + $0x20] sm:$0xff]
    %v1387 = vld [vmem:[#allocation10 + $0x28] sm:$0xff]
    %v1388 = vld [vmem:[#allocation10 + $0x30] sm:$0xff]
    %v1389 = vld [vmem:[#allocation10 + $0x38] sm:$0xff]
    %v1390 = vld [vmem:[%s5] sm:$0x1]
    %v1392 = vlaneseq
    %v1393 = vshrl.u32 %v1392, 7
    %v1394 = vsub.s32 0, %v1393
    %v1395 = vrot.slane %v1390, %v1394
    %v1398 = vsel %vm302, %v1374, 0
    %v1401 = vsel %vm302, %v1375, 0
    %v1404 = vsel %vm302, %v1376, 0
    %v1407 = vsel %vm302, %v1377, 0
    %v1410 = vsel %vm302, %v1378, 0
    %v1413 = vsel %vm302, %v1379, 0
    %v1416 = vsel %vm302, %v1380, 0
    %v1419 = vsel %vm302, %v1381, 0
    %1421 = vmatprep.subr.mxu0 0.0
    %1422 = vmatpush1.msra.mxu0 %v1382
    %1423 = vmatprep.subr.mxu0 0.0
    %1424 = vmatpush1.msra.mxu0 %v1383
    %1425 = vmatprep.subr.mxu0 0.0
    %1426 = vmatpush1.msra.mxu0 %v1384
    %1427 = vmatprep.subr.mxu0 0.0
    %1428 = vmatpush1.msra.mxu0 %v1385
    %1429 = vmatprep.subr.mxu0 0.0
    %1430 = vmatpush1.msra.mxu0 %v1386
    %1431 = vmatprep.subr.mxu0 0.0
    %1432 = vmatpush1.msra.mxu0 %v1387
    %1433 = vmatprep.subr.mxu0 0.0
    %1434 = vmatpush1.msra.mxu0 %v1388
    %1435 = vmatprep.subr.mxu0 0.0
    %1436 = vmatpush1.msra.mxu0 %v1389
    %1437 = vmatprep.subr.mxu0 0.0
    %1438 = vmatpush1.msra.mxu0 0.0
    %1439 = vmatprep.subr.mxu0 0.0
    %1440 = vmatpush1.msra.mxu0 0.0
    %1441 = vmatprep.subr.mxu0 0.0
    %1442 = vmatpush1.msra.mxu0 0.0
    %1443 = vmatprep.subr.mxu0 0.0
    %1444 = vmatpush1.msra.mxu0 0.0
    %1445 = vmatprep.subr.mxu0 0.0
    %1446 = vmatpush1.msra.mxu0 0.0
    %1447 = vmatprep.subr.mxu0 0.0
    %1448 = vmatpush1.msra.mxu0 0.0
    %1449 = vmatprep.subr.mxu0 0.0
    %1450 = vmatpush1.msra.mxu0 0.0
    %1451 = vmatprep.subr.mxu0 0.0
    %1452 = vmatpush1.msra.mxu0 0.0
    %1453 = vmatprep.subr.mxu0 0.0
    %1454 = vmatpush1.msra.mxu0 0.0
    %1455 = vmatprep.subr.mxu0 0.0
    %1456 = vmatpush1.msra.mxu0 0.0
    %1457 = vmatprep.subr.mxu0 0.0
    %1458 = vmatpush1.msra.mxu0 0.0
    %1459 = vmatprep.subr.mxu0 0.0
    %1460 = vmatpush1.msra.mxu0 0.0
    %1461 = vmatprep.subr.mxu0 0.0
    %1462 = vmatpush1.msra.mxu0 0.0
    %1463 = vmatprep.subr.mxu0 0.0
    %1464 = vmatpush1.msra.mxu0 0.0
    %1465 = vmatprep.subr.mxu0 0.0
    %1466 = vmatpush1.msra.mxu0 0.0
    %1467 = vmatprep.subr.mxu0 0.0
    %1468 = vmatpush1.msra.mxu0 0.0
    %1469 = vmatprep.subr.mxu0 0.0
    %1470 = vmatpush1.msra.mxu0 0.0
    %1471 = vmatprep.subr.mxu0 0.0
    %1472 = vmatpush1.msra.mxu0 0.0
    %1473 = vmatprep.subr.mxu0 0.0
    %1474 = vmatpush1.msra.mxu0 0.0
    %1475 = vmatprep.subr.mxu0 0.0
    %1476 = vmatpush1.msra.mxu0 0.0
    %1477 = vmatprep.subr.mxu0 0.0
    %1478 = vmatpush1.msra.mxu0 0.0
    %1479 = vmatprep.subr.mxu0 0.0
    %1480 = vmatpush1.msra.mxu0 0.0
    %1481 = vmatprep.subr.mxu0 0.0
    %1482 = vmatpush1.msra.mxu0 0.0
    %1483 = vmatprep.subr.mxu0 0.0
    %1484 = vmatpush1.msra.mxu0 0.0
    %1485 = vmatprep.mubr.f32.mxu0 0.0
    %1486 = vmatmul.mubr.f32.gmra.mrb[0].mxu0 %v1398
    %v1487 = vpop.f32.mrb[0].mxu0
    %v1488 = vadd.f32 %v1395, %v1487
    %v1489 = vpop.f32.mrb[0].mxu0
    %1490 = vmatprep.mubr.f32.mxu0 0.0
    %1491 = vmatmul.mubr.f32.gmra.mrb[0].mxu0 %v1401
    %v1492 = vpop.f32.mrb[0].mxu0
    %v1493 = vadd.f32 %v1395, %v1492
    %v1494 = vpop.f32.mrb[0].mxu0
    %1495 = vmatprep.mubr.f32.mxu0 0.0
    %1496 = vmatmul.mubr.f32.gmra.mrb[0].mxu0 %v1404
    %v1497 = vpop.f32.mrb[0].mxu0
    %v1498 = vadd.f32 %v1395, %v1497
    %v1499 = vpop.f32.mrb[0].mxu0
    %1500 = vmatprep.mubr.f32.mxu0 0.0
    %1501 = vmatmul.mubr.f32.gmra.mrb[0].mxu0 %v1407
    %v1502 = vpop.f32.mrb[0].mxu0
    %v1503 = vadd.f32 %v1395, %v1502
    %v1504 = vpop.f32.mrb[0].mxu0
    %1505 = vmatprep.mubr.f32.mxu0 0.0
    %1506 = vmatmul.mubr.f32.gmra.mrb[0].mxu0 %v1410
    %v1507 = vpop.f32.mrb[0].mxu0
    %v1508 = vadd.f32 %v1395, %v1507
    %v1509 = vpop.f32.mrb[0].mxu0
    %1510 = vmatprep.mubr.f32.mxu0 0.0
    %1511 = vmatmul.mubr.f32.gmra.mrb[0].mxu0 %v1413
    %v1512 = vpop.f32.mrb[0].mxu0
    %v1513 = vadd.f32 %v1395, %v1512
    %v1514 = vpop.f32.mrb[0].mxu0
    %1515 = vmatprep.mubr.f32.mxu0 0.0
    %1516 = vmatmul.mubr.f32.gmra.mrb[0].mxu0 %v1416
    %v1517 = vpop.f32.mrb[0].mxu0
    %v1518 = vadd.f32 %v1395, %v1517
    %v1519 = vpop.f32.mrb[0].mxu0
    %1520 = vmatprep.mubr.f32.mxu0 0.0
    %1521 = vmatmul.mubr.f32.gmra.mrb[0].mxu0 %v1419
    %v1522 = vpop.f32.mrb[0].mxu0
    %v1523 = vadd.f32 %v1395, %v1522
    %v1524 = vpop.f32.mrb[0].mxu0
    %1525 = vdwg.mxu0
    %1526 = vst [vmem:[#allocation12] sm:$0xff] %v1488
    %1527 = vst [vmem:[#allocation12 + $0x8] sm:$0xff] %v1493
    %1528 = vst [vmem:[#allocation12 + $0x10] sm:$0xff] %v1498
    %1529 = vst [vmem:[#allocation12 + $0x18] sm:$0xff] %v1503
    %1530 = vst [vmem:[#allocation12 + $0x20] sm:$0xff] %v1508
    %1531 = vst [vmem:[#allocation12 + $0x28] sm:$0xff] %v1513
    %1532 = vst [vmem:[#allocation12 + $0x30] sm:$0xff] %v1518
    %1533 = vst [vmem:[#allocation12 + $0x38] sm:$0xff] %v1523
    // Predicated region
    $region42: #{tpu_custom_call.1} parent=1 // pred_check
      _
    $region43: #{tpu_custom_call.1} parent=1 // pred_check_branch
      %1535 = sbr.rel (0) target = $region45
    $region44: #{tpu_custom_call.1} parent=1 // pred_region
      %s1537 = ssub.s32 1024, 1024
      %1538 = vsyncadd [#allocation6], %s1537
      %s1539 = sshll.u32 [#allocation12], 4
      %s1540 = int_to_ptr.vmem [resolvable:$true] %s1539
      %1545 = dma.vmem_to_hbm [thread:$0]  %s1540, 1024, %s6, [#allocation6], 128, 128, 8
    $region45: #{tpu_custom_call.1} parent=1 // pred_fallthru
      _
    // Predicated region
    $region46: #{tpu_custom_call.1} parent=1 // pred_check
      _
    $region47: #{tpu_custom_call.1} parent=1 // pred_check_branch
      %1547 = sbr.rel (0) target = $region49
    $region48: #{tpu_custom_call.1} parent=1 // pred_region
      %1548 = dma.done [#allocation6], 1024
    $region49: #{tpu_custom_call.1} parent=1 // pred_fallthru
      _
    %1549 = vsyncpa [#allocation5], 1
    %1550 = vsyncpa [#allocation8], 1
    %1551 = vsyncpa [#allocation11], 1
    %1552 = vsyncpa [#allocation6], 1

// kernel: tpu_custom_call.1
$region0: #{tpu_custom_call.1}
  #allocation0 [shape = 'u32[]', space=smem, size = 0x4, offset = 0x4, fixed_abs, tag = 'smem constant byte address 0x4 - core index']
  #allocation1 [shape = 'u32[144,128]{1,0:T(1,128)}', space=vmem, size = 0x12000, scoped, tag = 'internal scratch']
  #allocation2 [shape = 'f32[2,8,8,128]{3,2,1,0:T(8,128)}', space=vmem, size = 0x10000, scoped, tag = 'scratch operand']
  #allocation3 [shape = 'f32[8,8,64]{2,1,0:T(8,128)}', space=vmem, size = 0x8000, scoped, tag = 'scratch operand']
  %s0 = inlined_call_operand.hbm [shape: f32[8,8,32], index: 0, kind: input, shape index: {}]
  %s1 = inlined_call_operand.hbm [shape: f32[32,256], index: 1, kind: input, shape index: {}]
  %s2 = inlined_call_operand.vmem [shape: f32[1,256], index: 2, kind: input, shape index: {}]
  %s3 = inlined_call_operand.hbm [shape: f32[64,256], index: 3, kind: input, shape index: {}]
  %s4 = inlined_call_operand.hbm [shape: f32[64,128], index: 4, kind: input, shape index: {}]
  %s5 = inlined_call_operand.vmem [shape: f32[1,128], index: 5, kind: input, shape index: {}]
  %s6 = inlined_call_operand.hbm [shape: f32[8,8,128], index: 6, kind: output, shape index: {}]
  %s7 = sld [smem:[#allocation0]]
  $region50: #{tpu_custom_call.1} parent=0
    _
  %s9 = ssub.s32 1, %s7
  %s10 = scalar_select 0, %s9, %s7
  $region1: #{tpu_custom_call.1} parent=0
    #allocation4 [shape = 'u8[32768]{0}', space=vmem, size = 0x8000, scoped, tag = 'input window, operand 0, single buffered']
    #allocation5 [shape = 's32[1]{0}', space=sflag, size = 0x4, scoped, tag = 'scoped memory for tpu_custom_call.1']
    #allocation6 [shape = 's32[1]{0}', space=sflag, size = 0x4, scoped, tag = 'scoped memory for tpu_custom_call.1']
    #allocation7 [shape = 'u8[32768]{0}', space=vmem, size = 0x8000, scoped, tag = 'input window, operand 1, single buffered']
    #allocation8 [shape = 's32[1]{0}', space=sflag, size = 0x4, scoped, tag = 'scoped memory for tpu_custom_call.1']
    #allocation9 [shape = 'u8[65536]{0}', space=vmem, size = 0x10000, scoped, tag = 'input window, operand 3, single buffered']
    #allocation10 [shape = 'u8[32768]{0}', space=vmem, size = 0x8000, scoped, tag = 'input window, operand 4, single buffered']
    #allocation11 [shape = 's32[1]{0}', space=sflag, size = 0x4, scoped, tag = 'scoped memory for tpu_custom_call.1']
    #allocation12 [shape = 'u8[32768]{0}', space=vmem, size = 0x8000, scoped, tag = 'output window, operand 0, single buffered']
    %11 = vsyncpa [#allocation5], 0
    %12 = vsyncpa [#allocation8], 0
    %13 = vsyncpa [#allocation11], 0
    %14 = vsyncpa [#allocation6], 0
    // Predicated region
    $region2: #{tpu_custom_call.1} parent=1 // pred_check
      _
    $region3: #{tpu_custom_call.1} parent=1 // pred_check_branch
      %16 = sbr.rel (0) target = $region5
    $region4: #{tpu_custom_call.1} parent=1 // pred_region
      %s18 = ssub.s32 1024, 1024
      %19 = vsyncadd [#allocation5], %s18
      %s20 = sshll.u32 [#allocation4], 4
      %s21 = int_to_ptr.vmem [resolvable:$true] %s20
      %26 = dma.hbm_to_vmem [thread:$0]  %s0, 1024, %s21, [#allocation5], 128, 128, 8
    $region5: #{tpu_custom_call.1} parent=1 // pred_fallthru
      _
    // Predicated region
    $region6: #{tpu_custom_call.1} parent=1 // pred_check
      _
    $region7: #{tpu_custom_call.1} parent=1 // pred_check_branch
      %28 = sbr.rel (0) target = $region9
    $region8: #{tpu_custom_call.1} parent=1 // pred_region
      %s30 = ssub.s32 1024, 1024
      %31 = vsyncadd [#allocation8], %s30
      %s32 = sshll.u32 [#allocation7], 4
      %s33 = int_to_ptr.vmem [resolvable:$true] %s32
      %38 = dma.hbm_to_vmem [thread:$0]  %s1, 1024, %s33, [#allocation8], 256, 256, 16
    $region9: #{tpu_custom_call.1} parent=1 // pred_fallthru
      _
    // Predicated region
    $region10: #{tpu_custom_call.1} parent=1 // pred_check
      _
    $region11: #{tpu_custom_call.1} parent=1 // pred_check_branch
      %40 = sbr.rel (0) target = $region13
    $region12: #{tpu_custom_call.1} parent=1 // pred_region
      _
    $region13: #{tpu_custom_call.1} parent=1 // pred_fallthru
      _
    // Predicated region
    $region14: #{tpu_custom_call.1} parent=1 // pred_check
      _
    $region15: #{tpu_custom_call.1} parent=1 // pred_check_branch
      %42 = sbr.rel (0) target = $region17
    $region16: #{tpu_custom_call.1} parent=1 // pred_region
      %s44 = ssub.s32 2048, 2048
      %45 = vsyncadd [#allocation8], %s44
      %s46 = sshll.u32 [#allocation9], 4
      %s47 = int_to_ptr.vmem [resolvable:$true] %s46
      %52 = dma.hbm_to_vmem [thread:$0]  %s3, 2048, %s47, [#allocation8], 256, 256, 16
    $region17: #{tpu_custom_call.1} parent=1 // pred_fallthru
      _
    // Predicated region
    $region18: #{tpu_custom_call.1} parent=1 // pred_check
      _
    $region19: #{tpu_custom_call.1} parent=1 // pred_check_branch
      %54 = sbr.rel (0) target = $region21
    $region20: #{tpu_custom_call.1} parent=1 // pred_region
      %s56 = ssub.s32 1024, 1024
      %57 = vsyncadd [#allocation11], %s56
      %s58 = sshll.u32 [#allocation10], 4
      %s59 = int_to_ptr.vmem [resolvable:$true] %s58
      %64 = dma.hbm_to_vmem [thread:$0]  %s4, 1024, %s59, [#allocation11], 128, 128, 8
    $region21: #{tpu_custom_call.1} parent=1 // pred_fallthru
      _
    // Predicated region
    $region22: #{tpu_custom_call.1} parent=1 // pred_check
      _
    $region23: #{tpu_custom_call.1} parent=1 // pred_check_branch
      %66 = sbr.rel (0) target = $region25
    $region24: #{tpu_custom_call.1} parent=1 // pred_region
      _
    $region25: #{tpu_custom_call.1} parent=1 // pred_fallthru
      _
    // Predicated region
    $region26: #{tpu_custom_call.1} parent=1 // pred_check
      _
    $region27: #{tpu_custom_call.1} parent=1 // pred_check_branch
      %68 = sbr.rel (0) target = $region29
    $region28: #{tpu_custom_call.1} parent=1 // pred_region
      %69 = dma.done [#allocation5], 1024
    $region29: #{tpu_custom_call.1} parent=1 // pred_fallthru
      _
    // Predicated region
    $region30: #{tpu_custom_call.1} parent=1 // pred_check
      _
    $region31: #{tpu_custom_call.1} parent=1 // pred_check_branch
      %71 = sbr.rel (0) target = $region33
    $region32: #{tpu_custom_call.1} parent=1 // pred_region
      %72 = dma.done [#allocation8], 1024
    $region33: #{tpu_custom_call.1} parent=1 // pred_fallthru
      _
    // Predicated region
    $region34: #{tpu_custom_call.1} parent=1 // pred_check
      _
    $region35: #{tpu_custom_call.1} parent=1 // pred_check_branch
      %74 = sbr.rel (0) target = $region37
    $region36: #{tpu_custom_call.1} parent=1 // pred_region
      %75 = dma.done [#allocation8], 2048
    $region37: #{tpu_custom_call.1} parent=1 // pred_fallthru
      _
    // Predicated region
    $region38: #{tpu_custom_call.1} parent=1 // pred_check
      _
    $region39: #{tpu_custom_call.1} parent=1 // pred_check_branch
      %77 = sbr.rel (0) target = $region41
    $region40: #{tpu_custom_call.1} parent=1 // pred_region
      %78 = dma.done [#allocation11], 1024
    $region41: #{tpu_custom_call.1} parent=1 // pred_fallthru
      _
    %v79 = vld [vmem:[#allocation4] sm:$0xff]
    %v80 = vld [vmem:[#allocation4 + $0x8] sm:$0xff]
    %v81 = vld [vmem:[#allocation4 + $0x10] sm:$0xff]
    %v82 = vld [vmem:[#allocation4 + $0x18] sm:$0xff]
    %v83 = vld [vmem:[#allocation4 + $0x20] sm:$0xff]
    %v84 = vld [vmem:[#allocation4 + $0x28] sm:$0xff]
    %v85 = vld [vmem:[#allocation4 + $0x30] sm:$0xff]
    %v86 = vld [vmem:[#allocation4 + $0x38] sm:$0xff]
    %v87 = vld [vmem:[#allocation7] sm:$0xff]
    %v88 = vld [vmem:[#allocation7 + $0x8] sm:$0xff]
    %v89 = vld [vmem:[#allocation7 + $0x10] sm:$0xff]
    %v90 = vld [vmem:[#allocation7 + $0x18] sm:$0xff]
    %v91 = vld [vmem:[#allocation7 + $0x20] sm:$0xff]
    %v92 = vld [vmem:[#allocation7 + $0x28] sm:$0xff]
    %v93 = vld [vmem:[#allocation7 + $0x30] sm:$0xff]
    %v94 = vld [vmem:[#allocation7 + $0x38] sm:$0xff]
    %v95 = vld [vmem:[%s2] sm:$0x3]
    %v97 = vlaneseq
    %v98 = vshrl.u32 %v97, 7
    %v99 = vsub.s32 0, %v98
    %v100 = vrot.slane %v95, %v99
    %v101 = vlaneseq
    %v102 = vshrl.u32 %v101, 7
    %v103 = vsub.s32 1, %v102
    %v104 = vrot.slane %v95, %v103
    %vm107 = vcmask 261120
    %v109 = vsel %vm107, %v79, 0
    %v112 = vsel %vm107, %v80, 0
    %v115 = vsel %vm107, %v81, 0
    %v118 = vsel %vm107, %v82, 0
    %v121 = vsel %vm107, %v83, 0
    %v124 = vsel %vm107, %v84, 0
    %v127 = vsel %vm107, %v85, 0
    %v130 = vsel %vm107, %v86, 0
    %132 = vmatprep.subr.mxu0 %v88
    %133 = vmatpush1.msra.mxu0 %v87
    %134 = vmatprep.subr.mxu0 %v90
    %135 = vmatpush1.msra.mxu0 %v89
    %136 = vmatprep.subr.mxu0 %v92
    %137 = vmatpush1.msra.mxu0 %v91
    %138 = vmatprep.subr.mxu0 %v94
    %139 = vmatpush1.msra.mxu0 %v93
    %140 = vmatprep.subr.mxu0 0.0
    %141 = vmatpush1.msra.mxu0 0.0
    %142 = vmatprep.subr.mxu0 0.0
    %143 = vmatpush1.msra.mxu0 0.0
    %144 = vmatprep.subr.mxu0 0.0
    %145 = vmatpush1.msra.mxu0 0.0
    %146 = vmatprep.subr.mxu0 0.0
    %147 = vmatpush1.msra.mxu0 0.0
    %148 = vmatprep.subr.mxu0 0.0
    %149 = vmatpush1.msra.mxu0 0.0
    %150 = vmatprep.subr.mxu0 0.0
    %151 = vmatpush1.msra.mxu0 0.0
    %152 = vmatprep.subr.mxu0 0.0
    %153 = vmatpush1.msra.mxu0 0.0
    %154 = vmatprep.subr.mxu0 0.0
    %155 = vmatpush1.msra.mxu0 0.0
    %156 = vmatprep.subr.mxu0 0.0
    %157 = vmatpush1.msra.mxu0 0.0
    %158 = vmatprep.subr.mxu0 0.0
    %159 = vmatpush1.msra.mxu0 0.0
    %160 = vmatprep.subr.mxu0 0.0
    %161 = vmatpush1.msra.mxu0 0.0
    %162 = vmatprep.subr.mxu0 0.0
    %163 = vmatpush1.msra.mxu0 0.0
    %164 = vmatprep.subr.mxu0 0.0
    %165 = vmatpush1.msra.mxu0 0.0
    %166 = vmatprep.subr.mxu0 0.0
    %167 = vmatpush1.msra.mxu0 0.0
    %168 = vmatprep.subr.mxu0 0.0
    %169 = vmatpush1.msra.mxu0 0.0
    %170 = vmatprep.subr.mxu0 0.0
    %171 = vmatpush1.msra.mxu0 0.0
    %172 = vmatprep.subr.mxu0 0.0
    %173 = vmatpush1.msra.mxu0 0.0
    %174 = vmatprep.subr.mxu0 0.0
    %175 = vmatpush1.msra.mxu0 0.0
    %176 = vmatprep.subr.mxu0 0.0
    %177 = vmatpush1.msra.mxu0 0.0
    %178 = vmatprep.subr.mxu0 0.0
    %179 = vmatpush1.msra.mxu0 0.0
    %180 = vmatprep.subr.mxu0 0.0
    %181 = vmatpush1.msra.mxu0 0.0
    %182 = vmatprep.subr.mxu0 0.0
    %183 = vmatpush1.msra.mxu0 0.0
    %184 = vmatprep.subr.mxu0 0.0
    %185 = vmatpush1.msra.mxu0 0.0
    %186 = vmatprep.subr.mxu0 0.0
    %187 = vmatpush1.msra.mxu0 0.0
    %188 = vmatprep.subr.mxu0 0.0
    %189 = vmatpush1.msra.mxu0 0.0
    %190 = vmatprep.subr.mxu0 0.0
    %191 = vmatpush1.msra.mxu0 0.0
    %192 = vmatprep.subr.mxu0 0.0
    %193 = vmatpush1.msra.mxu0 0.0
    %194 = vmatprep.subr.mxu0 0.0
    %195 = vmatpush1.msra.mxu0 0.0
    %196 = vmatprep.mubr.f32.mxu0 0.0
    %197 = vmatmul.mubr.f32.gmra.mrb[0].mxu0 %v109
    %v198 = vpop.f32.mrb[0].mxu0
    %v199 = vadd.f32 %v100, %v198
    %v200 = vpop.f32.mrb[0].mxu0
    %v201 = vadd.f32 %v104, %v200
    %202 = vmatprep.mubr.f32.mxu0 0.0
    %203 = vmatmul.mubr.f32.gmra.mrb[0].mxu0 %v112
    %v204 = vpop.f32.mrb[0].mxu0
    %v205 = vadd.f32 %v100, %v204
    %v206 = vpop.f32.mrb[0].mxu0
    %v207 = vadd.f32 %v104, %v206
    %208 = vmatprep.mubr.f32.mxu0 0.0
    %209 = vmatmul.mubr.f32.gmra.mrb[0].mxu0 %v115
    %v210 = vpop.f32.mrb[0].mxu0
    %v211 = vadd.f32 %v100, %v210
    %v212 = vpop.f32.mrb[0].mxu0
    %v213 = vadd.f32 %v104, %v212
    %214 = vmatprep.mubr.f32.mxu0 0.0
    %215 = vmatmul.mubr.f32.gmra.mrb[0].mxu0 %v118
    %v216 = vpop.f32.mrb[0].mxu0
    %v217 = vadd.f32 %v100, %v216
    %v218 = vpop.f32.mrb[0].mxu0
    %v219 = vadd.f32 %v104, %v218
    %220 = vmatprep.mubr.f32.mxu0 0.0
    %221 = vmatmul.mubr.f32.gmra.mrb[0].mxu0 %v121
    %v222 = vpop.f32.mrb[0].mxu0
    %v223 = vadd.f32 %v100, %v222
    %v224 = vpop.f32.mrb[0].mxu0
    %v225 = vadd.f32 %v104, %v224
    %226 = vmatprep.mubr.f32.mxu0 0.0
    %227 = vmatmul.mubr.f32.gmra.mrb[0].mxu0 %v124
    %v228 = vpop.f32.mrb[0].mxu0
    %v229 = vadd.f32 %v100, %v228
    %v230 = vpop.f32.mrb[0].mxu0
    %v231 = vadd.f32 %v104, %v230
    %232 = vmatprep.mubr.f32.mxu0 0.0
    %233 = vmatmul.mubr.f32.gmra.mrb[0].mxu0 %v127
    %v234 = vpop.f32.mrb[0].mxu0
    %v235 = vadd.f32 %v100, %v234
    %v236 = vpop.f32.mrb[0].mxu0
    %v237 = vadd.f32 %v104, %v236
    %238 = vmatprep.mubr.f32.mxu0 0.0
    %239 = vmatmul.mubr.f32.gmra.mrb[0].mxu0 %v130
    %v240 = vpop.f32.mrb[0].mxu0
    %v241 = vadd.f32 %v100, %v240
    %v242 = vpop.f32.mrb[0].mxu0
    %v243 = vadd.f32 %v104, %v242
    %244 = vdwg.mxu0
    %245 = vst [vmem:[#allocation2] sm:$0xff] %v199
    %246 = vst [vmem:[#allocation2 + $0x8] sm:$0xff] %v205
    %247 = vst [vmem:[#allocation2 + $0x10] sm:$0xff] %v211
    %248 = vst [vmem:[#allocation2 + $0x18] sm:$0xff] %v217
    %249 = vst [vmem:[#allocation2 + $0x20] sm:$0xff] %v223
    %250 = vst [vmem:[#allocation2 + $0x28] sm:$0xff] %v229
    %251 = vst [vmem:[#allocation2 + $0x30] sm:$0xff] %v235
    %252 = vst [vmem:[#allocation2 + $0x38] sm:$0xff] %v241
    %s253 = scalar_lea.vmem [#allocation2], 64
    %254 = vst [vmem:[%s253] sm:$0xff] %v201
    %255 = vst [vmem:[%s253 + $0x8] sm:$0xff] %v207
    %256 = vst [vmem:[%s253 + $0x10] sm:$0xff] %v213
    %257 = vst [vmem:[%s253 + $0x18] sm:$0xff] %v219
    %258 = vst [vmem:[%s253 + $0x20] sm:$0xff] %v225
    %259 = vst [vmem:[%s253 + $0x28] sm:$0xff] %v231
    %260 = vst [vmem:[%s253 + $0x30] sm:$0xff] %v237
    %261 = vst [vmem:[%s253 + $0x38] sm:$0xff] %v243
    %v262 = vld [vmem:[#allocation9] sm:$0xff]
    %v263 = vld [vmem:[#allocation9 + $0x8] sm:$0xff]
    %v264 = vld [vmem:[#allocation9 + $0x10] sm:$0xff]
    %v265 = vld [vmem:[#allocation9 + $0x18] sm:$0xff]
    %v266 = vld [vmem:[#allocation9 + $0x20] sm:$0xff]
    %v267 = vld [vmem:[#allocation9 + $0x28] sm:$0xff]
    %v268 = vld [vmem:[#allocation9 + $0x30] sm:$0xff]
    %v269 = vld [vmem:[#allocation9 + $0x38] sm:$0xff]
    %v270 = vld [vmem:[#allocation9 + $0x40] sm:$0xff]
    %v271 = vld [vmem:[#allocation9 + $0x48] sm:$0xff]
    %v272 = vld [vmem:[#allocation9 + $0x50] sm:$0xff]
    %v273 = vld [vmem:[#allocation9 + $0x58] sm:$0xff]
    %v274 = vld [vmem:[#allocation9 + $0x60] sm:$0xff]
    %v275 = vld [vmem:[#allocation9 + $0x68] sm:$0xff]
    %v276 = vld [vmem:[#allocation9 + $0x70] sm:$0xff]
    %v277 = vld [vmem:[#allocation9 + $0x78] sm:$0xff]
    %v278 = vld [vmem:[#allocation2] sm:$0xff]
    %s279 = scalar_lea.vmem [#allocation2], 120
    %v280 = vld [vmem:[%s279] sm:$0xff]
    %282 = vrot.lane.b32.xlu0 %v280, 32
    %v283 = vpop.permute.xlu0 %282
    %286 = vrot.lane.b32.xlu0 %v278, 32
    %v287 = vpop.permute.xlu0 %286
    %289 = vrot.lane.b32.xlu0 %v280, 64
    %v290 = vpop.permute.xlu0 %289
    %292 = vrot.lane.b32.xlu0 %v278, 64
    %v293 = vpop.permute.xlu0 %292
    %295 = vrot.lane.b32.xlu0 %v280, 96
    %v296 = vpop.permute.xlu0 %295
    %298 = vrot.lane.b32.xlu0 %v278, 96
    %v299 = vpop.permute.xlu0 %298
    %v301 = vsel %vm107, %v278, %v283
    %vm302 = vcmask 523264
    %v303 = vsel %vm302, %v301, %v287
    %vm304 = vcmask 785408
    %v305 = vsel %vm304, %v303, %v290
    %v306 = vsel %vm107, %v293, %v296
    %v307 = vsel %vm302, %v306, %v299
    %v308 = vsel %vm304, %v307, %v280
    %v310 = vsel %vm302, 0.0, 0
    %312 = vmatprep.subr.mxu0 %v263
    %313 = vmatpush1.msra.mxu0 %v262
    %314 = vmatprep.subr.mxu0 %v265
    %315 = vmatpush1.msra.mxu0 %v264
    %316 = vmatprep.subr.mxu0 %v267
    %317 = vmatpush1.msra.mxu0 %v266
    %318 = vmatprep.subr.mxu0 %v269
    %319 = vmatpush1.msra.mxu0 %v268
    %320 = vmatprep.subr.mxu0 %v271
    %321 = vmatpush1.msra.mxu0 %v270
    %322 = vmatprep.subr.mxu0 %v273
    %323 = vmatpush1.msra.mxu0 %v272
    %324 = vmatprep.subr.mxu0 %v275
    %325 = vmatpush1.msra.mxu0 %v274
    %326 = vmatprep.subr.mxu0 %v277
    %327 = vmatpush1.msra.mxu0 %v276
    %328 = vmatprep.subr.mxu0 0.0
    %329 = vmatpush1.msra.mxu0 0.0
    %330 = vmatprep.subr.mxu0 0.0
    %331 = vmatpush1.msra.mxu0 0.0
    %332 = vmatprep.subr.mxu0 0.0
    %333 = vmatpush1.msra.mxu0 0.0
    %334 = vmatprep.subr.mxu0 0.0
    %335 = vmatpush1.msra.mxu0 0.0
    %336 = vmatprep.subr.mxu0 0.0
    %337 = vmatpush1.msra.mxu0 0.0
    %338 = vmatprep.subr.mxu0 0.0
    %339 = vmatpush1.msra.mxu0 0.0
    %340 = vmatprep.subr.mxu0 0.0
    %341 = vmatpush1.msra.mxu0 0.0
    %342 = vmatprep.subr.mxu0 0.0
    %343 = vmatpush1.msra.mxu0 0.0
    %344 = vmatprep.subr.mxu0 0.0
    %345 = vmatpush1.msra.mxu0 0.0
    %346 = vmatprep.subr.mxu0 0.0
    %347 = vmatpush1.msra.mxu0 0.0
    %348 = vmatprep.subr.mxu0 0.0
    %349 = vmatpush1.msra.mxu0 0.0
    %350 = vmatprep.subr.mxu0 0.0
    %351 = vmatpush1.msra.mxu0 0.0
    %352 = vmatprep.subr.mxu0 0.0
    %353 = vmatpush1.msra.mxu0 0.0
    %354 = vmatprep.subr.mxu0 0.0
    %355 = vmatpush1.msra.mxu0 0.0
    %356 = vmatprep.subr.mxu0 0.0
    %357 = vmatpush1.msra.mxu0 0.0
    %358 = vmatprep.subr.mxu0 0.0
    %359 = vmatpush1.msra.mxu0 0.0
    %360 = vmatprep.subr.mxu0 0.0
    %361 = vmatpush1.msra.mxu0 0.0
    %362 = vmatprep.subr.mxu0 0.0
    %363 = vmatpush1.msra.mxu0 0.0
    %364 = vmatprep.subr.mxu0 0.0
    %365 = vmatpush1.msra.mxu0 0.0
    %366 = vmatprep.subr.mxu0 0.0
    %367 = vmatpush1.msra.mxu0 0.0
    %368 = vmatprep.subr.mxu0 0.0
    %369 = vmatpush1.msra.mxu0 0.0
    %370 = vmatprep.subr.mxu0 0.0
    %371 = vmatpush1.msra.mxu0 0.0
    %372 = vmatprep.subr.mxu0 0.0
    %373 = vmatpush1.msra.mxu0 0.0
    %374 = vmatprep.subr.mxu0 0.0
    %375 = vmatpush1.msra.mxu0 0.0
    %376 = vmatprep.mubr.f32.mxu0 0.0
    %377 = vmatmul.mubr.f32.gmra.mrb[0].mxu0 %v310
    %v378 = vpop.f32.mrb[0].mxu0
    %v379 = vadd.f32 %v305, %v378
    %v380 = vpop.f32.mrb[0].mxu0
    %v381 = vadd.f32 %v308, %v380
    %382 = vdwg.mxu0
    %v383 = vxor.u32 %v379, 2147483648
    %v384 = vxor.u32 %v381, 2147483648
    %v385 = vmul.f32 %v383, 1.442695
    %v386 = vpow.pop %v385
    %v387 = vmul.f32 %v384, 1.442695
    %v388 = vpow.pop %v387
    %v389 = vadd.f32 %v386, 1.0
    %v390 = vadd.f32 %v388, 1.0
    %v391 = vrcp.pop %v389
    %v392 = vmul.f32 1.0, %v391
    %v393 = vrcp.pop %v390
    %v394 = vmul.f32 1.0, %v393
    %v395 = vtanh.pop %v381
    %v396 = vmul.f32 %v392, 0.0
    %398 = vrot.lane.b32.xlu0 %v395, 64
    %v399 = vpop.permute.xlu0 %398
    %v401 = vmul.f32 %v392, %v399
    %403 = vrot.lane.b32.xlu0 %v401, 64
    %v404 = vpop.permute.xlu0 %403
    %v406 = vadd.f32 %v396, %v404
    %v407 = vtanh.pop %v406
    %409 = vrot.lane.b32.xlu0 %v407, 64
    %v410 = vpop.permute.xlu0 %409
    %v412 = vmul.f32 %v394, %v410
    %413 = vst.msk [vmem:[#allocation3] sm:$0xff] %vm107, %v412
    %s414 = scalar_lea.vmem [#allocation3], 56
    %vm415 = vcmask 523520
    %416 = vst.msk [vmem:[%s414] sm:$0xff] %vm415, %v412
    %s417 = scalar_lea.vmem [#allocation2], 8
    %v418 = vld [vmem:[%s417] sm:$0xff]
    %s419 = scalar_lea.vmem [#allocation2], 112
    %v420 = vld [vmem:[%s419] sm:$0xff]
    %422 = vrot.lane.b32.xlu0 %v420, 32
    %v423 = vpop.permute.xlu0 %422
    %426 = vrot.lane.b32.xlu0 %v418, 32
    %v427 = vpop.permute.xlu0 %426
    %429 = vrot.lane.b32.xlu0 %v420, 64
    %v430 = vpop.permute.xlu0 %429
    %432 = vrot.lane.b32.xlu0 %v418, 64
    %v433 = vpop.permute.xlu0 %432
    %435 = vrot.lane.b32.xlu0 %v420, 96
    %v436 = vpop.permute.xlu0 %435
    %438 = vrot.lane.b32.xlu0 %v418, 96
    %v439 = vpop.permute.xlu0 %438
    %v441 = vsel %vm107, %v418, %v423
    %v442 = vsel %vm302, %v441, %v427
    %v443 = vsel %vm304, %v442, %v430
    %v444 = vsel %vm107, %v433, %v436
    %v445 = vsel %vm302, %v444, %v439
    %v446 = vsel %vm304, %v445, %v420
    %v448 = vsel %vm302, %v412, 0
    %450 = vmatprep.subr.mxu0 %v263
    %451 = vmatpush1.msra.mxu0 %v262
    %452 = vmatprep.subr.mxu0 %v265
    %453 = vmatpush1.msra.mxu0 %v264
    %454 = vmatprep.subr.mxu0 %v267
    %455 = vmatpush1.msra.mxu0 %v266
    %456 = vmatprep.subr.mxu0 %v269
    %457 = vmatpush1.msra.mxu0 %v268
    %458 = vmatprep.subr.mxu0 %v271
    %459 = vmatpush1.msra.mxu0 %v270
    %460 = vmatprep.subr.mxu0 %v273
    %461 = vmatpush1.msra.mxu0 %v272
    %462 = vmatprep.subr.mxu0 %v275
    %463 = vmatpush1.msra.mxu0 %v274
    %464 = vmatprep.subr.mxu0 %v277
    %465 = vmatpush1.msra.mxu0 %v276
    %466 = vmatprep.subr.mxu0 0.0
    %467 = vmatpush1.msra.mxu0 0.0
    %468 = vmatprep.subr.mxu0 0.0
    %469 = vmatpush1.msra.mxu0 0.0
    %470 = vmatprep.subr.mxu0 0.0
    %471 = vmatpush1.msra.mxu0 0.0
    %472 = vmatprep.subr.mxu0 0.0
    %473 = vmatpush1.msra.mxu0 0.0
    %474 = vmatprep.subr.mxu0 0.0
    %475 = vmatpush1.msra.mxu0 0.0
    %476 = vmatprep.subr.mxu0 0.0
    %477 = vmatpush1.msra.mxu0 0.0
    %478 = vmatprep.subr.mxu0 0.0
    %479 = vmatpush1.msra.mxu0 0.0
    %480 = vmatprep.subr.mxu0 0.0
    %481 = vmatpush1.msra.mxu0 0.0
    %482 = vmatprep.subr.mxu0 0.0
    %483 = vmatpush1.msra.mxu0 0.0
    %484 = vmatprep.subr.mxu0 0.0
    %485 = vmatpush1.msra.mxu0 0.0
    %486 = vmatprep.subr.mxu0 0.0
    %487 = vmatpush1.msra.mxu0 0.0
    %488 = vmatprep.subr.mxu0 0.0
    %489 = vmatpush1.msra.mxu0 0.0
    %490 = vmatprep.subr.mxu0 0.0
    %491 = vmatpush1.msra.mxu0 0.0
    %492 = vmatprep.subr.mxu0 0.0
    %493 = vmatpush1.msra.mxu0 0.0
    %494 = vmatprep.subr.mxu0 0.0
    %495 = vmatpush1.msra.mxu0 0.0
    %496 = vmatprep.subr.mxu0 0.0
    %497 = vmatpush1.msra.mxu0 0.0
    %498 = vmatprep.subr.mxu0 0.0
    %499 = vmatpush1.msra.mxu0 0.0
    %500 = vmatprep.subr.mxu0 0.0
    %501 = vmatpush1.msra.mxu0 0.0
    %502 = vmatprep.subr.mxu0 0.0
    %503 = vmatpush1.msra.mxu0 0.0
    %504 = vmatprep.subr.mxu0 0.0
    %505 = vmatpush1.msra.mxu0 0.0
    %506 = vmatprep.subr.mxu0 0.0
    %507 = vmatpush1.msra.mxu0 0.0
    %508 = vmatprep.subr.mxu0 0.0
    %509 = vmatpush1.msra.mxu0 0.0
    %510 = vmatprep.subr.mxu0 0.0
    %511 = vmatpush1.msra.mxu0 0.0
    %512 = vmatprep.subr.mxu0 0.0
    %513 = vmatpush1.msra.mxu0 0.0
    %514 = vmatprep.mubr.f32.mxu0 0.0
    %515 = vmatmul.mubr.f32.gmra.mrb[0].mxu0 %v448
    %v516 = vpop.f32.mrb[0].mxu0
    %v517 = vadd.f32 %v443, %v516
    %v518 = vpop.f32.mrb[0].mxu0
    %v519 = vadd.f32 %v446, %v518
    %520 = vdwg.mxu0
    %v521 = vxor.u32 %v517, 2147483648
    %v522 = vxor.u32 %v519, 2147483648
    %v523 = vmul.f32 %v521, 1.442695
    %v524 = vpow.pop %v523
    %v525 = vmul.f32 %v522, 1.442695
    %v526 = vpow.pop %v525
    %v527 = vadd.f32 %v524, 1.0
    %v528 = vadd.f32 %v526, 1.0
    %v529 = vrcp.pop %v527
    %v530 = vmul.f32 1.0, %v529
    %v531 = vrcp.pop %v528
    %v532 = vmul.f32 1.0, %v531
    %v533 = vtanh.pop %v519
    %v534 = vmul.f32 %v530, %v406
    %536 = vrot.lane.b32.xlu0 %v533, 64
    %v537 = vpop.permute.xlu0 %536
    %v539 = vmul.f32 %v530, %v537
    %541 = vrot.lane.b32.xlu0 %v539, 64
    %v542 = vpop.permute.xlu0 %541
    %v544 = vadd.f32 %v534, %v542
    %v545 = vtanh.pop %v544
    %547 = vrot.lane.b32.xlu0 %v545, 64
    %v548 = vpop.permute.xlu0 %547
    %v550 = vmul.f32 %v532, %v548
    %s551 = scalar_lea.vmem [#allocation3], 8
    %552 = vst.msk [vmem:[%s551] sm:$0xff] %vm107, %v550
    %s553 = scalar_lea.vmem [#allocation3], 48
    %554 = vst.msk [vmem:[%s553] sm:$0xff] %vm415, %v550
    %s555 = scalar_lea.vmem [#allocation2], 16
    %v556 = vld [vmem:[%s555] sm:$0xff]
    %s557 = scalar_lea.vmem [#allocation2], 104
    %v558 = vld [vmem:[%s557] sm:$0xff]
    %560 = vrot.lane.b32.xlu0 %v558, 32
    %v561 = vpop.permute.xlu0 %560
    %564 = vrot.lane.b32.xlu0 %v556, 32
    %v565 = vpop.permute.xlu0 %564
    %567 = vrot.lane.b32.xlu0 %v558, 64
    %v568 = vpop.permute.xlu0 %567
    %570 = vrot.lane.b32.xlu0 %v556, 64
    %v571 = vpop.permute.xlu0 %570
    %573 = vrot.lane.b32.xlu0 %v558, 96
    %v574 = vpop.permute.xlu0 %573
    %576 = vrot.lane.b32.xlu0 %v556, 96
    %v577 = vpop.permute.xlu0 %576
    %v579 = vsel %vm107, %v556, %v561
    %v580 = vsel %vm302, %v579, %v565
    %v581 = vsel %vm304, %v580, %v568
    %v582 = vsel %vm107, %v571, %v574
    %v583 = vsel %vm302, %v582, %v577
    %v584 = vsel %vm304, %v583, %v558
    %v586 = vsel %vm302, %v550, 0
    %588 = vmatprep.subr.mxu0 %v263
    %589 = vmatpush1.msra.mxu0 %v262
    %590 = vmatprep.subr.mxu0 %v265
    %591 = vmatpush1.msra.mxu0 %v264
    %592 = vmatprep.subr.mxu0 %v267
    %593 = vmatpush1.msra.mxu0 %v266
    %594 = vmatprep.subr.mxu0 %v269
    %595 = vmatpush1.msra.mxu0 %v268
    %596 = vmatprep.subr.mxu0 %v271
    %597 = vmatpush1.msra.mxu0 %v270
    %598 = vmatprep.subr.mxu0 %v273
    %599 = vmatpush1.msra.mxu0 %v272
    %600 = vmatprep.subr.mxu0 %v275
    %601 = vmatpush1.msra.mxu0 %v274
    %602 = vmatprep.subr.mxu0 %v277
    %603 = vmatpush1.msra.mxu0 %v276
    %604 = vmatprep.subr.mxu0 0.0
    %605 = vmatpush1.msra.mxu0 0.0
    %606 = vmatprep.subr.mxu0 0.0
    %607 = vmatpush1.msra.mxu0 0.0
    %608 = vmatprep.subr.mxu0 0.0
    %609 = vmatpush1.msra.mxu0 0.0
    %610 = vmatprep.subr.mxu0 0.0
    %611 = vmatpush1.msra.mxu0 0.0
    %612 = vmatprep.subr.mxu0 0.0
    %613 = vmatpush1.msra.mxu0 0.0
    %614 = vmatprep.subr.mxu0 0.0
    %615 = vmatpush1.msra.mxu0 0.0
    %616 = vmatprep.subr.mxu0 0.0
    %617 = vmatpush1.msra.mxu0 0.0
    %618 = vmatprep.subr.mxu0 0.0
    %619 = vmatpush1.msra.mxu0 0.0
    %620 = vmatprep.subr.mxu0 0.0
    %621 = vmatpush1.msra.mxu0 0.0
    %622 = vmatprep.subr.mxu0 0.0
    %623 = vmatpush1.msra.mxu0 0.0
    %624 = vmatprep.subr.mxu0 0.0
    %625 = vmatpush1.msra.mxu0 0.0
    %626 = vmatprep.subr.mxu0 0.0
    %627 = vmatpush1.msra.mxu0 0.0
    %628 = vmatprep.subr.mxu0 0.0
    %629 = vmatpush1.msra.mxu0 0.0
    %630 = vmatprep.subr.mxu0 0.0
    %631 = vmatpush1.msra.mxu0 0.0
    %632 = vmatprep.subr.mxu0 0.0
    %633 = vmatpush1.msra.mxu0 0.0
    %634 = vmatprep.subr.mxu0 0.0
    %635 = vmatpush1.msra.mxu0 0.0
    %636 = vmatprep.subr.mxu0 0.0
    %637 = vmatpush1.msra.mxu0 0.0
    %638 = vmatprep.subr.mxu0 0.0
    %639 = vmatpush1.msra.mxu0 0.0
    %640 = vmatprep.subr.mxu0 0.0
    %641 = vmatpush1.msra.mxu0 0.0
    %642 = vmatprep.subr.mxu0 0.0
    %643 = vmatpush1.msra.mxu0 0.0
    %644 = vmatprep.subr.mxu0 0.0
    %645 = vmatpush1.msra.mxu0 0.0
    %646 = vmatprep.subr.mxu0 0.0
    %647 = vmatpush1.msra.mxu0 0.0
    %648 = vmatprep.subr.mxu0 0.0
    %649 = vmatpush1.msra.mxu0 0.0
    %650 = vmatprep.subr.mxu0 0.0
    %651 = vmatpush1.msra.mxu0 0.0
    %652 = vmatprep.mubr.f32.mxu0 0.0
    %653 = vmatmul.mubr.f32.gmra.mrb[0].mxu0 %v586
    %v654 = vpop.f32.mrb[0].mxu0
    %v655 = vadd.f32 %v581, %v654
    %v656 = vpop.f32.mrb[0].mxu0
    %v657 = vadd.f32 %v584, %v656
    %658 = vdwg.mxu0
    %v659 = vxor.u32 %v655, 2147483648
    %v660 = vxor.u32 %v657, 2147483648
    %v661 = vmul.f32 %v659, 1.442695
    %v662 = vpow.pop %v661
    %v663 = vmul.f32 %v660, 1.442695
    %v664 = vpow.pop %v663
    %v665 = vadd.f32 %v662, 1.0
    %v666 = vadd.f32 %v664, 1.0
    %v667 = vrcp.pop %v665
    %v668 = vmul.f32 1.0, %v667
    %v669 = vrcp.pop %v666
    %v670 = vmul.f32 1.0, %v669
    %v671 = vtanh.pop %v657
    %v672 = vmul.f32 %v668, %v544
    %674 = vrot.lane.b32.xlu0 %v671, 64
    %v675 = vpop.permute.xlu0 %674
    %v677 = vmul.f32 %v668, %v675
    %679 = vrot.lane.b32.xlu0 %v677, 64
    %v680 = vpop.permute.xlu0 %679
    %v682 = vadd.f32 %v672, %v680
    %v683 = vtanh.pop %v682
    %685 = vrot.lane.b32.xlu0 %v683, 64
    %v686 = vpop.permute.xlu0 %685
    %v688 = vmul.f32 %v670, %v686
    %s689 = scalar_lea.vmem [#allocation3], 16
    %690 = vst.msk [vmem:[%s689] sm:$0xff] %vm107, %v688
    %s691 = scalar_lea.vmem [#allocation3], 40
    %692 = vst.msk [vmem:[%s691] sm:$0xff] %vm415, %v688
    %s693 = scalar_lea.vmem [#allocation2], 24
    %v694 = vld [vmem:[%s693] sm:$0xff]
    %s695 = scalar_lea.vmem [#allocation2], 96
    %v696 = vld [vmem:[%s695] sm:$0xff]
    %698 = vrot.lane.b32.xlu0 %v696, 32
    %v699 = vpop.permute.xlu0 %698
    %702 = vrot.lane.b32.xlu0 %v694, 32
    %v703 = vpop.permute.xlu0 %702
    %705 = vrot.lane.b32.xlu0 %v696, 64
    %v706 = vpop.permute.xlu0 %705
    %708 = vrot.lane.b32.xlu0 %v694, 64
    %v709 = vpop.permute.xlu0 %708
    %711 = vrot.lane.b32.xlu0 %v696, 96
    %v712 = vpop.permute.xlu0 %711
    %714 = vrot.lane.b32.xlu0 %v694, 96
    %v715 = vpop.permute.xlu0 %714
    %v717 = vsel %vm107, %v694, %v699
    %v718 = vsel %vm302, %v717, %v703
    %v719 = vsel %vm304, %v718, %v706
    %v720 = vsel %vm107, %v709, %v712
    %v721 = vsel %vm302, %v720, %v715
    %v722 = vsel %vm304, %v721, %v696
    %v724 = vsel %vm302, %v688, 0
    %726 = vmatprep.subr.mxu0 %v263
    %727 = vmatpush1.msra.mxu0 %v262
    %728 = vmatprep.subr.mxu0 %v265
    %729 = vmatpush1.msra.mxu0 %v264
    %730 = vmatprep.subr.mxu0 %v267
    %731 = vmatpush1.msra.mxu0 %v266
    %732 = vmatprep.subr.mxu0 %v269
    %733 = vmatpush1.msra.mxu0 %v268
    %734 = vmatprep.subr.mxu0 %v271
    %735 = vmatpush1.msra.mxu0 %v270
    %736 = vmatprep.subr.mxu0 %v273
    %737 = vmatpush1.msra.mxu0 %v272
    %738 = vmatprep.subr.mxu0 %v275
    %739 = vmatpush1.msra.mxu0 %v274
    %740 = vmatprep.subr.mxu0 %v277
    %741 = vmatpush1.msra.mxu0 %v276
    %742 = vmatprep.subr.mxu0 0.0
    %743 = vmatpush1.msra.mxu0 0.0
    %744 = vmatprep.subr.mxu0 0.0
    %745 = vmatpush1.msra.mxu0 0.0
    %746 = vmatprep.subr.mxu0 0.0
    %747 = vmatpush1.msra.mxu0 0.0
    %748 = vmatprep.subr.mxu0 0.0
    %749 = vmatpush1.msra.mxu0 0.0
    %750 = vmatprep.subr.mxu0 0.0
    %751 = vmatpush1.msra.mxu0 0.0
    %752 = vmatprep.subr.mxu0 0.0
    %753 = vmatpush1.msra.mxu0 0.0
    %754 = vmatprep.subr.mxu0 0.0
    %755 = vmatpush1.msra.mxu0 0.0
    %756 = vmatprep.subr.mxu0 0.0
    %757 = vmatpush1.msra.mxu0 0.0
    %758 = vmatprep.subr.mxu0 0.0
    %759 = vmatpush1.msra.mxu0 0.0
    %760 = vmatprep.subr.mxu0 0.0
    %761 = vmatpush1.msra.mxu0 0.0
    %762 = vmatprep.subr.mxu0 0.0
    %763 = vmatpush1.msra.mxu0 0.0
    %764 = vmatprep.subr.mxu0 0.0
    %765 = vmatpush1.msra.mxu0 0.0
    %766 = vmatprep.subr.mxu0 0.0
    %767 = vmatpush1.msra.mxu0 0.0
    %768 = vmatprep.subr.mxu0 0.0
    %769 = vmatpush1.msra.mxu0 0.0
    %770 = vmatprep.subr.mxu0 0.0
    %771 = vmatpush1.msra.mxu0 0.0
    %772 = vmatprep.subr.mxu0 0.0
    %773 = vmatpush1.msra.mxu0 0.0
    %774 = vmatprep.subr.mxu0 0.0
    %775 = vmatpush1.msra.mxu0 0.0
    %776 = vmatprep.subr.mxu0 0.0
    %777 = vmatpush1.msra.mxu0 0.0
    %778 = vmatprep.subr.mxu0 0.0
    %779 = vmatpush1.msra.mxu0 0.0
    %780 = vmatprep.subr.mxu0 0.0
    %781 = vmatpush1.msra.mxu0 0.0
    %782 = vmatprep.subr.mxu0 0.0
    %783 = vmatpush1.msra.mxu0 0.0
    %784 = vmatprep.subr.mxu0 0.0
    %785 = vmatpush1.msra.mxu0 0.0
    %786 = vmatprep.subr.mxu0 0.0
    %787 = vmatpush1.msra.mxu0 0.0
    %788 = vmatprep.subr.mxu0 0.0
    %789 = vmatpush1.msra.mxu0 0.0
    %790 = vmatprep.mubr.f32.mxu0 0.0
    %791 = vmatmul.mubr.f32.gmra.mrb[0].mxu0 %v724
    %v792 = vpop.f32.mrb[0].mxu0
    %v793 = vadd.f32 %v719, %v792
    %v794 = vpop.f32.mrb[0].mxu0
    %v795 = vadd.f32 %v722, %v794
    %796 = vdwg.mxu0
    %v797 = vxor.u32 %v793, 2147483648
    %v798 = vxor.u32 %v795, 2147483648
    %v799 = vmul.f32 %v797, 1.442695
    %v800 = vpow.pop %v799
    %v801 = vmul.f32 %v798, 1.442695
    %v802 = vpow.pop %v801
    %v803 = vadd.f32 %v800, 1.0
    %v804 = vadd.f32 %v802, 1.0
    %v805 = vrcp.pop %v803
    %v806 = vmul.f32 1.0, %v805
    %v807 = vrcp.pop %v804
    %v808 = vmul.f32 1.0, %v807
    %v809 = vtanh.pop %v795
    %v810 = vmul.f32 %v806, %v682
    %812 = vrot.lane.b32.xlu0 %v809, 64
    %v813 = vpop.permute.xlu0 %812
    %v815 = vmul.f32 %v806, %v813
    %817 = vrot.lane.b32.xlu0 %v815, 64
    %v818 = vpop.permute.xlu0 %817
    %v820 = vadd.f32 %v810, %v818
    %v821 = vtanh.pop %v820
    %823 = vrot.lane.b32.xlu0 %v821, 64
    %v824 = vpop.permute.xlu0 %823
    %v826 = vmul.f32 %v808, %v824
    %s827 = scalar_lea.vmem [#allocation3], 24
    %828 = vst.msk [vmem:[%s827] sm:$0xff] %vm107, %v826
    %s829 = scalar_lea.vmem [#allocation3], 32
    %830 = vst.msk [vmem:[%s829] sm:$0xff] %vm415, %v826
    %s831 = scalar_lea.vmem [#allocation2], 32
    %v832 = vld [vmem:[%s831] sm:$0xff]
    %s833 = scalar_lea.vmem [#allocation2], 88
    %v834 = vld [vmem:[%s833] sm:$0xff]
    %836 = vrot.lane.b32.xlu0 %v834, 32
    %v837 = vpop.permute.xlu0 %836
    %840 = vrot.lane.b32.xlu0 %v832, 32
    %v841 = vpop.permute.xlu0 %840
    %843 = vrot.lane.b32.xlu0 %v834, 64
    %v844 = vpop.permute.xlu0 %843
    %846 = vrot.lane.b32.xlu0 %v832, 64
    %v847 = vpop.permute.xlu0 %846
    %849 = vrot.lane.b32.xlu0 %v834, 96
    %v850 = vpop.permute.xlu0 %849
    %852 = vrot.lane.b32.xlu0 %v832, 96
    %v853 = vpop.permute.xlu0 %852
    %v855 = vsel %vm107, %v832, %v837
    %v856 = vsel %vm302, %v855, %v841
    %v857 = vsel %vm304, %v856, %v844
    %v858 = vsel %vm107, %v847, %v850
    %v859 = vsel %vm302, %v858, %v853
    %v860 = vsel %vm304, %v859, %v834
    %v862 = vsel %vm302, %v826, 0
    %864 = vmatprep.subr.mxu0 %v263
    %865 = vmatpush1.msra.mxu0 %v262
    %866 = vmatprep.subr.mxu0 %v265
    %867 = vmatpush1.msra.mxu0 %v264
    %868 = vmatprep.subr.mxu0 %v267
    %869 = vmatpush1.msra.mxu0 %v266
    %870 = vmatprep.subr.mxu0 %v269
    %871 = vmatpush1.msra.mxu0 %v268
    %872 = vmatprep.subr.mxu0 %v271
    %873 = vmatpush1.msra.mxu0 %v270
    %874 = vmatprep.subr.mxu0 %v273
    %875 = vmatpush1.msra.mxu0 %v272
    %876 = vmatprep.subr.mxu0 %v275
    %877 = vmatpush1.msra.mxu0 %v274
    %878 = vmatprep.subr.mxu0 %v277
    %879 = vmatpush1.msra.mxu0 %v276
    %880 = vmatprep.subr.mxu0 0.0
    %881 = vmatpush1.msra.mxu0 0.0
    %882 = vmatprep.subr.mxu0 0.0
    %883 = vmatpush1.msra.mxu0 0.0
    %884 = vmatprep.subr.mxu0 0.0
    %885 = vmatpush1.msra.mxu0 0.0
    %886 = vmatprep.subr.mxu0 0.0
    %887 = vmatpush1.msra.mxu0 0.0
    %888 = vmatprep.subr.mxu0 0.0
    %889 = vmatpush1.msra.mxu0 0.0
    %890 = vmatprep.subr.mxu0 0.0
    %891 = vmatpush1.msra.mxu0 0.0
    %892 = vmatprep.subr.mxu0 0.0
    %893 = vmatpush1.msra.mxu0 0.0
    %894 = vmatprep.subr.mxu0 0.0
    %895 = vmatpush1.msra.mxu0 0.0
    %896 = vmatprep.subr.mxu0 0.0
    %897 = vmatpush1.msra.mxu0 0.0
    %898 = vmatprep.subr.mxu0 0.0
    %899 = vmatpush1.msra.mxu0 0.0
    %900 = vmatprep.subr.mxu0 0.0
    %901 = vmatpush1.msra.mxu0 0.0
    %902 = vmatprep.subr.mxu0 0.0
    %903 = vmatpush1.msra.mxu0 0.0
    %904 = vmatprep.subr.mxu0 0.0
    %905 = vmatpush1.msra.mxu0 0.0
    %906 = vmatprep.subr.mxu0 0.0
    %907 = vmatpush1.msra.mxu0 0.0
    %908 = vmatprep.subr.mxu0 0.0
    %909 = vmatpush1.msra.mxu0 0.0
    %910 = vmatprep.subr.mxu0 0.0
    %911 = vmatpush1.msra.mxu0 0.0
    %912 = vmatprep.subr.mxu0 0.0
    %913 = vmatpush1.msra.mxu0 0.0
    %914 = vmatprep.subr.mxu0 0.0
    %915 = vmatpush1.msra.mxu0 0.0
    %916 = vmatprep.subr.mxu0 0.0
    %917 = vmatpush1.msra.mxu0 0.0
    %918 = vmatprep.subr.mxu0 0.0
    %919 = vmatpush1.msra.mxu0 0.0
    %920 = vmatprep.subr.mxu0 0.0
    %921 = vmatpush1.msra.mxu0 0.0
    %922 = vmatprep.subr.mxu0 0.0
    %923 = vmatpush1.msra.mxu0 0.0
    %924 = vmatprep.subr.mxu0 0.0
    %925 = vmatpush1.msra.mxu0 0.0
    %926 = vmatprep.subr.mxu0 0.0
    %927 = vmatpush1.msra.mxu0 0.0
    %928 = vmatprep.mubr.f32.mxu0 0.0
    %929 = vmatmul.mubr.f32.gmra.mrb[0].mxu0 %v862
    %v930 = vpop.f32.mrb[0].mxu0
    %v931 = vadd.f32 %v857, %v930
    %v932 = vpop.f32.mrb[0].mxu0
    %v933 = vadd.f32 %v860, %v932
    %934 = vdwg.mxu0
    %v935 = vxor.u32 %v931, 2147483648
    %v936 = vxor.u32 %v933, 2147483648
    %v937 = vmul.f32 %v935, 1.442695
    %v938 = vpow.pop %v937
    %v939 = vmul.f32 %v936, 1.442695
    %v940 = vpow.pop %v939
    %v941 = vadd.f32 %v938, 1.0
    %v942 = vadd.f32 %v940, 1.0
    %v943 = vrcp.pop %v941
    %v944 = vmul.f32 1.0, %v943
    %v945 = vrcp.pop %v942
    %v946 = vmul.f32 1.0, %v945
    %v947 = vtanh.pop %v933
    %v948 = vmul.f32 %v944, %v820
    %950 = vrot.lane.b32.xlu0 %v947, 64
    %v951 = vpop.permute.xlu0 %950
    %v953 = vmul.f32 %v944, %v951
    %955 = vrot.lane.b32.xlu0 %v953, 64
    %v956 = vpop.permute.xlu0 %955
    %v958 = vadd.f32 %v948, %v956
    %v959 = vtanh.pop %v958
    %961 = vrot.lane.b32.xlu0 %v959, 64
    %v962 = vpop.permute.xlu0 %961
    %v964 = vmul.f32 %v946, %v962
    %965 = vst.msk [vmem:[%s829] sm:$0xff] %vm107, %v964
    %966 = vst.msk [vmem:[%s827] sm:$0xff] %vm415, %v964
    %s967 = scalar_lea.vmem [#allocation2], 40
    %v968 = vld [vmem:[%s967] sm:$0xff]
    %s969 = scalar_lea.vmem [#allocation2], 80
    %v970 = vld [vmem:[%s969] sm:$0xff]
    %972 = vrot.lane.b32.xlu0 %v970, 32
    %v973 = vpop.permute.xlu0 %972
    %976 = vrot.lane.b32.xlu0 %v968, 32
    %v977 = vpop.permute.xlu0 %976
    %979 = vrot.lane.b32.xlu0 %v970, 64
    %v980 = vpop.permute.xlu0 %979
    %982 = vrot.lane.b32.xlu0 %v968, 64
    %v983 = vpop.permute.xlu0 %982
    %985 = vrot.lane.b32.xlu0 %v970, 96
    %v986 = vpop.permute.xlu0 %985
    %988 = vrot.lane.b32.xlu0 %v968, 96
    %v989 = vpop.permute.xlu0 %988
    %v991 = vsel %vm107, %v968, %v973
    %v992 = vsel %vm302, %v991, %v977
    %v993 = vsel %vm304, %v992, %v980
    %v994 = vsel %vm107, %v983, %v986
    %v995 = vsel %vm302, %v994, %v989
    %v996 = vsel %vm304, %v995, %v970
    %v998 = vsel %vm302, %v964, 0
    %1000 = vmatprep.subr.mxu0 %v263
    %1001 = vmatpush1.msra.mxu0 %v262
    %1002 = vmatprep.subr.mxu0 %v265
    %1003 = vmatpush1.msra.mxu0 %v264
    %1004 = vmatprep.subr.mxu0 %v267
    %1005 = vmatpush1.msra.mxu0 %v266
    %1006 = vmatprep.subr.mxu0 %v269
    %1007 = vmatpush1.msra.mxu0 %v268
    %1008 = vmatprep.subr.mxu0 %v271
    %1009 = vmatpush1.msra.mxu0 %v270
    %1010 = vmatprep.subr.mxu0 %v273
    %1011 = vmatpush1.msra.mxu0 %v272
    %1012 = vmatprep.subr.mxu0 %v275
    %1013 = vmatpush1.msra.mxu0 %v274
    %1014 = vmatprep.subr.mxu0 %v277
    %1015 = vmatpush1.msra.mxu0 %v276
    %1016 = vmatprep.subr.mxu0 0.0
    %1017 = vmatpush1.msra.mxu0 0.0
    %1018 = vmatprep.subr.mxu0 0.0
    %1019 = vmatpush1.msra.mxu0 0.0
    %1020 = vmatprep.subr.mxu0 0.0
    %1021 = vmatpush1.msra.mxu0 0.0
    %1022 = vmatprep.subr.mxu0 0.0
    %1023 = vmatpush1.msra.mxu0 0.0
    %1024 = vmatprep.subr.mxu0 0.0
    %1025 = vmatpush1.msra.mxu0 0.0
    %1026 = vmatprep.subr.mxu0 0.0
    %1027 = vmatpush1.msra.mxu0 0.0
    %1028 = vmatprep.subr.mxu0 0.0
    %1029 = vmatpush1.msra.mxu0 0.0
    %1030 = vmatprep.subr.mxu0 0.0
    %1031 = vmatpush1.msra.mxu0 0.0
    %1032 = vmatprep.subr.mxu0 0.0
    %1033 = vmatpush1.msra.mxu0 0.0
    %1034 = vmatprep.subr.mxu0 0.0
    %1035 = vmatpush1.msra.mxu0 0.0
    %1036 = vmatprep.subr.mxu0 0.0
    %1037 = vmatpush1.msra.mxu0 0.0
    %1038 = vmatprep.subr.mxu0 0.0
    %1039 = vmatpush1.msra.mxu0 0.0
    %1040 = vmatprep.subr.mxu0 0.0
    %1041 = vmatpush1.msra.mxu0 0.0
    %1042 = vmatprep.subr.mxu0 0.0
    %1043 = vmatpush1.msra.mxu0 0.0
    %1044 = vmatprep.subr.mxu0 0.0
    %1045 = vmatpush1.msra.mxu0 0.0
    %1046 = vmatprep.subr.mxu0 0.0
    %1047 = vmatpush1.msra.mxu0 0.0
    %1048 = vmatprep.subr.mxu0 0.0
    %1049 = vmatpush1.msra.mxu0 0.0
    %1050 = vmatprep.subr.mxu0 0.0
    %1051 = vmatpush1.msra.mxu0 0.0
    %1052 = vmatprep.subr.mxu0 0.0
    %1053 = vmatpush1.msra.mxu0 0.0
    %1054 = vmatprep.subr.mxu0 0.0
    %1055 = vmatpush1.msra.mxu0 0.0
    %1056 = vmatprep.subr.mxu0 0.0
    %1057 = vmatpush1.msra.mxu0 0.0
    %1058 = vmatprep.subr.mxu0 0.0
    %1059 = vmatpush1.msra.mxu0 0.0
    %1060 = vmatprep.subr.mxu0 0.0
    %1061 = vmatpush1.msra.mxu0 0.0
    %1062 = vmatprep.subr.mxu0 0.0
    %1063 = vmatpush1.msra.mxu0 0.0
    %1064 = vmatprep.mubr.f32.mxu0 0.0
    %1065 = vmatmul.mubr.f32.gmra.mrb[0].mxu0 %v998
    %v1066 = vpop.f32.mrb[0].mxu0
    %v1067 = vadd.f32 %v993, %v1066
    %v1068 = vpop.f32.mrb[0].mxu0
    %v1069 = vadd.f32 %v996, %v1068
    %1070 = vdwg.mxu0
    %v1071 = vxor.u32 %v1067, 2147483648
    %v1072 = vxor.u32 %v1069, 2147483648
    %v1073 = vmul.f32 %v1071, 1.442695
    %v1074 = vpow.pop %v1073
    %v1075 = vmul.f32 %v1072, 1.442695
    %v1076 = vpow.pop %v1075
    %v1077 = vadd.f32 %v1074, 1.0
    %v1078 = vadd.f32 %v1076, 1.0
    %v1079 = vrcp.pop %v1077
    %v1080 = vmul.f32 1.0, %v1079
    %v1081 = vrcp.pop %v1078
    %v1082 = vmul.f32 1.0, %v1081
    %v1083 = vtanh.pop %v1069
    %v1084 = vmul.f32 %v1080, %v958
    %1086 = vrot.lane.b32.xlu0 %v1083, 64
    %v1087 = vpop.permute.xlu0 %1086
    %v1089 = vmul.f32 %v1080, %v1087
    %1091 = vrot.lane.b32.xlu0 %v1089, 64
    %v1092 = vpop.permute.xlu0 %1091
    %v1094 = vadd.f32 %v1084, %v1092
    %v1095 = vtanh.pop %v1094
    %1097 = vrot.lane.b32.xlu0 %v1095, 64
    %v1098 = vpop.permute.xlu0 %1097
    %v1100 = vmul.f32 %v1082, %v1098
    %1101 = vst.msk [vmem:[%s691] sm:$0xff] %vm107, %v1100
    %1102 = vst.msk [vmem:[%s689] sm:$0xff] %vm415, %v1100
    %s1103 = scalar_lea.vmem [#allocation2], 48
    %v1104 = vld [vmem:[%s1103] sm:$0xff]
    %s1105 = scalar_lea.vmem [#allocation2], 72
    %v1106 = vld [vmem:[%s1105] sm:$0xff]
    %1108 = vrot.lane.b32.xlu0 %v1106, 32
    %v1109 = vpop.permute.xlu0 %1108
    %1112 = vrot.lane.b32.xlu0 %v1104, 32
    %v1113 = vpop.permute.xlu0 %1112
    %1115 = vrot.lane.b32.xlu0 %v1106, 64
    %v1116 = vpop.permute.xlu0 %1115
    %1118 = vrot.lane.b32.xlu0 %v1104, 64
    %v1119 = vpop.permute.xlu0 %1118
    %1121 = vrot.lane.b32.xlu0 %v1106, 96
    %v1122 = vpop.permute.xlu0 %1121
    %1124 = vrot.lane.b32.xlu0 %v1104, 96
    %v1125 = vpop.permute.xlu0 %1124
    %v1127 = vsel %vm107, %v1104, %v1109
    %v1128 = vsel %vm302, %v1127, %v1113
    %v1129 = vsel %vm304, %v1128, %v1116
    %v1130 = vsel %vm107, %v1119, %v1122
    %v1131 = vsel %vm302, %v1130, %v1125
    %v1132 = vsel %vm304, %v1131, %v1106
    %v1134 = vsel %vm302, %v1100, 0
    %1136 = vmatprep.subr.mxu0 %v263
    %1137 = vmatpush1.msra.mxu0 %v262
    %1138 = vmatprep.subr.mxu0 %v265
    %1139 = vmatpush1.msra.mxu0 %v264
    %1140 = vmatprep.subr.mxu0 %v267
    %1141 = vmatpush1.msra.mxu0 %v266
    %1142 = vmatprep.subr.mxu0 %v269
    %1143 = vmatpush1.msra.mxu0 %v268
    %1144 = vmatprep.subr.mxu0 %v271
    %1145 = vmatpush1.msra.mxu0 %v270
    %1146 = vmatprep.subr.mxu0 %v273
    %1147 = vmatpush1.msra.mxu0 %v272
    %1148 = vmatprep.subr.mxu0 %v275
    %1149 = vmatpush1.msra.mxu0 %v274
    %1150 = vmatprep.subr.mxu0 %v277
    %1151 = vmatpush1.msra.mxu0 %v276
    %1152 = vmatprep.subr.mxu0 0.0
    %1153 = vmatpush1.msra.mxu0 0.0
    %1154 = vmatprep.subr.mxu0 0.0
    %1155 = vmatpush1.msra.mxu0 0.0
    %1156 = vmatprep.subr.mxu0 0.0
    %1157 = vmatpush1.msra.mxu0 0.0
    %1158 = vmatprep.subr.mxu0 0.0
    %1159 = vmatpush1.msra.mxu0 0.0
    %1160 = vmatprep.subr.mxu0 0.0
    %1161 = vmatpush1.msra.mxu0 0.0
    %1162 = vmatprep.subr.mxu0 0.0
    %1163 = vmatpush1.msra.mxu0 0.0
    %1164 = vmatprep.subr.mxu0 0.0
    %1165 = vmatpush1.msra.mxu0 0.0
    %1166 = vmatprep.subr.mxu0 0.0
    %1167 = vmatpush1.msra.mxu0 0.0
    %1168 = vmatprep.subr.mxu0 0.0
    %1169 = vmatpush1.msra.mxu0 0.0
    %1170 = vmatprep.subr.mxu0 0.0
    %1171 = vmatpush1.msra.mxu0 0.0
    %1172 = vmatprep.subr.mxu0 0.0
    %1173 = vmatpush1.msra.mxu0 0.0
    %1174 = vmatprep.subr.mxu0 0.0
    %1175 = vmatpush1.msra.mxu0 0.0
    %1176 = vmatprep.subr.mxu0 0.0
    %1177 = vmatpush1.msra.mxu0 0.0
    %1178 = vmatprep.subr.mxu0 0.0
    %1179 = vmatpush1.msra.mxu0 0.0
    %1180 = vmatprep.subr.mxu0 0.0
    %1181 = vmatpush1.msra.mxu0 0.0
    %1182 = vmatprep.subr.mxu0 0.0
    %1183 = vmatpush1.msra.mxu0 0.0
    %1184 = vmatprep.subr.mxu0 0.0
    %1185 = vmatpush1.msra.mxu0 0.0
    %1186 = vmatprep.subr.mxu0 0.0
    %1187 = vmatpush1.msra.mxu0 0.0
    %1188 = vmatprep.subr.mxu0 0.0
    %1189 = vmatpush1.msra.mxu0 0.0
    %1190 = vmatprep.subr.mxu0 0.0
    %1191 = vmatpush1.msra.mxu0 0.0
    %1192 = vmatprep.subr.mxu0 0.0
    %1193 = vmatpush1.msra.mxu0 0.0
    %1194 = vmatprep.subr.mxu0 0.0
    %1195 = vmatpush1.msra.mxu0 0.0
    %1196 = vmatprep.subr.mxu0 0.0
    %1197 = vmatpush1.msra.mxu0 0.0
    %1198 = vmatprep.subr.mxu0 0.0
    %1199 = vmatpush1.msra.mxu0 0.0
    %1200 = vmatprep.mubr.f32.mxu0 0.0
    %1201 = vmatmul.mubr.f32.gmra.mrb[0].mxu0 %v1134
    %v1202 = vpop.f32.mrb[0].mxu0
    %v1203 = vadd.f32 %v1129, %v1202
    %v1204 = vpop.f32.mrb[0].mxu0
    %v1205 = vadd.f32 %v1132, %v1204
    %1206 = vdwg.mxu0
    %v1207 = vxor.u32 %v1203, 2147483648
    %v1208 = vxor.u32 %v1205, 2147483648
    %v1209 = vmul.f32 %v1207, 1.442695
    %v1210 = vpow.pop %v1209
    %v1211 = vmul.f32 %v1208, 1.442695
    %v1212 = vpow.pop %v1211
    %v1213 = vadd.f32 %v1210, 1.0
    %v1214 = vadd.f32 %v1212, 1.0
    %v1215 = vrcp.pop %v1213
    %v1216 = vmul.f32 1.0, %v1215
    %v1217 = vrcp.pop %v1214
    %v1218 = vmul.f32 1.0, %v1217
    %v1219 = vtanh.pop %v1205
    %v1220 = vmul.f32 %v1216, %v1094
    %1222 = vrot.lane.b32.xlu0 %v1219, 64
    %v1223 = vpop.permute.xlu0 %1222
    %v1225 = vmul.f32 %v1216, %v1223
    %1227 = vrot.lane.b32.xlu0 %v1225, 64
    %v1228 = vpop.permute.xlu0 %1227
    %v1230 = vadd.f32 %v1220, %v1228
    %v1231 = vtanh.pop %v1230
    %1233 = vrot.lane.b32.xlu0 %v1231, 64
    %v1234 = vpop.permute.xlu0 %1233
    %v1236 = vmul.f32 %v1218, %v1234
    %1237 = vst.msk [vmem:[%s553] sm:$0xff] %vm107, %v1236
    %1238 = vst.msk [vmem:[%s551] sm:$0xff] %vm415, %v1236
    %s1239 = scalar_lea.vmem [#allocation2], 56
    %v1240 = vld [vmem:[%s1239] sm:$0xff]
    %v1241 = vld [vmem:[%s253] sm:$0xff]
    %1243 = vrot.lane.b32.xlu0 %v1241, 32
    %v1244 = vpop.permute.xlu0 %1243
    %1247 = vrot.lane.b32.xlu0 %v1240, 32
    %v1248 = vpop.permute.xlu0 %1247
    %1250 = vrot.lane.b32.xlu0 %v1241, 64
    %v1251 = vpop.permute.xlu0 %1250
    %1253 = vrot.lane.b32.xlu0 %v1240, 64
    %v1254 = vpop.permute.xlu0 %1253
    %1256 = vrot.lane.b32.xlu0 %v1241, 96
    %v1257 = vpop.permute.xlu0 %1256
    %1259 = vrot.lane.b32.xlu0 %v1240, 96
    %v1260 = vpop.permute.xlu0 %1259
    %v1262 = vsel %vm107, %v1240, %v1244
    %v1263 = vsel %vm302, %v1262, %v1248
    %v1264 = vsel %vm304, %v1263, %v1251
    %v1265 = vsel %vm107, %v1254, %v1257
    %v1266 = vsel %vm302, %v1265, %v1260
    %v1267 = vsel %vm304, %v1266, %v1241
    %v1269 = vsel %vm302, %v1236, 0
    %1271 = vmatprep.subr.mxu0 %v263
    %1272 = vmatpush1.msra.mxu0 %v262
    %1273 = vmatprep.subr.mxu0 %v265
    %1274 = vmatpush1.msra.mxu0 %v264
    %1275 = vmatprep.subr.mxu0 %v267
    %1276 = vmatpush1.msra.mxu0 %v266
    %1277 = vmatprep.subr.mxu0 %v269
    %1278 = vmatpush1.msra.mxu0 %v268
    %1279 = vmatprep.subr.mxu0 %v271
    %1280 = vmatpush1.msra.mxu0 %v270
    %1281 = vmatprep.subr.mxu0 %v273
    %1282 = vmatpush1.msra.mxu0 %v272
    %1283 = vmatprep.subr.mxu0 %v275
    %1284 = vmatpush1.msra.mxu0 %v274
    %1285 = vmatprep.subr.mxu0 %v277
    %1286 = vmatpush1.msra.mxu0 %v276
    %1287 = vmatprep.subr.mxu0 0.0
    %1288 = vmatpush1.msra.mxu0 0.0
    %1289 = vmatprep.subr.mxu0 0.0
    %1290 = vmatpush1.msra.mxu0 0.0
    %1291 = vmatprep.subr.mxu0 0.0
    %1292 = vmatpush1.msra.mxu0 0.0
    %1293 = vmatprep.subr.mxu0 0.0
    %1294 = vmatpush1.msra.mxu0 0.0
    %1295 = vmatprep.subr.mxu0 0.0
    %1296 = vmatpush1.msra.mxu0 0.0
    %1297 = vmatprep.subr.mxu0 0.0
    %1298 = vmatpush1.msra.mxu0 0.0
    %1299 = vmatprep.subr.mxu0 0.0
    %1300 = vmatpush1.msra.mxu0 0.0
    %1301 = vmatprep.subr.mxu0 0.0
    %1302 = vmatpush1.msra.mxu0 0.0
    %1303 = vmatprep.subr.mxu0 0.0
    %1304 = vmatpush1.msra.mxu0 0.0
    %1305 = vmatprep.subr.mxu0 0.0
    %1306 = vmatpush1.msra.mxu0 0.0
    %1307 = vmatprep.subr.mxu0 0.0
    %1308 = vmatpush1.msra.mxu0 0.0
    %1309 = vmatprep.subr.mxu0 0.0
    %1310 = vmatpush1.msra.mxu0 0.0
    %1311 = vmatprep.subr.mxu0 0.0
    %1312 = vmatpush1.msra.mxu0 0.0
    %1313 = vmatprep.subr.mxu0 0.0
    %1314 = vmatpush1.msra.mxu0 0.0
    %1315 = vmatprep.subr.mxu0 0.0
    %1316 = vmatpush1.msra.mxu0 0.0
    %1317 = vmatprep.subr.mxu0 0.0
    %1318 = vmatpush1.msra.mxu0 0.0
    %1319 = vmatprep.subr.mxu0 0.0
    %1320 = vmatpush1.msra.mxu0 0.0
    %1321 = vmatprep.subr.mxu0 0.0
    %1322 = vmatpush1.msra.mxu0 0.0
    %1323 = vmatprep.subr.mxu0 0.0
    %1324 = vmatpush1.msra.mxu0 0.0
    %1325 = vmatprep.subr.mxu0 0.0
    %1326 = vmatpush1.msra.mxu0 0.0
    %1327 = vmatprep.subr.mxu0 0.0
    %1328 = vmatpush1.msra.mxu0 0.0
    %1329 = vmatprep.subr.mxu0 0.0
    %1330 = vmatpush1.msra.mxu0 0.0
    %1331 = vmatprep.subr.mxu0 0.0
    %1332 = vmatpush1.msra.mxu0 0.0
    %1333 = vmatprep.subr.mxu0 0.0
    %1334 = vmatpush1.msra.mxu0 0.0
    %1335 = vmatprep.mubr.f32.mxu0 0.0
    %1336 = vmatmul.mubr.f32.gmra.mrb[0].mxu0 %v1269
    %v1337 = vpop.f32.mrb[0].mxu0
    %v1338 = vadd.f32 %v1264, %v1337
    %v1339 = vpop.f32.mrb[0].mxu0
    %v1340 = vadd.f32 %v1267, %v1339
    %1341 = vdwg.mxu0
    %v1342 = vxor.u32 %v1338, 2147483648
    %v1343 = vxor.u32 %v1340, 2147483648
    %v1344 = vmul.f32 %v1342, 1.442695
    %v1345 = vpow.pop %v1344
    %v1346 = vmul.f32 %v1343, 1.442695
    %v1347 = vpow.pop %v1346
    %v1348 = vadd.f32 %v1345, 1.0
    %v1349 = vadd.f32 %v1347, 1.0
    %v1350 = vrcp.pop %v1348
    %v1351 = vmul.f32 1.0, %v1350
    %v1352 = vrcp.pop %v1349
    %v1353 = vmul.f32 1.0, %v1352
    %v1354 = vtanh.pop %v1340
    %v1355 = vmul.f32 %v1351, %v1230
    %1357 = vrot.lane.b32.xlu0 %v1354, 64
    %v1358 = vpop.permute.xlu0 %1357
    %v1360 = vmul.f32 %v1351, %v1358
    %1362 = vrot.lane.b32.xlu0 %v1360, 64
    %v1363 = vpop.permute.xlu0 %1362
    %v1365 = vadd.f32 %v1355, %v1363
    %v1366 = vtanh.pop %v1365
    %1368 = vrot.lane.b32.xlu0 %v1366, 64
    %v1369 = vpop.permute.xlu0 %1368
    %v1371 = vmul.f32 %v1353, %v1369
    %1372 = vst.msk [vmem:[%s414] sm:$0xff] %vm107, %v1371
    %1373 = vst.msk [vmem:[#allocation3] sm:$0xff] %vm415, %v1371
    %v1374 = vld [vmem:[#allocation3] sm:$0xff]
    %v1375 = vld [vmem:[#allocation3 + $0x8] sm:$0xff]
    %v1376 = vld [vmem:[#allocation3 + $0x10] sm:$0xff]
    %v1377 = vld [vmem:[#allocation3 + $0x18] sm:$0xff]
    %v1378 = vld [vmem:[#allocation3 + $0x20] sm:$0xff]
    %v1379 = vld [vmem:[#allocation3 + $0x28] sm:$0xff]
    %v1380 = vld [vmem:[#allocation3 + $0x30] sm:$0xff]
    %v1381 = vld [vmem:[#allocation3 + $0x38] sm:$0xff]
    %v1382 = vld [vmem:[#allocation10] sm:$0xff]
    %v1383 = vld [vmem:[#allocation10 + $0x8] sm:$0xff]
    %v1384 = vld [vmem:[#allocation10 + $0x10] sm:$0xff]
    %v1385 = vld [vmem:[#allocation10 + $0x18] sm:$0xff]
    %v1386 = vld [vmem:[#allocation10 + $0x20] sm:$0xff]
    %v1387 = vld [vmem:[#allocation10 + $0x28] sm:$0xff]
    %v1388 = vld [vmem:[#allocation10 + $0x30] sm:$0xff]
    %v1389 = vld [vmem:[#allocation10 + $0x38] sm:$0xff]
    %v1390 = vld [vmem:[%s5] sm:$0x1]
    %v1392 = vlaneseq
    %v1393 = vshrl.u32 %v1392, 7
    %v1394 = vsub.s32 0, %v1393
    %v1395 = vrot.slane %v1390, %v1394
    %v1398 = vsel %vm302, %v1374, 0
    %v1401 = vsel %vm302, %v1375, 0
    %v1404 = vsel %vm302, %v1376, 0
    %v1407 = vsel %vm302, %v1377, 0
    %v1410 = vsel %vm302, %v1378, 0
    %v1413 = vsel %vm302, %v1379, 0
    %v1416 = vsel %vm302, %v1380, 0
    %v1419 = vsel %vm302, %v1381, 0
    %1421 = vmatprep.subr.mxu0 0.0
    %1422 = vmatpush1.msra.mxu0 %v1382
    %1423 = vmatprep.subr.mxu0 0.0
    %1424 = vmatpush1.msra.mxu0 %v1383
    %1425 = vmatprep.subr.mxu0 0.0
    %1426 = vmatpush1.msra.mxu0 %v1384
    %1427 = vmatprep.subr.mxu0 0.0
    %1428 = vmatpush1.msra.mxu0 %v1385
    %1429 = vmatprep.subr.mxu0 0.0
    %1430 = vmatpush1.msra.mxu0 %v1386
    %1431 = vmatprep.subr.mxu0 0.0
    %1432 = vmatpush1.msra.mxu0 %v1387
    %1433 = vmatprep.subr.mxu0 0.0
    %1434 = vmatpush1.msra.mxu0 %v1388
    %1435 = vmatprep.subr.mxu0 0.0
    %1436 = vmatpush1.msra.mxu0 %v1389
    %1437 = vmatprep.subr.mxu0 0.0
    %1438 = vmatpush1.msra.mxu0 0.0
    %1439 = vmatprep.subr.mxu0 0.0
    %1440 = vmatpush1.msra.mxu0 0.0
    %1441 = vmatprep.subr.mxu0 0.0
    %1442 = vmatpush1.msra.mxu0 0.0
    %1443 = vmatprep.subr.mxu0 0.0
    %1444 = vmatpush1.msra.mxu0 0.0
    %1445 = vmatprep.subr.mxu0 0.0
    %1446 = vmatpush1.msra.mxu0 0.0
    %1447 = vmatprep.subr.mxu0 0.0
    %1448 = vmatpush1.msra.mxu0 0.0
    %1449 = vmatprep.subr.mxu0 0.0
    %1450 = vmatpush1.msra.mxu0 0.0
    %1451 = vmatprep.subr.mxu0 0.0
    %1452 = vmatpush1.msra.mxu0 0.0
    %1453 = vmatprep.subr.mxu0 0.0
    %1454 = vmatpush1.msra.mxu0 0.0
    %1455 = vmatprep.subr.mxu0 0.0
    %1456 = vmatpush1.msra.mxu0 0.0
    %1457 = vmatprep.subr.mxu0 0.0
    %1458 = vmatpush1.msra.mxu0 0.0
    %1459 = vmatprep.subr.mxu0 0.0
    %1460 = vmatpush1.msra.mxu0 0.0
    %1461 = vmatprep.subr.mxu0 0.0
    %1462 = vmatpush1.msra.mxu0 0.0
    %1463 = vmatprep.subr.mxu0 0.0
    %1464 = vmatpush1.msra.mxu0 0.0
    %1465 = vmatprep.subr.mxu0 0.0
    %1466 = vmatpush1.msra.mxu0 0.0
    %1467 = vmatprep.subr.mxu0 0.0
    %1468 = vmatpush1.msra.mxu0 0.0
    %1469 = vmatprep.subr.mxu0 0.0
    %1470 = vmatpush1.msra.mxu0 0.0
    %1471 = vmatprep.subr.mxu0 0.0
    %1472 = vmatpush1.msra.mxu0 0.0
    %1473 = vmatprep.subr.mxu0 0.0
    %1474 = vmatpush1.msra.mxu0 0.0
    %1475 = vmatprep.subr.mxu0 0.0
    %1476 = vmatpush1.msra.mxu0 0.0
    %1477 = vmatprep.subr.mxu0 0.0
    %1478 = vmatpush1.msra.mxu0 0.0
    %1479 = vmatprep.subr.mxu0 0.0
    %1480 = vmatpush1.msra.mxu0 0.0
    %1481 = vmatprep.subr.mxu0 0.0
    %1482 = vmatpush1.msra.mxu0 0.0
    %1483 = vmatprep.subr.mxu0 0.0
    %1484 = vmatpush1.msra.mxu0 0.0
    %1485 = vmatprep.mubr.f32.mxu0 0.0
    %1486 = vmatmul.mubr.f32.gmra.mrb[0].mxu0 %v1398
    %v1487 = vpop.f32.mrb[0].mxu0
    %v1488 = vadd.f32 %v1395, %v1487
    %v1489 = vpop.f32.mrb[0].mxu0
    %1490 = vmatprep.mubr.f32.mxu0 0.0
    %1491 = vmatmul.mubr.f32.gmra.mrb[0].mxu0 %v1401
    %v1492 = vpop.f32.mrb[0].mxu0
    %v1493 = vadd.f32 %v1395, %v1492
    %v1494 = vpop.f32.mrb[0].mxu0
    %1495 = vmatprep.mubr.f32.mxu0 0.0
    %1496 = vmatmul.mubr.f32.gmra.mrb[0].mxu0 %v1404
    %v1497 = vpop.f32.mrb[0].mxu0
    %v1498 = vadd.f32 %v1395, %v1497
    %v1499 = vpop.f32.mrb[0].mxu0
    %1500 = vmatprep.mubr.f32.mxu0 0.0
    %1501 = vmatmul.mubr.f32.gmra.mrb[0].mxu0 %v1407
    %v1502 = vpop.f32.mrb[0].mxu0
    %v1503 = vadd.f32 %v1395, %v1502
    %v1504 = vpop.f32.mrb[0].mxu0
    %1505 = vmatprep.mubr.f32.mxu0 0.0
    %1506 = vmatmul.mubr.f32.gmra.mrb[0].mxu0 %v1410
    %v1507 = vpop.f32.mrb[0].mxu0
    %v1508 = vadd.f32 %v1395, %v1507
    %v1509 = vpop.f32.mrb[0].mxu0
    %1510 = vmatprep.mubr.f32.mxu0 0.0
    %1511 = vmatmul.mubr.f32.gmra.mrb[0].mxu0 %v1413
    %v1512 = vpop.f32.mrb[0].mxu0
    %v1513 = vadd.f32 %v1395, %v1512
    %v1514 = vpop.f32.mrb[0].mxu0
    %1515 = vmatprep.mubr.f32.mxu0 0.0
    %1516 = vmatmul.mubr.f32.gmra.mrb[0].mxu0 %v1416
    %v1517 = vpop.f32.mrb[0].mxu0
    %v1518 = vadd.f32 %v1395, %v1517
    %v1519 = vpop.f32.mrb[0].mxu0
    %1520 = vmatprep.mubr.f32.mxu0 0.0
    %1521 = vmatmul.mubr.f32.gmra.mrb[0].mxu0 %v1419
    %v1522 = vpop.f32.mrb[0].mxu0
    %v1523 = vadd.f32 %v1395, %v1522
    %v1524 = vpop.f32.mrb[0].mxu0
    %1525 = vdwg.mxu0
    %1526 = vst [vmem:[#allocation12] sm:$0xff] %v1488
    %1527 = vst [vmem:[#allocation12 + $0x8] sm:$0xff] %v1493
    %1528 = vst [vmem:[#allocation12 + $0x10] sm:$0xff] %v1498
    %1529 = vst [vmem:[#allocation12 + $0x18] sm:$0xff] %v1503
    %1530 = vst [vmem:[#allocation12 + $0x20] sm:$0xff] %v1508
    %1531 = vst [vmem:[#allocation12 + $0x28] sm:$0xff] %v1513
    %1532 = vst [vmem:[#allocation12 + $0x30] sm:$0xff] %v1518
    %1533 = vst [vmem:[#allocation12 + $0x38] sm:$0xff] %v1523
    // Predicated region
    $region42: #{tpu_custom_call.1} parent=1 // pred_check
      _
    $region43: #{tpu_custom_call.1} parent=1 // pred_check_branch
      %1535 = sbr.rel (0) target = $region45
    $region44: #{tpu_custom_call.1} parent=1 // pred_region
      %s1537 = ssub.s32 1024, 1024
      %1538 = vsyncadd [#allocation6], %s1537
      %s1539 = sshll.u32 [#allocation12], 4
      %s1540 = int_to_ptr.vmem [resolvable:$true] %s1539
      %1545 = dma.vmem_to_hbm [thread:$0]  %s1540, 1024, %s6, [#allocation6], 128, 128, 8
    $region45: #{tpu_custom_call.1} parent=1 // pred_fallthru
      _
    // Predicated region
    $region46: #{tpu_custom_call.1} parent=1 // pred_check
      _
    $region47: #{tpu_custom_call.1} parent=1 // pred_check_branch
      %1547 = sbr.rel (0) target = $region49
    $region48: #{tpu_custom_call.1} parent=1 // pred_region
      %1548 = dma.done [#allocation6], 1024
    $region49: #{tpu_custom_call.1} parent=1 // pred_fallthru
      _
    %1549 = vsyncpa [#allocation5], 1
    %1550 = vsyncpa [#allocation8], 1
    %1551 = vsyncpa [#allocation11], 1
    %1552 = vsyncpa [#allocation6], 1

</llo_original>
